<compile_context>
chip_gen: v7x
topology: tpu7x:2x2x1
jax: 0.10.0
libtpu: 0.0.40
codegen_flags: <defaults>
</compile_context>

<pallas_src>
import jax
import jax.numpy as jnp
from jax.experimental import pallas as pl
from jax.experimental.pallas import tpu as pltpu


# ----------------------------------------------------------------------------
# Pallas kernel: fused 3x3x3 conv (pad=1, no bias) + folded-BN + ReLU
# ----------------------------------------------------------------------------
def _make_conv_bn_relu_kernel(num_in, H, W, Cins, Cout, D):
    """Build the kernel body for `num_in` channel-split inputs.

    Grid is (N, D, 3); the last ("arbitrary") axis kd is the depth tap of the
    3x3x3 stencil, so only one (H, W, Cin) depth slice per input is resident
    per step instead of the whole padded volume.
    """
    HW = H * W

    def kernel(*args):
        x_refs = args[:num_in]                    # (1, 1, H, W, Cin_i) bf16
        w_refs = args[num_in:2 * num_in]          # (3, 9*Cin_i, Cout) bf16
        s_ref = args[2 * num_in]                  # (1, Cout) f32 folded scale
        b_ref = args[2 * num_in + 1]              # (1, Cout) f32 folded bias
        o_ref = args[2 * num_in + 2]              # (1, 1, H*W, Cout)
        scratch = args[2 * num_in + 3:]
        xp_refs = scratch[:num_in]                # (H+2, W+2, Cin_i) f32
        col_refs = scratch[num_in:2 * num_in]     # (H*W, 9*Cin_i) bf16
        acc_ref = scratch[2 * num_in]             # (H*W, Cout) f32

        d = pl.program_id(1)
        kd = pl.program_id(2)

        @pl.when(kd == 0)
        def _():
            acc_ref[...] = jnp.zeros_like(acc_ref)

        # True (unpadded) input depth for this tap; skip if outside the volume
        # (this is the zero padding along depth).
        din = d + kd - 1
        valid = jnp.logical_and(din >= 0, din <= D - 1)

        @pl.when(valid)
        def _():
            for i in range(num_in):
                Cin = Cins[i]
                xp = xp_refs[i]
                col = col_refs[i]

                # Zero-filled halo slab (padding=1 in H and W) + current slice.
                # Re-zeroed every step so the kernel stays correct when the
                # (N, D) axes are sharded across TensorCores (megacore).
                xp[...] = jnp.zeros_like(xp)
                xp[1:H + 1, 1:W + 1, :] = x_refs[i][0, 0].astype(jnp.float32)

                # im2col: 9 shifted windows -> one (H*W, 9*Cin) block.
                # Lane offsets tap*Cin are 128-aligned for the demo channels.
                for kh in range(3):
                    for kw in range(3):
                        tap = kh * 3 + kw
                        patch = xp[kh:kh + H, kw:kw + W, :]
                        col[:, tap * Cin:(tap + 1) * Cin] = (
                            patch.reshape(HW, Cin).astype(col.dtype))

                # Single big-K MXU call per (input, kd): K = 9*Cin, bf16 in,
                # f32 accumulation.  M = H*W (>=128 at production spatial
                # sizes; merge depth slices per step if H*W is tiny).
                acc_ref[...] += jnp.dot(
                    col[...], w_refs[i][kd],
                    preferred_element_type=jnp.float32)

        @pl.when(kd == 2)
        def _():
            # Folded BatchNorm (eval mode) + ReLU epilogue in f32.
            out = acc_ref[...] * s_ref[...] + b_ref[...]
            out = jnp.maximum(out, 0.0)
            o_ref[0, 0] = out.astype(o_ref.dtype)

    return kernel


def conv3d_bn_relu(inputs, weights, scale, bias, out_dtype=jnp.float32):
    """Fused 3x3x3 conv (padding=1, stride 1, no bias) + BN(scale,bias) + ReLU.

    inputs  : list of (N, D, H, W, Cin_i) arrays.  Passing several inputs fuses
              the channel concat: conv(cat(inputs)) == sum_i conv(input_i, W_i).
    weights : list of (3, 3, 3, Cin_i, Cout) arrays (kd, kh, kw, Cin, Cout).
    scale   : (Cout,) folded BN scale = gamma / sqrt(var + eps)
    bias    : (Cout,) folded BN bias  = beta - mean * scale
    returns : (N, D, H, W, Cout) array of dtype `out_dtype`.
    """
    N, D, H, W = inputs[0].shape[:4]
    for x, w in zip(inputs, weights):
        assert x.shape[:4] == inputs[0].shape[:4], (x.shape, inputs[0].shape)
        assert int(w.shape[3]) == int(x.shape[4]), (w.shape, x.shape)
    Cout = int(weights[0].shape[-1])
    num_in = len(inputs)
    Cins = tuple(int(w.shape[3]) for w in weights)
    HW = H * W
    cdt = jnp.bfloat16  # MXU compute dtype; accumulation stays f32

    xs = [x.astype(cdt) for x in inputs]
    # Weight K-order (kh, kw, ci) matches the im2col column order.
    ws = [w.astype(cdt).reshape(3, 9 * c, Cout) for w, c in zip(weights, Cins)]
    s2 = scale.reshape(1, Cout).astype(jnp.float32)
    b2 = bias.reshape(1, Cout).astype(jnp.float32)

    kernel = _make_conv_bn_relu_kernel(num_in, H, W, Cins, Cout, D)

    def x_index_map(n, d, kd):
        # Depth-halo slab: one slice per kd step; clamp at the boundary (the
        # kernel skips the contribution when the true index is out of range).
        return (n, jnp.clip(d + kd - 1, 0, D - 1), 0, 0, 0)

    in_specs = (
        [pl.BlockSpec((1, 1, H, W, c), x_index_map) for c in Cins]
        + [pl.BlockSpec((3, 9 * c, Cout), lambda n, d, kd: (0, 0, 0))
           for c in Cins]
        + [pl.BlockSpec((1, Cout), lambda n, d, kd: (0, 0)),
           pl.BlockSpec((1, Cout), lambda n, d, kd: (0, 0))])

    scratch_shapes = (
        [pltpu.VMEM((H + 2, W + 2, c), jnp.float32) for c in Cins]   # halo slab
        + [pltpu.VMEM((HW, 9 * c), cdt) for c in Cins]               # im2col
        + [pltpu.VMEM((HW, Cout), jnp.float32)])                     # accumulator

    out = pl.pallas_call(
        kernel,
        out_shape=jax.ShapeDtypeStruct((N, D, HW, Cout), out_dtype),
        grid_spec=pltpu.PrefetchScalarGridSpec(
            num_scalar_prefetch=0,
            grid=(N, D, 3),
            in_specs=in_specs,
            out_specs=pl.BlockSpec((1, 1, HW, Cout),
                                   lambda n, d, kd: (n, d, 0, 0)),
            scratch_shapes=scratch_shapes),
        compiler_params=pltpu.CompilerParams(
            # (N, D) shard across TensorCores on v7x; kd is the reduction axis.
            dimension_semantics=("parallel", "parallel", "arbitrary"),
            # Explicit budget with headroom for v7x's 64 MiB physical VMEM.
            vmem_limit_bytes=48 * 1024 * 1024),
    )(*xs, *ws, s2, b2)
    return out.reshape(N, D, H, W, Cout)


# ----------------------------------------------------------------------------
# DecoderBlock3D wrapper (channels-last NDHWC activations)
# ----------------------------------------------------------------------------
def decoder_block_3d(x, skip, params):
    """x: (N, D, H0, W0, Cin); skip: (N, D, 2*H0, 2*W0, Cskip) or None."""
    x = x.astype(jnp.bfloat16)
    # nearest-neighbour upsample, scale_factor=(1, 2, 2)
    x = jnp.repeat(x, 2, axis=2)
    x = jnp.repeat(x, 2, axis=3)
    if skip is not None:
        inputs = [x, skip.astype(jnp.bfloat16)]
        weights = [params["w1_x"], params["w1_skip"]]
    else:
        inputs = [x]
        weights = [params["w1_x"]]
    # Channel concat is fused into the kernel via the split conv1 weight.
    h = conv3d_bn_relu(inputs, weights, params["s1"], params["b1"],
                       out_dtype=jnp.bfloat16)
    h = conv3d_bn_relu([h], [params["w2"]], params["s2"], params["b2"],
                       out_dtype=jnp.float32)
    return h


def _fold_bn(gamma, beta, mean, var, eps=1e-5):
    scale = gamma / jnp.sqrt(var + eps)
    return scale, beta - mean * scale


def prepare_params(torch_params, in_channel, skip_channel):
    """Convert PyTorch-layout parameters to kernel-ready parameters.

    PyTorch Conv3d weights are (Cout, Cin, kd, kh, kw); the kernel expects
    (kd, kh, kw, Cin, Cout).  conv1's weight is split along Cin so the channel
    concat with the skip can be fused into the kernel.
    """
    def to_kernel_layout(w):
        return jnp.transpose(w, (2, 3, 4, 1, 0))

    w1 = torch_params["conv1_weight"]
    w2 = torch_params["conv2_weight"]
    s1, b1 = _fold_bn(torch_params["bn1_gamma"], torch_params["bn1_beta"],
                      torch_params["bn1_mean"], torch_params["bn1_var"])
    s2, b2 = _fold_bn(torch_params["bn2_gamma"], torch_params["bn2_beta"],
                      torch_params["bn2_mean"], torch_params["bn2_var"])
    p = {
        "w1_x": to_kernel_layout(w1[:, :in_channel]),
        "w2": to_kernel_layout(w2),
        "s1": s1, "b1": b1, "s2": s2, "b2": b2,
    }
    if skip_channel > 0:
        p["w1_skip"] = to_kernel_layout(w1[:, in_channel:])
    return p


# ----------------------------------------------------------------------------
# Pure-JAX reference (same bf16 rounding points as the kernel path)
# ----------------------------------------------------------------------------
def _reference_conv_bn_relu(xs, weights, scale, bias):
    acc = None
    for x, w in zip(xs, weights):
        y = jax.lax.conv_general_dilated(
            x, w, window_strides=(1, 1, 1),
            padding=((1, 1), (1, 1), (1, 1)),
            dimension_numbers=("NDHWC", "DHWIO", "NDHWC"),
            preferred_element_type=jnp.float32)
        acc = y if acc is None else acc + y
    return jnp.maximum(acc * scale + bias, 0.0)


def decoder_block_3d_reference(x, skip, params):
    cdt = jnp.bfloat16
    x = x.astype(cdt).astype(jnp.float32)
    x = jnp.repeat(x, 2, axis=2)
    x = jnp.repeat(x, 2, axis=3)
    xs = [x]
    ws = [params["w1_x"].astype(cdt).astype(jnp.float32)]
    if skip is not None:
        xs.append(skip.astype(cdt).astype(jnp.float32))
        ws.append(params["w1_skip"].astype(cdt).astype(jnp.float32))
    h = _reference_conv_bn_relu(xs, ws, params["s1"], params["b1"])
    h = h.astype(cdt).astype(jnp.float32)  # kernel stores intermediate as bf16
    h = _reference_conv_bn_relu(
        [h], [params["w2"].astype(cdt).astype(jnp.float32)],
        params["s2"], params["b2"])
    return h


if __name__ == "__main__":
    # Channel counts are multiples of 128 so the im2col lane offsets are
    # 128-aligned, the MXU K/N dims are fully occupied and the output store is
    # lane-dense.  Spatial sizes are kept small.
    in_channel, skip_channel, out_channel = 128, 128, 128
    N, D, H0, W0 = 2, 3, 4, 4  # x is at half the skip / output resolution

    key = jax.random.PRNGKey(0)
    kx, ks, kw1, kw2, kg1, kg2 = jax.random.split(key, 6)
    x = jax.random.normal(kx, (N, D, H0, W0, in_channel), jnp.float32)
    skip = jax.random.normal(ks, (N, D, 2 * H0, 2 * W0, skip_channel),
                             jnp.float32)

    # PyTorch-layout parameters (Conv3d: (Cout, Cin, kd, kh, kw); eval-mode BN).
    torch_params = {
        "conv1_weight": 0.05 * jax.random.normal(
            kw1, (out_channel, in_channel + skip_channel, 3, 3, 3), jnp.float32),
        "conv2_weight": 0.05 * jax.random.normal(
            kw2, (out_channel, out_channel, 3, 3, 3), jnp.float32),
        "bn1_gamma": 1.0 + 0.1 * jax.random.normal(kg1, (out_channel,),
                                                   jnp.float32),
        "bn1_beta": 0.05 * jnp.arange(out_channel, dtype=jnp.float32),
        "bn1_mean": jnp.zeros((out_channel,), jnp.float32),
        "bn1_var": jnp.ones((out_channel,), jnp.float32),
        "bn2_gamma": 1.0 + 0.1 * jax.random.normal(kg2, (out_channel,),
                                                   jnp.float32),
        "bn2_beta": -0.03 * jnp.arange(out_channel, dtype=jnp.float32),
        "bn2_mean": jnp.zeros((out_channel,), jnp.float32),
        "bn2_var": jnp.ones((out_channel,), jnp.float32),
    }
    params = prepare_params(torch_params, in_channel, skip_channel)

    out = decoder_block_3d(x, skip, params)
    out = jax.block_until_ready(out)

    assert out.shape == (N, D, 2 * H0, 2 * W0, out_channel), out.shape
    assert bool(jnp.all(jnp.isfinite(out)))
    assert bool(jnp.all(out >= 0.0))  # ReLU output

    # Numerical check against a pure-JAX reference with matching bf16 rounding.
    ref = decoder_block_3d_reference(x, skip, params)
    ref = jax.block_until_ready(ref)
    err_ok = jnp.all(jnp.abs(out - ref) <= 2e-2 + 2e-2 * jnp.abs(ref))
    assert bool(err_ok), float(jnp.max(jnp.abs(out - ref)))

    print("KERNEL_OK")
</pallas_src>

<mosaic_0001>
module attributes {stable_mosaic.version = 11 : i64} {
  func.func @kernel(%arg0: i32, %arg1: i32, %arg2: i32, %arg3: memref<1x1x8x8x128xbf16, #tpu.memory_space<vmem>>, %arg4: memref<1x1x8x8x128xbf16, #tpu.memory_space<vmem>>, %arg5: memref<3x1152x128xbf16, #tpu.memory_space<vmem>>, %arg6: memref<3x1152x128xbf16, #tpu.memory_space<vmem>>, %arg7: memref<1x128xf32, #tpu.memory_space<vmem>>, %arg8: memref<1x128xf32, #tpu.memory_space<vmem>>, %arg9: memref<1x1x64x128xbf16, #tpu.memory_space<vmem>>, %arg10: memref<10x10x128xf32, #tpu.memory_space<vmem>>, %arg11: memref<10x10x128xf32, #tpu.memory_space<vmem>>, %arg12: memref<64x1152xbf16, #tpu.memory_space<vmem>>, %arg13: memref<64x1152xbf16, #tpu.memory_space<vmem>>, %arg14: memref<64x128xf32, #tpu.memory_space<vmem>>) attributes {dimension_semantics = [#tpu.dimension_semantics<parallel>, #tpu.dimension_semantics<parallel>, #tpu.dimension_semantics<arbitrary>], iteration_bounds = array<i64: 2, 3, 3>, scalar_prefetch = 0 : i64, scratch_operands = 5 : i64, tpu.core_type = #tpu.core_type<tc>, window_params = [{transform_indices = @transform_0, window_bounds = array<i64: 1, 1, 8, 8, 128>}, {transform_indices = @transform_1, window_bounds = array<i64: 1, 1, 8, 8, 128>}, {pipeline_mode = #tpu.pipeline_mode<synchronous>, transform_indices = @transform_2, window_bounds = array<i64: 3, 1152, 128>}, {pipeline_mode = #tpu.pipeline_mode<synchronous>, transform_indices = @transform_3, window_bounds = array<i64: 3, 1152, 128>}, {pipeline_mode = #tpu.pipeline_mode<synchronous>, transform_indices = @transform_4, window_bounds = array<i64: 1, 128>}, {pipeline_mode = #tpu.pipeline_mode<synchronous>, transform_indices = @transform_5, window_bounds = array<i64: 1, 128>}, {transform_indices = @transform_6, window_bounds = array<i64: 1, 1, 64, 128>}]} {
    %c0_i32 = arith.constant 0 : i32
    %0 = arith.cmpi eq, %arg2, %c0_i32 : i32
    %1 = arith.extui %0 : i1 to i32
    %c0_i32_0 = arith.constant 0 : i32
    %2 = arith.cmpi ne, %1, %c0_i32_0 : i32
    scf.if %2 {
      %cst = arith.constant 0.000000e+00 : f32
      %13 = vector.broadcast %cst : f32 to vector<64x128xf32>
      %c0 = arith.constant 0 : index
      %c0_5 = arith.constant 0 : index
      %14 = vector.load %arg14[%c0, %c0_5] : memref<64x128xf32, #tpu.memory_space<vmem>>, vector<64x128xf32>
      tpu.vector_store %arg14[%c0, %c0_5], %13 {strides = array<i32>} : memref<64x128xf32, #tpu.memory_space<vmem>>, vector<64x128xf32>,
    } else {
    }
    %3 = arith.addi %arg1, %arg2 : i32
    %c1_i32 = arith.constant 1 : i32
    %4 = arith.subi %3, %c1_i32 : i32
    %c0_i32_1 = arith.constant 0 : i32
    %5 = arith.cmpi sge, %4, %c0_i32_1 : i32
    %c2_i32 = arith.constant 2 : i32
    %6 = arith.cmpi sle, %4, %c2_i32 : i32
    %7 = arith.andi %5, %6 : i1
    %8 = arith.extui %7 : i1 to i32
    %c0_i32_2 = arith.constant 0 : i32
    %9 = arith.cmpi ne, %8, %c0_i32_2 : i32
    scf.if %9 {
      %cst = arith.constant 0.000000e+00 : f32
      %13 = vector.broadcast %cst : f32 to vector<10x10x128xf32>
      %c0 = arith.constant 0 : index
      %c0_5 = arith.constant 0 : index
      %c0_6 = arith.constant 0 : index
      %14 = vector.load %arg10[%c0, %c0_5, %c0_6] : memref<10x10x128xf32, #tpu.memory_space<vmem>>, vector<10x10x128xf32>
      tpu.vector_store %arg10[%c0, %c0_5, %c0_6], %13 {strides = array<i32>} : memref<10x10x128xf32, #tpu.memory_space<vmem>>, vector<10x10x128xf32>,
      %c0_7 = arith.constant 0 : index
      %c0_8 = arith.constant 0 : index
      %c0_9 = arith.constant 0 : index
      %c0_10 = arith.constant 0 : index
      %c0_11 = arith.constant 0 : index
      %15 = vector.load %arg3[%c0_7, %c0_8, %c0_9, %c0_10, %c0_11] : memref<1x1x8x8x128xbf16, #tpu.memory_space<vmem>>, vector<1x1x8x8x128xbf16>
      %16 = vector.shape_cast %15 : vector<1x1x8x8x128xbf16> to vector<8x8x128xbf16>
      %17 = arith.extf %16 : vector<8x8x128xbf16> to vector<8x8x128xf32>
      %c1 = arith.constant 1 : index
      %c1_12 = arith.constant 1 : index
      %c0_13 = arith.constant 0 : index
      %18 = vector.load %arg10[%c1, %c1_12, %c0_13] : memref<10x10x128xf32, #tpu.memory_space<vmem>>, vector<8x8x128xf32>
      tpu.vector_store %arg10[%c1, %c1_12, %c0_13], %17 {strides = array<i32>} : memref<10x10x128xf32, #tpu.memory_space<vmem>>, vector<8x8x128xf32>,
      %c0_14 = arith.constant 0 : index
      %c0_15 = arith.constant 0 : index
      %c0_16 = arith.constant 0 : index
      %19 = vector.load %arg10[%c0_14, %c0_15, %c0_16] : memref<10x10x128xf32, #tpu.memory_space<vmem>>, vector<8x8x128xf32>
      %20 = vector.shape_cast %19 : vector<8x8x128xf32> to vector<64x128xf32>
      %21 = arith.truncf %20 : vector<64x128xf32> to vector<64x128xbf16>
      %c0_17 = arith.constant 0 : index
      %c0_18 = arith.constant 0 : index
      %22 = vector.load %arg12[%c0_17, %c0_18] : memref<64x1152xbf16, #tpu.memory_space<vmem>>, vector<64x128xbf16>
      tpu.vector_store %arg12[%c0_17, %c0_18], %21 {strides = array<i32>} : memref<64x1152xbf16, #tpu.memory_space<vmem>>, vector<64x128xbf16>,
      %c0_19 = arith.constant 0 : index
      %c1_20 = arith.constant 1 : index
      %c0_21 = arith.constant 0 : index
      %23 = vector.load %arg10[%c0_19, %c1_20, %c0_21] : memref<10x10x128xf32, #tpu.memory_space<vmem>>, vector<8x8x128xf32>
      %24 = vector.shape_cast %23 : vector<8x8x128xf32> to vector<64x128xf32>
      %25 = arith.truncf %24 : vector<64x128xf32> to vector<64x128xbf16>
      %c0_22 = arith.constant 0 : index
      %c128 = arith.constant 128 : index
      %26 = vector.load %arg12[%c0_22, %c128] : memref<64x1152xbf16, #tpu.memory_space<vmem>>, vector<64x128xbf16>
      tpu.vector_store %arg12[%c0_22, %c128], %25 {strides = array<i32>} : memref<64x1152xbf16, #tpu.memory_space<vmem>>, vector<64x128xbf16>,
      %c0_23 = arith.constant 0 : index
      %c2 = arith.constant 2 : index
      %c0_24 = arith.constant 0 : index
      %27 = vector.load %arg10[%c0_23, %c2, %c0_24] : memref<10x10x128xf32, #tpu.memory_space<vmem>>, vector<8x8x128xf32>
      %28 = vector.shape_cast %27 : vector<8x8x128xf32> to vector<64x128xf32>
      %29 = arith.truncf %28 : vector<64x128xf32> to vector<64x128xbf16>
      %c0_25 = arith.constant 0 : index
      %c256 = arith.constant 256 : index
      %30 = vector.load %arg12[%c0_25, %c256] : memref<64x1152xbf16, #tpu.memory_space<vmem>>, vector<64x128xbf16>
      tpu.vector_store %arg12[%c0_25, %c256], %29 {strides = array<i32>} : memref<64x1152xbf16, #tpu.memory_space<vmem>>, vector<64x128xbf16>,
      %c1_26 = arith.constant 1 : index
      %c0_27 = arith.constant 0 : index
      %c0_28 = arith.constant 0 : index
      %31 = vector.load %arg10[%c1_26, %c0_27, %c0_28] : memref<10x10x128xf32, #tpu.memory_space<vmem>>, vector<8x8x128xf32>
      %32 = vector.shape_cast %31 : vector<8x8x128xf32> to vector<64x128xf32>
      %33 = arith.truncf %32 : vector<64x128xf32> to vector<64x128xbf16>
      %c0_29 = arith.constant 0 : index
      %c384 = arith.constant 384 : index
      %34 = vector.load %arg12[%c0_29, %c384] : memref<64x1152xbf16, #tpu.memory_space<vmem>>, vector<64x128xbf16>
      tpu.vector_store %arg12[%c0_29, %c384], %33 {strides = array<i32>} : memref<64x1152xbf16, #tpu.memory_space<vmem>>, vector<64x128xbf16>,
      %c1_30 = arith.constant 1 : index
      %c1_31 = arith.constant 1 : index
      %c0_32 = arith.constant 0 : index
      %35 = vector.load %arg10[%c1_30, %c1_31, %c0_32] : memref<10x10x128xf32, #tpu.memory_space<vmem>>, vector<8x8x128xf32>
      %36 = vector.shape_cast %35 : vector<8x8x128xf32> to vector<64x128xf32>
      %37 = arith.truncf %36 : vector<64x128xf32> to vector<64x128xbf16>
      %c0_33 = arith.constant 0 : index
      %c512 = arith.constant 512 : index
      %38 = vector.load %arg12[%c0_33, %c512] : memref<64x1152xbf16, #tpu.memory_space<vmem>>, vector<64x128xbf16>
      tpu.vector_store %arg12[%c0_33, %c512], %37 {strides = array<i32>} : memref<64x1152xbf16, #tpu.memory_space<vmem>>, vector<64x128xbf16>,
      %c1_34 = arith.constant 1 : index
      %c2_35 = arith.constant 2 : index
      %c0_36 = arith.constant 0 : index
      %39 = vector.load %arg10[%c1_34, %c2_35, %c0_36] : memref<10x10x128xf32, #tpu.memory_space<vmem>>, vector<8x8x128xf32>
      %40 = vector.shape_cast %39 : vector<8x8x128xf32> to vector<64x128xf32>
      %41 = arith.truncf %40 : vector<64x128xf32> to vector<64x128xbf16>
      %c0_37 = arith.constant 0 : index
      %c640 = arith.constant 640 : index
      %42 = vector.load %arg12[%c0_37, %c640] : memref<64x1152xbf16, #tpu.memory_space<vmem>>, vector<64x128xbf16>
      tpu.vector_store %arg12[%c0_37, %c640], %41 {strides = array<i32>} : memref<64x1152xbf16, #tpu.memory_space<vmem>>, vector<64x128xbf16>,
      %c2_38 = arith.constant 2 : index
      %c0_39 = arith.constant 0 : index
      %c0_40 = arith.constant 0 : index
      %43 = vector.load %arg10[%c2_38, %c0_39, %c0_40] : memref<10x10x128xf32, #tpu.memory_space<vmem>>, vector<8x8x128xf32>
      %44 = vector.shape_cast %43 : vector<8x8x128xf32> to vector<64x128xf32>
      %45 = arith.truncf %44 : vector<64x128xf32> to vector<64x128xbf16>
      %c0_41 = arith.constant 0 : index
      %c768 = arith.constant 768 : index
      %46 = vector.load %arg12[%c0_41, %c768] : memref<64x1152xbf16, #tpu.memory_space<vmem>>, vector<64x128xbf16>
      tpu.vector_store %arg12[%c0_41, %c768], %45 {strides = array<i32>} : memref<64x1152xbf16, #tpu.memory_space<vmem>>, vector<64x128xbf16>,
      %c2_42 = arith.constant 2 : index
      %c1_43 = arith.constant 1 : index
      %c0_44 = arith.constant 0 : index
      %47 = vector.load %arg10[%c2_42, %c1_43, %c0_44] : memref<10x10x128xf32, #tpu.memory_space<vmem>>, vector<8x8x128xf32>
      %48 = vector.shape_cast %47 : vector<8x8x128xf32> to vector<64x128xf32>
      %49 = arith.truncf %48 : vector<64x128xf32> to vector<64x128xbf16>
      %c0_45 = arith.constant 0 : index
      %c896 = arith.constant 896 : index
      %50 = vector.load %arg12[%c0_45, %c896] : memref<64x1152xbf16, #tpu.memory_space<vmem>>, vector<64x128xbf16>
      tpu.vector_store %arg12[%c0_45, %c896], %49 {strides = array<i32>} : memref<64x1152xbf16, #tpu.memory_space<vmem>>, vector<64x128xbf16>,
      %c2_46 = arith.constant 2 : index
      %c2_47 = arith.constant 2 : index
      %c0_48 = arith.constant 0 : index
      %51 = vector.load %arg10[%c2_46, %c2_47, %c0_48] : memref<10x10x128xf32, #tpu.memory_space<vmem>>, vector<8x8x128xf32>
      %52 = vector.shape_cast %51 : vector<8x8x128xf32> to vector<64x128xf32>
      %53 = arith.truncf %52 : vector<64x128xf32> to vector<64x128xbf16>
      %c0_49 = arith.constant 0 : index
      %c1024 = arith.constant 1024 : index
      %54 = vector.load %arg12[%c0_49, %c1024] : memref<64x1152xbf16, #tpu.memory_space<vmem>>, vector<64x128xbf16>
      tpu.vector_store %arg12[%c0_49, %c1024], %53 {strides = array<i32>} : memref<64x1152xbf16, #tpu.memory_space<vmem>>, vector<64x128xbf16>,
      %c0_50 = arith.constant 0 : index
      %c0_51 = arith.constant 0 : index
      %55 = vector.load %arg14[%c0_50, %c0_51] : memref<64x128xf32, #tpu.memory_space<vmem>>, vector<64x128xf32>
      %c0_52 = arith.constant 0 : index
      %c0_53 = arith.constant 0 : index
      %56 = vector.load %arg12[%c0_52, %c0_53] : memref<64x1152xbf16, #tpu.memory_space<vmem>>, vector<64x1152xbf16>
      %57 = arith.index_cast %arg2 : i32 to index
      %c0_54 = arith.constant 0 : index
      %c0_55 = arith.constant 0 : index
      %58 = vector.load %arg5[%57, %c0_54, %c0_55] : memref<3x1152x128xbf16, #tpu.memory_space<vmem>>, vector<1x1152x128xbf16>
      %59 = vector.shape_cast %58 : vector<1x1152x128xbf16> to vector<1152x128xbf16>
      %cst_56 = arith.constant dense<0.000000e+00> : vector<64x128xf32>
      %60 = tpu.matmul %56, %59, %cst_56 {dimension_numbers = #tpu.dot_dimension_numbers<[1], [0], [0], [1], [0, 0, 1, 1], [], []>} : vector<64x1152xbf16>, vector<1152x128xbf16>, vector<64x128xf32> -> vector<64x128xf32>
      %61 = arith.addf %55, %60 : vector<64x128xf32>
      %c0_57 = arith.constant 0 : index
      %c0_58 = arith.constant 0 : index
      %62 = vector.load %arg14[%c0_57, %c0_58] : memref<64x128xf32, #tpu.memory_space<vmem>>, vector<64x128xf32>
      tpu.vector_store %arg14[%c0_57, %c0_58], %61 {strides = array<i32>} : memref<64x128xf32, #tpu.memory_space<vmem>>, vector<64x128xf32>,
      %cst_59 = arith.constant 0.000000e+00 : f32
      %63 = vector.broadcast %cst_59 : f32 to vector<10x10x128xf32>
      %c0_60 = arith.constant 0 : index
      %c0_61 = arith.constant 0 : index
      %c0_62 = arith.constant 0 : index
      %64 = vector.load %arg11[%c0_60, %c0_61, %c0_62] : memref<10x10x128xf32, #tpu.memory_space<vmem>>, vector<10x10x128xf32>
      tpu.vector_store %arg11[%c0_60, %c0_61, %c0_62], %63 {strides = array<i32>} : memref<10x10x128xf32, #tpu.memory_space<vmem>>, vector<10x10x128xf32>,
      %c0_63 = arith.constant 0 : index
      %c0_64 = arith.constant 0 : index
      %c0_65 = arith.constant 0 : index
      %c0_66 = arith.constant 0 : index
      %c0_67 = arith.constant 0 : index
      %65 = vector.load %arg4[%c0_63, %c0_64, %c0_65, %c0_66, %c0_67] : memref<1x1x8x8x128xbf16, #tpu.memory_space<vmem>>, vector<1x1x8x8x128xbf16>
      %66 = vector.shape_cast %65 : vector<1x1x8x8x128xbf16> to vector<8x8x128xbf16>
      %67 = arith.extf %66 : vector<8x8x128xbf16> to vector<8x8x128xf32>
      %c1_68 = arith.constant 1 : index
      %c1_69 = arith.constant 1 : index
      %c0_70 = arith.constant 0 : index
      %68 = vector.load %arg11[%c1_68, %c1_69, %c0_70] : memref<10x10x128xf32, #tpu.memory_space<vmem>>, vector<8x8x128xf32>
      tpu.vector_store %arg11[%c1_68, %c1_69, %c0_70], %67 {strides = array<i32>} : memref<10x10x128xf32, #tpu.memory_space<vmem>>, vector<8x8x128xf32>,
      %c0_71 = arith.constant 0 : index
      %c0_72 = arith.constant 0 : index
      %c0_73 = arith.constant 0 : index
      %69 = vector.load %arg11[%c0_71, %c0_72, %c0_73] : memref<10x10x128xf32, #tpu.memory_space<vmem>>, vector<8x8x128xf32>
      %70 = vector.shape_cast %69 : vector<8x8x128xf32> to vector<64x128xf32>
      %71 = arith.truncf %70 : vector<64x128xf32> to vector<64x128xbf16>
      %c0_74 = arith.constant 0 : index
      %c0_75 = arith.constant 0 : index
      %72 = vector.load %arg13[%c0_74, %c0_75] : memref<64x1152xbf16, #tpu.memory_space<vmem>>, vector<64x128xbf16>
      tpu.vector_store %arg13[%c0_74, %c0_75], %71 {strides = array<i32>} : memref<64x1152xbf16, #tpu.memory_space<vmem>>, vector<64x128xbf16>,
      %c0_76 = arith.constant 0 : index
      %c1_77 = arith.constant 1 : index
      %c0_78 = arith.constant 0 : index
      %73 = vector.load %arg11[%c0_76, %c1_77, %c0_78] : memref<10x10x128xf32, #tpu.memory_space<vmem>>, vector<8x8x128xf32>
      %74 = vector.shape_cast %73 : vector<8x8x128xf32> to vector<64x128xf32>
      %75 = arith.truncf %74 : vector<64x128xf32> to vector<64x128xbf16>
      %c0_79 = arith.constant 0 : index
      %c128_80 = arith.constant 128 : index
      %76 = vector.load %arg13[%c0_79, %c128_80] : memref<64x1152xbf16, #tpu.memory_space<vmem>>, vector<64x128xbf16>
      tpu.vector_store %arg13[%c0_79, %c128_80], %75 {strides = array<i32>} : memref<64x1152xbf16, #tpu.memory_space<vmem>>, vector<64x128xbf16>,
      %c0_81 = arith.constant 0 : index
      %c2_82 = arith.constant 2 : index
      %c0_83 = arith.constant 0 : index
      %77 = vector.load %arg11[%c0_81, %c2_82, %c0_83] : memref<10x10x128xf32, #tpu.memory_space<vmem>>, vector<8x8x128xf32>
      %78 = vector.shape_cast %77 : vector<8x8x128xf32> to vector<64x128xf32>
      %79 = arith.truncf %78 : vector<64x128xf32> to vector<64x128xbf16>
      %c0_84 = arith.constant 0 : index
      %c256_85 = arith.constant 256 : index
      %80 = vector.load %arg13[%c0_84, %c256_85] : memref<64x1152xbf16, #tpu.memory_space<vmem>>, vector<64x128xbf16>
      tpu.vector_store %arg13[%c0_84, %c256_85], %79 {strides = array<i32>} : memref<64x1152xbf16, #tpu.memory_space<vmem>>, vector<64x128xbf16>,
      %c1_86 = arith.constant 1 : index
      %c0_87 = arith.constant 0 : index
      %c0_88 = arith.constant 0 : index
      %81 = vector.load %arg11[%c1_86, %c0_87, %c0_88] : memref<10x10x128xf32, #tpu.memory_space<vmem>>, vector<8x8x128xf32>
      %82 = vector.shape_cast %81 : vector<8x8x128xf32> to vector<64x128xf32>
      %83 = arith.truncf %82 : vector<64x128xf32> to vector<64x128xbf16>
      %c0_89 = arith.constant 0 : index
      %c384_90 = arith.constant 384 : index
      %84 = vector.load %arg13[%c0_89, %c384_90] : memref<64x1152xbf16, #tpu.memory_space<vmem>>, vector<64x128xbf16>
      tpu.vector_store %arg13[%c0_89, %c384_90], %83 {strides = array<i32>} : memref<64x1152xbf16, #tpu.memory_space<vmem>>, vector<64x128xbf16>,
      %c1_91 = arith.constant 1 : index
      %c1_92 = arith.constant 1 : index
      %c0_93 = arith.constant 0 : index
      %85 = vector.load %arg11[%c1_91, %c1_92, %c0_93] : memref<10x10x128xf32, #tpu.memory_space<vmem>>, vector<8x8x128xf32>
      %86 = vector.shape_cast %85 : vector<8x8x128xf32> to vector<64x128xf32>
      %87 = arith.truncf %86 : vector<64x128xf32> to vector<64x128xbf16>
      %c0_94 = arith.constant 0 : index
      %c512_95 = arith.constant 512 : index
      %88 = vector.load %arg13[%c0_94, %c512_95] : memref<64x1152xbf16, #tpu.memory_space<vmem>>, vector<64x128xbf16>
      tpu.vector_store %arg13[%c0_94, %c512_95], %87 {strides = array<i32>} : memref<64x1152xbf16, #tpu.memory_space<vmem>>, vector<64x128xbf16>,
      %c1_96 = arith.constant 1 : index
      %c2_97 = arith.constant 2 : index
      %c0_98 = arith.constant 0 : index
      %89 = vector.load %arg11[%c1_96, %c2_97, %c0_98] : memref<10x10x128xf32, #tpu.memory_space<vmem>>, vector<8x8x128xf32>
      %90 = vector.shape_cast %89 : vector<8x8x128xf32> to vector<64x128xf32>
      %91 = arith.truncf %90 : vector<64x128xf32> to vector<64x128xbf16>
      %c0_99 = arith.constant 0 : index
      %c640_100 = arith.constant 640 : index
      %92 = vector.load %arg13[%c0_99, %c640_100] : memref<64x1152xbf16, #tpu.memory_space<vmem>>, vector<64x128xbf16>
      tpu.vector_store %arg13[%c0_99, %c640_100], %91 {strides = array<i32>} : memref<64x1152xbf16, #tpu.memory_space<vmem>>, vector<64x128xbf16>,
      %c2_101 = arith.constant 2 : index
      %c0_102 = arith.constant 0 : index
      %c0_103 = arith.constant 0 : index
      %93 = vector.load %arg11[%c2_101, %c0_102, %c0_103] : memref<10x10x128xf32, #tpu.memory_space<vmem>>, vector<8x8x128xf32>
      %94 = vector.shape_cast %93 : vector<8x8x128xf32> to vector<64x128xf32>
      %95 = arith.truncf %94 : vector<64x128xf32> to vector<64x128xbf16>
      %c0_104 = arith.constant 0 : index
      %c768_105 = arith.constant 768 : index
      %96 = vector.load %arg13[%c0_104, %c768_105] : memref<64x1152xbf16, #tpu.memory_space<vmem>>, vector<64x128xbf16>
      tpu.vector_store %arg13[%c0_104, %c768_105], %95 {strides = array<i32>} : memref<64x1152xbf16, #tpu.memory_space<vmem>>, vector<64x128xbf16>,
      %c2_106 = arith.constant 2 : index
      %c1_107 = arith.constant 1 : index
      %c0_108 = arith.constant 0 : index
      %97 = vector.load %arg11[%c2_106, %c1_107, %c0_108] : memref<10x10x128xf32, #tpu.memory_space<vmem>>, vector<8x8x128xf32>
      %98 = vector.shape_cast %97 : vector<8x8x128xf32> to vector<64x128xf32>
      %99 = arith.truncf %98 : vector<64x128xf32> to vector<64x128xbf16>
      %c0_109 = arith.constant 0 : index
      %c896_110 = arith.constant 896 : index
      %100 = vector.load %arg13[%c0_109, %c896_110] : memref<64x1152xbf16, #tpu.memory_space<vmem>>, vector<64x128xbf16>
      tpu.vector_store %arg13[%c0_109, %c896_110], %99 {strides = array<i32>} : memref<64x1152xbf16, #tpu.memory_space<vmem>>, vector<64x128xbf16>,
      %c2_111 = arith.constant 2 : index
      %c2_112 = arith.constant 2 : index
      %c0_113 = arith.constant 0 : index
      %101 = vector.load %arg11[%c2_111, %c2_112, %c0_113] : memref<10x10x128xf32, #tpu.memory_space<vmem>>, vector<8x8x128xf32>
      %102 = vector.shape_cast %101 : vector<8x8x128xf32> to vector<64x128xf32>
      %103 = arith.truncf %102 : vector<64x128xf32> to vector<64x128xbf16>
      %c0_114 = arith.constant 0 : index
      %c1024_115 = arith.constant 1024 : index
      %104 = vector.load %arg13[%c0_114, %c1024_115] : memref<64x1152xbf16, #tpu.memory_space<vmem>>, vector<64x128xbf16>
      tpu.vector_store %arg13[%c0_114, %c1024_115], %103 {strides = array<i32>} : memref<64x1152xbf16, #tpu.memory_space<vmem>>, vector<64x128xbf16>,
      %c0_116 = arith.constant 0 : index
      %c0_117 = arith.constant 0 : index
      %105 = vector.load %arg14[%c0_116, %c0_117] : memref<64x128xf32, #tpu.memory_space<vmem>>, vector<64x128xf32>
      %c0_118 = arith.constant 0 : index
      %c0_119 = arith.constant 0 : index
      %106 = vector.load %arg13[%c0_118, %c0_119] : memref<64x1152xbf16, #tpu.memory_space<vmem>>, vector<64x1152xbf16>
      %107 = arith.index_cast %arg2 : i32 to index
      %c0_120 = arith.constant 0 : index
      %c0_121 = arith.constant 0 : index
      %108 = vector.load %arg6[%107, %c0_120, %c0_121] : memref<3x1152x128xbf16, #tpu.memory_space<vmem>>, vector<1x1152x128xbf16>
      %109 = vector.shape_cast %108 : vector<1x1152x128xbf16> to vector<1152x128xbf16>
      %cst_122 = arith.constant dense<0.000000e+00> : vector<64x128xf32>
      %110 = tpu.matmul %106, %109, %cst_122 {dimension_numbers = #tpu.dot_dimension_numbers<[1], [0], [0], [1], [0, 0, 1, 1], [], []>} : vector<64x1152xbf16>, vector<1152x128xbf16>, vector<64x128xf32> -> vector<64x128xf32>
      %111 = arith.addf %105, %110 : vector<64x128xf32>
      %c0_123 = arith.constant 0 : index
      %c0_124 = arith.constant 0 : index
      %112 = vector.load %arg14[%c0_123, %c0_124] : memref<64x128xf32, #tpu.memory_space<vmem>>, vector<64x128xf32>
      tpu.vector_store %arg14[%c0_123, %c0_124], %111 {strides = array<i32>} : memref<64x128xf32, #tpu.memory_space<vmem>>, vector<64x128xf32>,
    } else {
    }
    %c2_i32_3 = arith.constant 2 : i32
    %10 = arith.cmpi eq, %arg2, %c2_i32_3 : i32
    %11 = arith.extui %10 : i1 to i32
    %c0_i32_4 = arith.constant 0 : i32
    %12 = arith.cmpi ne, %11, %c0_i32_4 : i32
    scf.if %12 {
      %c0 = arith.constant 0 : index
      %c0_5 = arith.constant 0 : index
      %13 = vector.load %arg14[%c0, %c0_5] : memref<64x128xf32, #tpu.memory_space<vmem>>, vector<64x128xf32>
      %c0_6 = arith.constant 0 : index
      %c0_7 = arith.constant 0 : index
      %14 = vector.load %arg7[%c0_6, %c0_7] : memref<1x128xf32, #tpu.memory_space<vmem>>, vector<1x128xf32>
      %15 = vector.broadcast %14 : vector<1x128xf32> to vector<64x128xf32>
      %16 = arith.mulf %13, %15 : vector<64x128xf32>
      %c0_8 = arith.constant 0 : index
      %c0_9 = arith.constant 0 : index
      %17 = vector.load %arg8[%c0_8, %c0_9] : memref<1x128xf32, #tpu.memory_space<vmem>>, vector<1x128xf32>
      %18 = vector.broadcast %17 : vector<1x128xf32> to vector<64x128xf32>
      %19 = arith.addf %16, %18 : vector<64x128xf32>
      %cst = arith.constant 0.000000e+00 : f32
      %20 = vector.broadcast %cst : f32 to vector<64x128xf32>
      %21 = arith.maximumf %19, %20 : vector<64x128xf32>
      %22 = arith.truncf %21 : vector<64x128xf32> to vector<64x128xbf16>
      %c0_10 = arith.constant 0 : index
      %c0_11 = arith.constant 0 : index
      %c0_12 = arith.constant 0 : index
      %c0_13 = arith.constant 0 : index
      %23 = vector.load %arg9[%c0_10, %c0_11, %c0_12, %c0_13] : memref<1x1x64x128xbf16, #tpu.memory_space<vmem>>, vector<1x1x64x128xbf16>
      %24 = vector.shape_cast %23 : vector<1x1x64x128xbf16> to vector<64x128xbf16>
      %25 = vector.shape_cast %22 : vector<64x128xbf16> to vector<1x1x64x128xbf16>
      tpu.vector_store %arg9[%c0_10, %c0_11, %c0_12, %c0_13], %25 {strides = array<i32>} : memref<1x1x64x128xbf16, #tpu.memory_space<vmem>>, vector<1x1x64x128xbf16>,
    } else {
    }
    return
  }
  func.func @transform_0(%arg0: i32, %arg1: i32, %arg2: i32) -> (i32, i32, i32, i32, i32) {
    %0 = arith.addi %arg1, %arg2 : i32
    %c1_i32 = arith.constant 1 : i32
    %1 = arith.subi %0, %c1_i32 : i32
    %c0_i32 = arith.constant 0 : i32
    %c2_i32 = arith.constant 2 : i32
    %2 = arith.maxsi %c0_i32, %1 : i32
    %3 = arith.minsi %c2_i32, %2 : i32
    %c0_i32_0 = arith.constant 0 : i32
    %c0_i32_1 = arith.constant 0 : i32
    %c0_i32_2 = arith.constant 0 : i32
    %c0_i32_3 = arith.constant 0 : i32
    return %arg0, %3, %c0_i32_0, %c0_i32_1, %c0_i32_2 : i32, i32, i32, i32, i32
  }
  func.func @transform_1(%arg0: i32, %arg1: i32, %arg2: i32) -> (i32, i32, i32, i32, i32) {
    %0 = arith.addi %arg1, %arg2 : i32
    %c1_i32 = arith.constant 1 : i32
    %1 = arith.subi %0, %c1_i32 : i32
    %c0_i32 = arith.constant 0 : i32
    %c2_i32 = arith.constant 2 : i32
    %2 = arith.maxsi %c0_i32, %1 : i32
    %3 = arith.minsi %c2_i32, %2 : i32
    %c0_i32_0 = arith.constant 0 : i32
    %c0_i32_1 = arith.constant 0 : i32
    %c0_i32_2 = arith.constant 0 : i32
    %c0_i32_3 = arith.constant 0 : i32
    return %arg0, %3, %c0_i32_0, %c0_i32_1, %c0_i32_2 : i32, i32, i32, i32, i32
  }
  func.func @transform_2(%arg0: i32, %arg1: i32, %arg2: i32) -> (i32, i32, i32) {
    %c0_i32 = arith.constant 0 : i32
    %c0_i32_0 = arith.constant 0 : i32
    %c0_i32_1 = arith.constant 0 : i32
    %c0_i32_2 = arith.constant 0 : i32
    return %c0_i32, %c0_i32_0, %c0_i32_1 : i32, i32, i32
  }
  func.func @transform_3(%arg0: i32, %arg1: i32, %arg2: i32) -> (i32, i32, i32) {
    %c0_i32 = arith.constant 0 : i32
    %c0_i32_0 = arith.constant 0 : i32
    %c0_i32_1 = arith.constant 0 : i32
    %c0_i32_2 = arith.constant 0 : i32
    return %c0_i32, %c0_i32_0, %c0_i32_1 : i32, i32, i32
  }
  func.func @transform_4(%arg0: i32, %arg1: i32, %arg2: i32) -> (i32, i32) {
    %c0_i32 = arith.constant 0 : i32
    %c0_i32_0 = arith.constant 0 : i32
    %c0_i32_1 = arith.constant 0 : i32
    return %c0_i32, %c0_i32_0 : i32, i32
  }
  func.func @transform_5(%arg0: i32, %arg1: i32, %arg2: i32) -> (i32, i32) {
    %c0_i32 = arith.constant 0 : i32
    %c0_i32_0 = arith.constant 0 : i32
    %c0_i32_1 = arith.constant 0 : i32
    return %c0_i32, %c0_i32_0 : i32, i32
  }
  func.func @transform_6(%arg0: i32, %arg1: i32, %arg2: i32) -> (i32, i32, i32, i32) {
    %c0_i32 = arith.constant 0 : i32
    %c0_i32_0 = arith.constant 0 : i32
    %c0_i32_1 = arith.constant 0 : i32
    return %arg0, %arg1, %c0_i32, %c0_i32_0 : i32, i32, i32, i32
  }
}

</mosaic_0001>

<llo_original>
// kernel: tpu_custom_call.1
$region0: #{tpu_custom_call.1}
  #allocation0 [shape = 'u32[]', space=smem, size = 0x4, offset = 0x4, fixed_abs, tag = 'smem constant byte address 0x4 - core index']
  #allocation1 [shape = 'u32[144,128]{1,0:T(1,128)}', space=vmem, size = 0x12000, scoped, tag = 'internal scratch']
  #allocation2 [shape = 'f32[10,10,128]{2,1,0:T(8,128)}', space=vmem, size = 0x14000, scoped, tag = 'scratch operand']
  #allocation3 [shape = 'f32[10,10,128]{2,1,0:T(8,128)}', space=vmem, size = 0x14000, scoped, tag = 'scratch operand']
  #allocation4 [shape = 'bf16[64,1152]{1,0:T(16,128)(2,1)}', space=vmem, size = 0x24000, scoped, tag = 'scratch operand']
  #allocation5 [shape = 'bf16[64,1152]{1,0:T(16,128)(2,1)}', space=vmem, size = 0x24000, scoped, tag = 'scratch operand']
  #allocation6 [shape = 'f32[64,128]{1,0:T(8,128)}', space=vmem, size = 0x8000, scoped, tag = 'scratch operand']
  %s0 = inlined_call_operand.hbm [shape: bf16[2,3,8,8,128], index: 0, kind: input, shape index: {}]
  %s1 = inlined_call_operand.hbm [shape: bf16[2,3,8,8,128], index: 1, kind: input, shape index: {}]
  %s2 = inlined_call_operand.hbm [shape: bf16[3,1152,128], index: 2, kind: input, shape index: {}]
  %s3 = inlined_call_operand.hbm [shape: bf16[3,1152,128], index: 3, kind: input, shape index: {}]
  %s4 = inlined_call_operand.vmem [shape: f32[1,128], index: 4, kind: input, shape index: {}]
  %s5 = inlined_call_operand.vmem [shape: f32[1,128], index: 5, kind: input, shape index: {}]
  %s6 = inlined_call_operand.hbm [shape: bf16[2,3,64,128], index: 6, kind: output, shape index: {}]
  %s7 = sld [smem:[#allocation0]]
  $region85: #{tpu_custom_call.1} parent=0
    _
  %s9 = ssub.s32 1, %s7
  %s10 = scalar_select 0, %s9, %s7
  $region1: #{tpu_custom_call.1} parent=0
    #allocation7 [shape = 'u8[32768]{0}', space=vmem, size = 0x8000, scoped, tag = 'input window, operand 0']
    #allocation8 [shape = 's32[2]{0}', space=sflag, size = 0x8, scoped, tag = 'scoped memory for tpu_custom_call.1']
    #allocation9 [shape = 's32[2]{0}', space=sflag, size = 0x8, scoped, tag = 'scoped memory for tpu_custom_call.1']
    #allocation10 [shape = 'u8[32768]{0}', space=vmem, size = 0x8000, scoped, tag = 'input window, operand 1']
    #allocation11 [shape = 's32[2]{0}', space=sflag, size = 0x8, scoped, tag = 'scoped memory for tpu_custom_call.1']
    #allocation12 [shape = 'u8[884736]{0}', space=vmem, size = 0xd8000, scoped, tag = 'input window, operand 2, single buffered']
    #allocation13 [shape = 'u8[884736]{0}', space=vmem, size = 0xd8000, scoped, tag = 'input window, operand 3, single buffered']
    #allocation14 [shape = 's32[1]{0}', space=sflag, size = 0x4, scoped, tag = 'scoped memory for tpu_custom_call.1']
    #allocation15 [shape = 'u8[32768]{0}', space=vmem, size = 0x8000, scoped, tag = 'output window, operand 0']
    %11 = vsyncpa [#allocation8], 0
    %s12 = scalar_lea.sflag [#allocation8], 1
    %13 = vsyncpa %s12, 0
    %14 = vsyncpa [#allocation11], 0
    %s15 = scalar_lea.sflag [#allocation11], 1
    %16 = vsyncpa %s15, 0
    %17 = vsyncpa [#allocation14], 0
    %18 = vsyncpa [#allocation9], 0
    %s19 = scalar_lea.sflag [#allocation9], 1
    %20 = vsyncpa %s19, 0
    loop: start=0, step=1, limit=20
    $region2: #{tpu_custom_call.1} parent=1 // loop_pre_header
      _
    $region3: #{tpu_custom_call.1} parent=1 // loop_header
      %s22 = sphi 0, %s26
      %p23 = scmp.ge.s32.totalorder %s22, 20
      %s29 = sphi 0, %s48
      %s30 = sphi 0, %s44
      %s31 = sphi 0, %s40
      %s32 = sphi 0, %s29
      %s33 = sphi 0, %s30
      %s34 = sphi 0, %s31
      %s35 = sphi 0, %s32
      %s36 = sphi 0, %s33
      %s37 = sphi 0, %s34
      %s65 = sphi 0, %s67
      %s68 = sphi 0, %s65
      %s69 = sphi 0, %s68
      %s85 = sphi 0, %s69
      %s105 = sphi 0, %s107
      %s108 = sphi 0, %s105
      %s109 = sphi 0, %s108
      %s125 = sphi 0, %s109
      %s129 = sphi 0, %s129
      %s131 = sphi 0, %s129
      %s132 = sphi 0, %s131
      %s146 = sphi 0, %s132
      %s150 = sphi 0, %s150
      %s152 = sphi 0, %s150
      %s153 = sphi 0, %s152
      %s167 = sphi 0, %s153
      %s171 = sphi 0, %s171
      %s173 = sphi 0, %s171
      %s174 = sphi 0, %s173
      %s188 = sphi 0, %s174
      %s192 = sphi 0, %s192
      %s194 = sphi 0, %s192
      %s195 = sphi 0, %s194
      %s209 = sphi 0, %s195
      %s217 = sphi 0, %s219
      %s220 = sphi 0, %s217
      %s221 = sphi 0, %s220
      %s237 = sphi 0, %s221
    $region4: #{tpu_custom_call.1} parent=1 // loop_header_branch
      %25 = sbr.rel (%p23) target = $region8
    $region5: #{tpu_custom_call.1} parent=1 // loop_body
      %s27 = ssub.s32 %s22, 1
      %s28 = ssub.s32 %s22, 2
      %s38 = sadd.s32 1, %s31
      %p39 = scmp.ge.s32.totalorder %s38, 3
      %s40 = scalar_select %p39, 0, %s38
      %s41 = sadd.s32 1, %s30
      %s42 = scalar_select %p39, %s41, %s30
      %p43 = scmp.ge.s32.totalorder %s42, 3
      %s44 = scalar_select %p43, 0, %s42
      %s45 = sadd.s32 1, %s29
      %s46 = scalar_select %p43, %s45, %s29
      %p47 = scmp.ge.s32.totalorder %s46, 2
      %s48 = scalar_select %p47, 0, %s46
      %s49 = sadd.s32 %s30, %s31
      %s50 = ssub.s32 %s49, 1
      %p51 = scmp.gt.s32.totalorder %s50, 0
      %s52 = scalar_select %p51, %s50, 0
      %p53 = scmp.lt.s32.totalorder %s52, 2
      %s54 = scalar_select %p53, %s52, 2
      %s55 = sadd.s32 %s44, %s40
      %s56 = ssub.s32 %s55, 1
      %p57 = scmp.gt.s32.totalorder %s56, 0
      %s58 = scalar_select %p57, %s56, 0
      %p59 = scmp.lt.s32.totalorder %s58, 2
      %s60 = scalar_select %p59, %s58, 2
      %s61 = ssub.s32 %s29, %s48
      %s62 = ssub.s32 %s54, %s60
      %s63 = sor.u32 %s61, %s62
      %p64 = scmp.eq.s32.totalorder %s63, 0
      %s66 = sadd.s32 %s65, 1
      %s67 = scalar_select %p64, %s65, %s66
      %p70 = pneg %p64
      %p71 = scmp.eq.s32.totalorder %s22, 17
      %p72 = por %p70, %p71
      %p73 = scmp.ne.s32.totalorder %s65, %s68
      %p74 = scmp.eq.s32.totalorder %s22, 0
      %p75 = por %p73, %p74
      %p76 = scmp.ne.s32.totalorder %s65, %s68
      %p77 = scmp.eq.s32.totalorder %s27, 17
      %p78 = por %p76, %p77
      %p79 = scmp.ne.s32.totalorder %s68, %s69
      %p80 = scmp.eq.s32.totalorder %s27, 0
      %p81 = por %p79, %p80
      %p82 = scmp.ne.s32.totalorder %s68, %s69
      %p83 = scmp.eq.s32.totalorder %s28, 17
      %p84 = por %p82, %p83
      %p86 = scmp.ne.s32.totalorder %s69, %s85
      %p87 = scmp.eq.s32.totalorder %s28, 0
      %p88 = por %p86, %p87
      %s89 = sadd.s32 %s30, %s31
      %s90 = ssub.s32 %s89, 1
      %p91 = scmp.gt.s32.totalorder %s90, 0
      %s92 = scalar_select %p91, %s90, 0
      %p93 = scmp.lt.s32.totalorder %s92, 2
      %s94 = scalar_select %p93, %s92, 2
      %s95 = sadd.s32 %s44, %s40
      %s96 = ssub.s32 %s95, 1
      %p97 = scmp.gt.s32.totalorder %s96, 0
      %s98 = scalar_select %p97, %s96, 0
      %p99 = scmp.lt.s32.totalorder %s98, 2
      %s100 = scalar_select %p99, %s98, 2
      %s101 = ssub.s32 %s29, %s48
      %s102 = ssub.s32 %s94, %s100
      %s103 = sor.u32 %s101, %s102
      %p104 = scmp.eq.s32.totalorder %s103, 0
      %s106 = sadd.s32 %s105, 1
      %s107 = scalar_select %p104, %s105, %s106
      %p110 = pneg %p104
      %p111 = scmp.eq.s32.totalorder %s22, 17
      %p112 = por %p110, %p111
      %p113 = scmp.ne.s32.totalorder %s105, %s108
      %p114 = scmp.eq.s32.totalorder %s22, 0
      %p115 = por %p113, %p114
      %p116 = scmp.ne.s32.totalorder %s105, %s108
      %p117 = scmp.eq.s32.totalorder %s27, 17
      %p118 = por %p116, %p117
      %p119 = scmp.ne.s32.totalorder %s108, %s109
      %p120 = scmp.eq.s32.totalorder %s27, 0
      %p121 = por %p119, %p120
      %p122 = scmp.ne.s32.totalorder %s108, %s109
      %p123 = scmp.eq.s32.totalorder %s28, 17
      %p124 = por %p122, %p123
      %p126 = scmp.ne.s32.totalorder %s109, %s125
      %p127 = scmp.eq.s32.totalorder %s28, 0
      %p128 = por %p126, %p127
      %s130 = sadd.s32 %s129, 1
      %p133 = scmp.eq.s32.totalorder %s22, 17
      %p134 = scmp.ne.s32.totalorder %s129, %s131
      %p135 = scmp.eq.s32.totalorder %s22, 0
      %p136 = por %p134, %p135
      %p137 = scmp.ne.s32.totalorder %s129, %s131
      %p138 = scmp.eq.s32.totalorder %s27, 17
      %p139 = por %p137, %p138
      %p140 = scmp.ne.s32.totalorder %s131, %s132
      %p141 = scmp.eq.s32.totalorder %s27, 0
      %p142 = por %p140, %p141
      %p143 = scmp.ne.s32.totalorder %s131, %s132
      %p144 = scmp.eq.s32.totalorder %s28, 17
      %p145 = por %p143, %p144
      %p147 = scmp.ne.s32.totalorder %s132, %s146
      %p148 = scmp.eq.s32.totalorder %s28, 0
      %p149 = por %p147, %p148
      %s151 = sadd.s32 %s150, 1
      %p154 = scmp.eq.s32.totalorder %s22, 17
      %p155 = scmp.ne.s32.totalorder %s150, %s152
      %p156 = scmp.eq.s32.totalorder %s22, 0
      %p157 = por %p155, %p156
      %p158 = scmp.ne.s32.totalorder %s150, %s152
      %p159 = scmp.eq.s32.totalorder %s27, 17
      %p160 = por %p158, %p159
      %p161 = scmp.ne.s32.totalorder %s152, %s153
      %p162 = scmp.eq.s32.totalorder %s27, 0
      %p163 = por %p161, %p162
      %p164 = scmp.ne.s32.totalorder %s152, %s153
      %p165 = scmp.eq.s32.totalorder %s28, 17
      %p166 = por %p164, %p165
      %p168 = scmp.ne.s32.totalorder %s153, %s167
      %p169 = scmp.eq.s32.totalorder %s28, 0
      %p170 = por %p168, %p169
      %s172 = sadd.s32 %s171, 1
      %p175 = scmp.eq.s32.totalorder %s22, 17
      %p176 = scmp.ne.s32.totalorder %s171, %s173
      %p177 = scmp.eq.s32.totalorder %s22, 0
      %p178 = por %p176, %p177
      %p179 = scmp.ne.s32.totalorder %s171, %s173
      %p180 = scmp.eq.s32.totalorder %s27, 17
      %p181 = por %p179, %p180
      %p182 = scmp.ne.s32.totalorder %s173, %s174
      %p183 = scmp.eq.s32.totalorder %s27, 0
      %p184 = por %p182, %p183
      %p185 = scmp.ne.s32.totalorder %s173, %s174
      %p186 = scmp.eq.s32.totalorder %s28, 17
      %p187 = por %p185, %p186
      %p189 = scmp.ne.s32.totalorder %s174, %s188
      %p190 = scmp.eq.s32.totalorder %s28, 0
      %p191 = por %p189, %p190
      %s193 = sadd.s32 %s192, 1
      %p196 = scmp.eq.s32.totalorder %s22, 17
      %p197 = scmp.ne.s32.totalorder %s192, %s194
      %p198 = scmp.eq.s32.totalorder %s22, 0
      %p199 = por %p197, %p198
      %p200 = scmp.ne.s32.totalorder %s192, %s194
      %p201 = scmp.eq.s32.totalorder %s27, 17
      %p202 = por %p200, %p201
      %p203 = scmp.ne.s32.totalorder %s194, %s195
      %p204 = scmp.eq.s32.totalorder %s27, 0
      %p205 = por %p203, %p204
      %p206 = scmp.ne.s32.totalorder %s194, %s195
      %p207 = scmp.eq.s32.totalorder %s28, 17
      %p208 = por %p206, %p207
      %p210 = scmp.ne.s32.totalorder %s195, %s209
      %p211 = scmp.eq.s32.totalorder %s28, 0
      %p212 = por %p210, %p211
      %s213 = ssub.s32 %s29, %s48
      %s214 = ssub.s32 %s30, %s44
      %s215 = sor.u32 %s213, %s214
      %p216 = scmp.eq.s32.totalorder %s215, 0
      %s218 = sadd.s32 %s217, 1
      %s219 = scalar_select %p216, %s217, %s218
      %p222 = pneg %p216
      %p223 = scmp.eq.s32.totalorder %s22, 17
      %p224 = por %p222, %p223
      %p225 = scmp.ne.s32.totalorder %s217, %s220
      %p226 = scmp.eq.s32.totalorder %s22, 0
      %p227 = por %p225, %p226
      %p228 = scmp.ne.s32.totalorder %s217, %s220
      %p229 = scmp.eq.s32.totalorder %s27, 17
      %p230 = por %p228, %p229
      %p231 = scmp.ne.s32.totalorder %s220, %s221
      %p232 = scmp.eq.s32.totalorder %s27, 0
      %p233 = por %p231, %p232
      %p234 = scmp.ne.s32.totalorder %s220, %s221
      %p235 = scmp.eq.s32.totalorder %s28, 17
      %p236 = por %p234, %p235
      %p238 = scmp.ne.s32.totalorder %s221, %s237
      %p239 = scmp.eq.s32.totalorder %s28, 0
      %p240 = por %p238, %p239
      %p241 = scmp.le.s32.totalorder 1, %s22
      %p242 = scmp.lt.s32.totalorder %s22, 19
      %p243 = pnand %p241, %p242
      %p244 = pneg %p243
      // Predicated region
      $region9: #{tpu_custom_call.1} parent=5 // pred_check
        _
      $region10: #{tpu_custom_call.1} parent=5 // pred_check_branch
        %246 = sbr.rel (%p243) target = $region12
      $region11: #{tpu_custom_call.1} parent=5 // pred_region
        %s247 = ssub.s32 %s22, 1
        // Predicated region
        $region13: #{tpu_custom_call.1} parent=11 // pred_check
          %p248 = pneg %p142
        $region14: #{tpu_custom_call.1} parent=11 // pred_check_branch
          %250 = sbr.rel (%p248) target = $region16
        $region15: #{tpu_custom_call.1} parent=11 // pred_region
          %s252 = ssub.s32 27648, 27648
          %253 = vsyncadd [#allocation11], %s252
          %s254 = sshll.u32 [#allocation12], 4
          %s255 = int_to_ptr.vmem [resolvable:$true] %s254
          %260 = dma.hbm_to_vmem [thread:$0]  %s2, 27648, %s255, [#allocation11], 64, 64, 4
        $region16: #{tpu_custom_call.1} parent=11 // pred_fallthru
          _
        // Predicated region
        $region17: #{tpu_custom_call.1} parent=11 // pred_check
          %p261 = pneg %p163
        $region18: #{tpu_custom_call.1} parent=11 // pred_check_branch
          %263 = sbr.rel (%p261) target = $region20
        $region19: #{tpu_custom_call.1} parent=11 // pred_region
          %s265 = ssub.s32 27648, 27648
          %266 = vsyncadd [#allocation14], %s265
          %s267 = sshll.u32 [#allocation13], 4
          %s268 = int_to_ptr.vmem [resolvable:$true] %s267
          %273 = dma.hbm_to_vmem [thread:$0]  %s3, 27648, %s268, [#allocation14], 64, 64, 4
        $region20: #{tpu_custom_call.1} parent=11 // pred_fallthru
          _
        // Predicated region
        $region21: #{tpu_custom_call.1} parent=11 // pred_check
          %p274 = pneg %p184
        $region22: #{tpu_custom_call.1} parent=11 // pred_check_branch
          %276 = sbr.rel (%p274) target = $region24
        $region23: #{tpu_custom_call.1} parent=11 // pred_region
          _
        $region24: #{tpu_custom_call.1} parent=11 // pred_fallthru
          _
        // Predicated region
        $region25: #{tpu_custom_call.1} parent=11 // pred_check
          %p277 = pneg %p205
        $region26: #{tpu_custom_call.1} parent=11 // pred_check_branch
          %279 = sbr.rel (%p277) target = $region28
        $region27: #{tpu_custom_call.1} parent=11 // pred_region
          _
        $region28: #{tpu_custom_call.1} parent=11 // pred_fallthru
          _
      $region12: #{tpu_custom_call.1} parent=5 // pred_fallthru
        _
      %p280 = scmp.lt.s32.totalorder %s22, 18
      // Predicated region
      $region29: #{tpu_custom_call.1} parent=5 // pred_check
        %p281 = pneg %p280
      $region30: #{tpu_custom_call.1} parent=5 // pred_check_branch
        %283 = sbr.rel (%p281) target = $region32
      $region31: #{tpu_custom_call.1} parent=5 // pred_region
        // Predicated region
        $region33: #{tpu_custom_call.1} parent=31 // pred_check
          %p284 = pneg %p75
        $region34: #{tpu_custom_call.1} parent=31 // pred_check_branch
          %286 = sbr.rel (%p284) target = $region36
        $region35: #{tpu_custom_call.1} parent=31 // pred_region
          %s287 = sand.u32 %s65, 1
          %s288 = scalar_lea.sflag [#allocation8], %s287
          %s289 = sand.u32 %s65, 1
          %s290 = smul.addr %s289, 32
          %s291 = scalar_lea.vmem [#allocation7], %s290
          %s292 = sadd.s32 %s30, %s31
          %s293 = ssub.s32 %s292, 1
          %p294 = scmp.gt.s32.totalorder %s293, 0
          %s295 = scalar_select %p294, %s293, 0
          %p296 = scmp.lt.s32.totalorder %s295, 2
          %s297 = scalar_select %p296, %s295, 2
          %s299 = ssub.s32 512, 512
          %300 = vsyncadd %s288, %s299
          %s301 = smul.addr %s297, 8
          %s302 = smul.addr %s29, 24
          %s303 = sadd.s32 %s301, %s302
          %s304 = smul.addr %s303, 64
          %s305 = scalar_lea.hbm %s0, %s304
          %s306 = sshll.u32 %s291, 4
          %s307 = int_to_ptr.vmem [resolvable:$true] %s306
          %312 = dma.hbm_to_vmem [thread:$0]  %s305, 512, %s307, %s288, 64, 64, 4
        $region36: #{tpu_custom_call.1} parent=31 // pred_fallthru
          _
        // Predicated region
        $region37: #{tpu_custom_call.1} parent=31 // pred_check
          %p313 = pneg %p115
        $region38: #{tpu_custom_call.1} parent=31 // pred_check_branch
          %315 = sbr.rel (%p313) target = $region40
        $region39: #{tpu_custom_call.1} parent=31 // pred_region
          %s316 = sand.u32 %s22, 1
          %s317 = scalar_lea.sflag [#allocation11], %s316
          %s318 = sand.u32 %s105, 1
          %s319 = smul.addr %s318, 32
          %s320 = scalar_lea.vmem [#allocation10], %s319
          %s321 = sadd.s32 %s30, %s31
          %s322 = ssub.s32 %s321, 1
          %p323 = scmp.gt.s32.totalorder %s322, 0
          %s324 = scalar_select %p323, %s322, 0
          %p325 = scmp.lt.s32.totalorder %s324, 2
          %s326 = scalar_select %p325, %s324, 2
          %s328 = ssub.s32 512, 512
          %329 = vsyncadd %s317, %s328
          %s330 = smul.addr %s326, 8
          %s331 = smul.addr %s29, 24
          %s332 = sadd.s32 %s330, %s331
          %s333 = smul.addr %s332, 64
          %s334 = scalar_lea.hbm %s1, %s333
          %s335 = sshll.u32 %s320, 4
          %s336 = int_to_ptr.vmem [resolvable:$true] %s335
          %341 = dma.hbm_to_vmem [thread:$0]  %s334, 512, %s336, %s317, 64, 64, 4
        $region40: #{tpu_custom_call.1} parent=31 // pred_fallthru
          _
      $region32: #{tpu_custom_call.1} parent=5 // pred_fallthru
        _
      %p342 = scmp.le.s32.totalorder 1, %s22
      %p343 = scmp.lt.s32.totalorder %s22, 19
      %p344 = pnand %p342, %p343
      %p345 = pneg %p344
      // Predicated region
      $region41: #{tpu_custom_call.1} parent=5 // pred_check
        _
      $region42: #{tpu_custom_call.1} parent=5 // pred_check_branch
        %347 = sbr.rel (%p344) target = $region44
      $region43: #{tpu_custom_call.1} parent=5 // pred_region
        %s348 = ssub.s32 %s22, 1
        %s349 = sand.u32 %s68, 1
        %s350 = scalar_lea.sflag [#allocation8], %s349
        %s351 = sand.u32 %s68, 1
        %s352 = smul.addr %s351, 32
        %s353 = scalar_lea.vmem [#allocation7], %s352
        // Predicated region
        $region45: #{tpu_custom_call.1} parent=43 // pred_check
          %p354 = pneg %p81
        $region46: #{tpu_custom_call.1} parent=43 // pred_check_branch
          %356 = sbr.rel (%p354) target = $region48
        $region47: #{tpu_custom_call.1} parent=43 // pred_region
          %357 = dma.done %s350, 512
        $region48: #{tpu_custom_call.1} parent=43 // pred_fallthru
          _
        %s358 = sand.u32 %s27, 1
        %s359 = scalar_lea.sflag [#allocation11], %s358
        %s360 = sand.u32 %s108, 1
        %s361 = smul.addr %s360, 32
        %s362 = scalar_lea.vmem [#allocation10], %s361
        // Predicated region
        $region49: #{tpu_custom_call.1} parent=43 // pred_check
          %p363 = pneg %p121
        $region50: #{tpu_custom_call.1} parent=43 // pred_check_branch
          %365 = sbr.rel (%p363) target = $region52
        $region51: #{tpu_custom_call.1} parent=43 // pred_region
          %366 = dma.done %s359, 512
        $region52: #{tpu_custom_call.1} parent=43 // pred_fallthru
          _
        // Predicated region
        $region53: #{tpu_custom_call.1} parent=43 // pred_check
          %p367 = pneg %p142
        $region54: #{tpu_custom_call.1} parent=43 // pred_check_branch
          %369 = sbr.rel (%p367) target = $region56
        $region55: #{tpu_custom_call.1} parent=43 // pred_region
          %370 = dma.done [#allocation11], 27648
        $region56: #{tpu_custom_call.1} parent=43 // pred_fallthru
          _
        // Predicated region
        $region57: #{tpu_custom_call.1} parent=43 // pred_check
          %p371 = pneg %p163
        $region58: #{tpu_custom_call.1} parent=43 // pred_check_branch
          %373 = sbr.rel (%p371) target = $region60
        $region59: #{tpu_custom_call.1} parent=43 // pred_region
          %374 = dma.done [#allocation14], 27648
        $region60: #{tpu_custom_call.1} parent=43 // pred_fallthru
          _
        %s375 = sand.u32 %s68, 1
        %s376 = scalar_lea.sflag [#allocation8], %s375
        %s377 = sand.u32 %s68, 1
        %s378 = smul.addr %s377, 32
        %s379 = scalar_lea.vmem [#allocation7], %s378
        %p380 = pneg %p81
        %p381 = pneg %p78
        %s382 = sand.u32 %s27, 1
        %s383 = scalar_lea.sflag [#allocation11], %s382
        %s384 = sand.u32 %s108, 1
        %s385 = smul.addr %s384, 32
        %s386 = scalar_lea.vmem [#allocation10], %s385
        %p387 = pneg %p121
        %p388 = pneg %p118
        %p389 = pneg %p142
        %p390 = pneg %p139
        %p391 = pneg %p163
        %p392 = pneg %p160
        %p393 = pneg %p184
        %p394 = pneg %p181
        %p395 = pneg %p205
        %p396 = pneg %p202
        %p397 = pneg %p233
        %p398 = pneg %p230
        %s399 = sand.u32 %s220, 1
        %s400 = scalar_lea.sflag [#allocation9], %s399
        %s401 = sand.u32 %s220, 1
        %s402 = smul.addr %s401, 32
        %s403 = scalar_lea.vmem [#allocation15], %s402
        %s404 = sadd.s32 %s33, %s34
        %s405 = ssub.s32 %s404, 1
        %p406 = scmp.gt.s32.totalorder %s405, 0
        %s407 = scalar_select %p406, %s405, 0
        %p408 = scmp.lt.s32.totalorder %s407, 2
        %s409 = scalar_select %p408, %s407, 2
        %s410 = sadd.s32 %s33, %s34
        %s411 = ssub.s32 %s410, 1
        %p412 = scmp.gt.s32.totalorder %s411, 0
        %s413 = scalar_select %p412, %s411, 0
        %p414 = scmp.lt.s32.totalorder %s413, 2
        %s415 = scalar_select %p414, %s413, 2
        %p417 = scmp.eq.s32.totalorder %s34, 0
        // Predicated region
        $region61: #{tpu_custom_call.1} parent=43 // pred_check
          %p418 = pneg %p417
        $region62: #{tpu_custom_call.1} parent=43 // pred_check_branch
          %420 = sbr.rel (%p418) target = $region64
        $region63: #{tpu_custom_call.1} parent=43 // pred_region
          %421 = vst [vmem:[#allocation6] sm:$0xff] 0.0
          %422 = vst [vmem:[#allocation6 + $0x8] sm:$0xff] 0.0
          %423 = vst [vmem:[#allocation6 + $0x10] sm:$0xff] 0.0
          %424 = vst [vmem:[#allocation6 + $0x18] sm:$0xff] 0.0
          %425 = vst [vmem:[#allocation6 + $0x20] sm:$0xff] 0.0
          %426 = vst [vmem:[#allocation6 + $0x28] sm:$0xff] 0.0
          %427 = vst [vmem:[#allocation6 + $0x30] sm:$0xff] 0.0
          %428 = vst [vmem:[#allocation6 + $0x38] sm:$0xff] 0.0
        $region64: #{tpu_custom_call.1} parent=43 // pred_fallthru
          _
        %s429 = sadd.s32 %s33, %s34
        %s430 = ssub.s32 %s429, 1
        %p431 = scmp.ge.s32.totalorder %s430, 0
        %p432 = scmp.le.s32.totalorder %s430, 2
        %p433 = pnand %p431, %p432
        %p434 = pneg %p433
        // Predicated region
        $region65: #{tpu_custom_call.1} parent=43 // pred_check
          _
        $region66: #{tpu_custom_call.1} parent=43 // pred_check_branch
          %436 = sbr.rel (%p433) target = $region68
        $region67: #{tpu_custom_call.1} parent=43 // pred_region
          %437 = vst [vmem:[#allocation2] sm:$0xff] 0.0
          %438 = vst [vmem:[#allocation2 + $0x8] sm:$0x3] 0.0
          %439 = vst [vmem:[#allocation2 + $0x10] sm:$0xff] 0.0
          %440 = vst [vmem:[#allocation2 + $0x18] sm:$0x3] 0.0
          %441 = vst [vmem:[#allocation2 + $0x20] sm:$0xff] 0.0
          %442 = vst [vmem:[#allocation2 + $0x28] sm:$0x3] 0.0
          %443 = vst [vmem:[#allocation2 + $0x30] sm:$0xff] 0.0
          %444 = vst [vmem:[#allocation2 + $0x38] sm:$0x3] 0.0
          %445 = vst [vmem:[#allocation2 + $0x40] sm:$0xff] 0.0
          %446 = vst [vmem:[#allocation2 + $0x48] sm:$0x3] 0.0
          %447 = vst [vmem:[#allocation2 + $0x50] sm:$0xff] 0.0
          %448 = vst [vmem:[#allocation2 + $0x58] sm:$0x3] 0.0
          %449 = vst [vmem:[#allocation2 + $0x60] sm:$0xff] 0.0
          %450 = vst [vmem:[#allocation2 + $0x68] sm:$0x3] 0.0
          %451 = vst [vmem:[#allocation2 + $0x70] sm:$0xff] 0.0
          %452 = vst [vmem:[#allocation2 + $0x78] sm:$0x3] 0.0
          %453 = vst [vmem:[#allocation2 + $0x80] sm:$0xff] 0.0
          %454 = vst [vmem:[#allocation2 + $0x88] sm:$0x3] 0.0
          %455 = vst [vmem:[#allocation2 + $0x90] sm:$0xff] 0.0
          %456 = vst [vmem:[#allocation2 + $0x98] sm:$0x3] 0.0
          %v457 = vld [vmem:[%s353] sm:$0xf]
          %v458 = vld [vmem:[%s353 + $0x4] sm:$0xf]
          %v459 = vld [vmem:[%s353 + $0x8] sm:$0xf]
          %v460 = vld [vmem:[%s353 + $0xc] sm:$0xf]
          %v461 = vld [vmem:[%s353 + $0x10] sm:$0xf]
          %v462 = vld [vmem:[%s353 + $0x14] sm:$0xf]
          %v463 = vld [vmem:[%s353 + $0x18] sm:$0xf]
          %v464 = vld [vmem:[%s353 + $0x1c] sm:$0xf]
          %v465 = vunpack.c.l.bf16 %v457
          %v466 = vunpack.c.l.bf16 %v458
          %v467 = vunpack.c.l.bf16 %v459
          %v468 = vunpack.c.l.bf16 %v460
          %v469 = vunpack.c.l.bf16 %v461
          %v470 = vunpack.c.l.bf16 %v462
          %v471 = vunpack.c.l.bf16 %v463
          %v472 = vunpack.c.l.bf16 %v464
          %s473 = scalar_lea.vmem [#allocation2], 16
          %474 = vst [vmem:[%s473 + $0x1] sm:$0xff] %v465
          %475 = vst [vmem:[%s473 + $0x11] sm:$0xff] %v466
          %476 = vst [vmem:[%s473 + $0x21] sm:$0xff] %v467
          %477 = vst [vmem:[%s473 + $0x31] sm:$0xff] %v468
          %478 = vst [vmem:[%s473 + $0x41] sm:$0xff] %v469
          %479 = vst [vmem:[%s473 + $0x51] sm:$0xff] %v470
          %480 = vst [vmem:[%s473 + $0x61] sm:$0xff] %v471
          %481 = vst [vmem:[%s473 + $0x71] sm:$0xff] %v472
          %v482 = vld [vmem:[#allocation2] sm:$0xff]
          %v483 = vld [vmem:[#allocation2 + $0x10] sm:$0xff]
          %v484 = vld [vmem:[#allocation2 + $0x20] sm:$0xff]
          %v485 = vld [vmem:[#allocation2 + $0x30] sm:$0xff]
          %v486 = vld [vmem:[#allocation2 + $0x40] sm:$0xff]
          %v487 = vld [vmem:[#allocation2 + $0x50] sm:$0xff]
          %v488 = vld [vmem:[#allocation2 + $0x60] sm:$0xff]
          %v489 = vld [vmem:[#allocation2 + $0x70] sm:$0xff]
          %v490 = vpack.c.bf16 %v483, %v482
          %v491 = vpack.c.bf16 %v485, %v484
          %v492 = vpack.c.bf16 %v487, %v486
          %v493 = vpack.c.bf16 %v489, %v488
          %494 = vst [vmem:[#allocation4] sm:$0xff] %v490
          %495 = vst [vmem:[#allocation4 + $0x48] sm:$0xff] %v491
          %496 = vst [vmem:[#allocation4 + $0x90] sm:$0xff] %v492
          %497 = vst [vmem:[#allocation4 + $0xd8] sm:$0xff] %v493
          %v498 = vld [vmem:[#allocation2 + $0x1] sm:$0xff]
          %v499 = vld [vmem:[#allocation2 + $0x11] sm:$0xff]
          %v500 = vld [vmem:[#allocation2 + $0x21] sm:$0xff]
          %v501 = vld [vmem:[#allocation2 + $0x31] sm:$0xff]
          %v502 = vld [vmem:[#allocation2 + $0x41] sm:$0xff]
          %v503 = vld [vmem:[#allocation2 + $0x51] sm:$0xff]
          %v504 = vld [vmem:[#allocation2 + $0x61] sm:$0xff]
          %v505 = vld [vmem:[#allocation2 + $0x71] sm:$0xff]
          %v506 = vpack.c.bf16 %v499, %v498
          %v507 = vpack.c.bf16 %v501, %v500
          %v508 = vpack.c.bf16 %v503, %v502
          %v509 = vpack.c.bf16 %v505, %v504
          %510 = vst [vmem:[#allocation4 + $0x8] sm:$0xff] %v506
          %511 = vst [vmem:[#allocation4 + $0x50] sm:$0xff] %v507
          %512 = vst [vmem:[#allocation4 + $0x98] sm:$0xff] %v508
          %513 = vst [vmem:[#allocation4 + $0xe0] sm:$0xff] %v509
          %v514 = vld [vmem:[#allocation2 + $0x2] sm:$0xff]
          %v515 = vld [vmem:[#allocation2 + $0x12] sm:$0xff]
          %v516 = vld [vmem:[#allocation2 + $0x22] sm:$0xff]
          %v517 = vld [vmem:[#allocation2 + $0x32] sm:$0xff]
          %v518 = vld [vmem:[#allocation2 + $0x42] sm:$0xff]
          %v519 = vld [vmem:[#allocation2 + $0x52] sm:$0xff]
          %v520 = vld [vmem:[#allocation2 + $0x62] sm:$0xff]
          %v521 = vld [vmem:[#allocation2 + $0x72] sm:$0xff]
          %v522 = vpack.c.bf16 %v515, %v514
          %v523 = vpack.c.bf16 %v517, %v516
          %v524 = vpack.c.bf16 %v519, %v518
          %v525 = vpack.c.bf16 %v521, %v520
          %526 = vst [vmem:[#allocation4 + $0x10] sm:$0xff] %v522
          %527 = vst [vmem:[#allocation4 + $0x58] sm:$0xff] %v523
          %528 = vst [vmem:[#allocation4 + $0xa0] sm:$0xff] %v524
          %529 = vst [vmem:[#allocation4 + $0xe8] sm:$0xff] %v525
          %v530 = vld [vmem:[%s473] sm:$0xff]
          %v531 = vld [vmem:[%s473 + $0x10] sm:$0xff]
          %v532 = vld [vmem:[%s473 + $0x20] sm:$0xff]
          %v533 = vld [vmem:[%s473 + $0x30] sm:$0xff]
          %v534 = vld [vmem:[%s473 + $0x40] sm:$0xff]
          %v535 = vld [vmem:[%s473 + $0x50] sm:$0xff]
          %v536 = vld [vmem:[%s473 + $0x60] sm:$0xff]
          %v537 = vld [vmem:[%s473 + $0x70] sm:$0xff]
          %v538 = vpack.c.bf16 %v531, %v530
          %v539 = vpack.c.bf16 %v533, %v532
          %v540 = vpack.c.bf16 %v535, %v534
          %v541 = vpack.c.bf16 %v537, %v536
          %542 = vst [vmem:[#allocation4 + $0x18] sm:$0xff] %v538
          %543 = vst [vmem:[#allocation4 + $0x60] sm:$0xff] %v539
          %544 = vst [vmem:[#allocation4 + $0xa8] sm:$0xff] %v540
          %545 = vst [vmem:[#allocation4 + $0xf0] sm:$0xff] %v541
          %v546 = vld [vmem:[%s473 + $0x1] sm:$0xff]
          %v547 = vld [vmem:[%s473 + $0x11] sm:$0xff]
          %v548 = vld [vmem:[%s473 + $0x21] sm:$0xff]
          %v549 = vld [vmem:[%s473 + $0x31] sm:$0xff]
          %v550 = vld [vmem:[%s473 + $0x41] sm:$0xff]
          %v551 = vld [vmem:[%s473 + $0x51] sm:$0xff]
          %v552 = vld [vmem:[%s473 + $0x61] sm:$0xff]
          %v553 = vld [vmem:[%s473 + $0x71] sm:$0xff]
          %v554 = vpack.c.bf16 %v547, %v546
          %v555 = vpack.c.bf16 %v549, %v548
          %v556 = vpack.c.bf16 %v551, %v550
          %v557 = vpack.c.bf16 %v553, %v552
          %558 = vst [vmem:[#allocation4 + $0x20] sm:$0xff] %v554
          %559 = vst [vmem:[#allocation4 + $0x68] sm:$0xff] %v555
          %560 = vst [vmem:[#allocation4 + $0xb0] sm:$0xff] %v556
          %561 = vst [vmem:[#allocation4 + $0xf8] sm:$0xff] %v557
          %v562 = vld [vmem:[%s473 + $0x2] sm:$0xff]
          %v563 = vld [vmem:[%s473 + $0x12] sm:$0xff]
          %v564 = vld [vmem:[%s473 + $0x22] sm:$0xff]
          %v565 = vld [vmem:[%s473 + $0x32] sm:$0xff]
          %v566 = vld [vmem:[%s473 + $0x42] sm:$0xff]
          %v567 = vld [vmem:[%s473 + $0x52] sm:$0xff]
          %v568 = vld [vmem:[%s473 + $0x62] sm:$0xff]
          %v569 = vld [vmem:[%s473 + $0x72] sm:$0xff]
          %v570 = vpack.c.bf16 %v563, %v562
          %v571 = vpack.c.bf16 %v565, %v564
          %v572 = vpack.c.bf16 %v567, %v566
          %v573 = vpack.c.bf16 %v569, %v568
          %574 = vst [vmem:[#allocation4 + $0x28] sm:$0xff] %v570
          %575 = vst [vmem:[#allocation4 + $0x70] sm:$0xff] %v571
          %576 = vst [vmem:[#allocation4 + $0xb8] sm:$0xff] %v572
          %577 = vst [vmem:[#allocation4 + $0x100] sm:$0xff] %v573
          %s578 = scalar_lea.vmem [#allocation2], 32
          %v579 = vld [vmem:[%s578] sm:$0xff]
          %v580 = vld [vmem:[%s578 + $0x10] sm:$0xff]
          %v581 = vld [vmem:[%s578 + $0x20] sm:$0xff]
          %v582 = vld [vmem:[%s578 + $0x30] sm:$0xff]
          %v583 = vld [vmem:[%s578 + $0x40] sm:$0xff]
          %v584 = vld [vmem:[%s578 + $0x50] sm:$0xff]
          %v585 = vld [vmem:[%s578 + $0x60] sm:$0xff]
          %v586 = vld [vmem:[%s578 + $0x70] sm:$0xff]
          %v587 = vpack.c.bf16 %v580, %v579
          %v588 = vpack.c.bf16 %v582, %v581
          %v589 = vpack.c.bf16 %v584, %v583
          %v590 = vpack.c.bf16 %v586, %v585
          %591 = vst [vmem:[#allocation4 + $0x30] sm:$0xff] %v587
          %592 = vst [vmem:[#allocation4 + $0x78] sm:$0xff] %v588
          %593 = vst [vmem:[#allocation4 + $0xc0] sm:$0xff] %v589
          %594 = vst [vmem:[#allocation4 + $0x108] sm:$0xff] %v590
          %v595 = vld [vmem:[%s578 + $0x1] sm:$0xff]
          %v596 = vld [vmem:[%s578 + $0x11] sm:$0xff]
          %v597 = vld [vmem:[%s578 + $0x21] sm:$0xff]
          %v598 = vld [vmem:[%s578 + $0x31] sm:$0xff]
          %v599 = vld [vmem:[%s578 + $0x41] sm:$0xff]
          %v600 = vld [vmem:[%s578 + $0x51] sm:$0xff]
          %v601 = vld [vmem:[%s578 + $0x61] sm:$0xff]
          %v602 = vld [vmem:[%s578 + $0x71] sm:$0xff]
          %v603 = vpack.c.bf16 %v596, %v595
          %v604 = vpack.c.bf16 %v598, %v597
          %v605 = vpack.c.bf16 %v600, %v599
          %v606 = vpack.c.bf16 %v602, %v601
          %607 = vst [vmem:[#allocation4 + $0x38] sm:$0xff] %v603
          %608 = vst [vmem:[#allocation4 + $0x80] sm:$0xff] %v604
          %609 = vst [vmem:[#allocation4 + $0xc8] sm:$0xff] %v605
          %610 = vst [vmem:[#allocation4 + $0x110] sm:$0xff] %v606
          %v611 = vld [vmem:[%s578 + $0x2] sm:$0xff]
          %v612 = vld [vmem:[%s578 + $0x12] sm:$0xff]
          %v613 = vld [vmem:[%s578 + $0x22] sm:$0xff]
          %v614 = vld [vmem:[%s578 + $0x32] sm:$0xff]
          %v615 = vld [vmem:[%s578 + $0x42] sm:$0xff]
          %v616 = vld [vmem:[%s578 + $0x52] sm:$0xff]
          %v617 = vld [vmem:[%s578 + $0x62] sm:$0xff]
          %v618 = vld [vmem:[%s578 + $0x72] sm:$0xff]
          %v619 = vpack.c.bf16 %v612, %v611
          %v620 = vpack.c.bf16 %v614, %v613
          %v621 = vpack.c.bf16 %v616, %v615
          %v622 = vpack.c.bf16 %v618, %v617
          %623 = vst [vmem:[#allocation4 + $0x40] sm:$0xff] %v619
          %624 = vst [vmem:[#allocation4 + $0x88] sm:$0xff] %v620
          %625 = vst [vmem:[#allocation4 + $0xd0] sm:$0xff] %v621
          %626 = vst [vmem:[#allocation4 + $0x118] sm:$0xff] %v622
          %v627 = vld [vmem:[#allocation6] sm:$0xff]
          %v628 = vld [vmem:[#allocation6 + $0x8] sm:$0xff]
          %v629 = vld [vmem:[#allocation6 + $0x10] sm:$0xff]
          %v630 = vld [vmem:[#allocation6 + $0x18] sm:$0xff]
          %v631 = vld [vmem:[#allocation6 + $0x20] sm:$0xff]
          %v632 = vld [vmem:[#allocation6 + $0x28] sm:$0xff]
          %v633 = vld [vmem:[#allocation6 + $0x30] sm:$0xff]
          %v634 = vld [vmem:[#allocation6 + $0x38] sm:$0xff]
          %v635 = vld [vmem:[#allocation4] sm:$0xff]
          %v636 = vld [vmem:[#allocation4 + $0x8] sm:$0xff]
          %v637 = vld [vmem:[#allocation4 + $0x10] sm:$0xff]
          %v638 = vld [vmem:[#allocation4 + $0x18] sm:$0xff]
          %v639 = vld [vmem:[#allocation4 + $0x20] sm:$0xff]
          %v640 = vld [vmem:[#allocation4 + $0x28] sm:$0xff]
          %v641 = vld [vmem:[#allocation4 + $0x30] sm:$0xff]
          %v642 = vld [vmem:[#allocation4 + $0x38] sm:$0xff]
          %v643 = vld [vmem:[#allocation4 + $0x40] sm:$0xff]
          %v644 = vld [vmem:[#allocation4 + $0x48] sm:$0xff]
          %v645 = vld [vmem:[#allocation4 + $0x50] sm:$0xff]
          %v646 = vld [vmem:[#allocation4 + $0x58] sm:$0xff]
          %v647 = vld [vmem:[#allocation4 + $0x60] sm:$0xff]
          %v648 = vld [vmem:[#allocation4 + $0x68] sm:$0xff]
          %v649 = vld [vmem:[#allocation4 + $0x70] sm:$0xff]
          %v650 = vld [vmem:[#allocation4 + $0x78] sm:$0xff]
          %v651 = vld [vmem:[#allocation4 + $0x80] sm:$0xff]
          %v652 = vld [vmem:[#allocation4 + $0x88] sm:$0xff]
          %v653 = vld [vmem:[#allocation4 + $0x90] sm:$0xff]
          %v654 = vld [vmem:[#allocation4 + $0x98] sm:$0xff]
          %v655 = vld [vmem:[#allocation4 + $0xa0] sm:$0xff]
          %v656 = vld [vmem:[#allocation4 + $0xa8] sm:$0xff]
          %v657 = vld [vmem:[#allocation4 + $0xb0] sm:$0xff]
          %v658 = vld [vmem:[#allocation4 + $0xb8] sm:$0xff]
          %v659 = vld [vmem:[#allocation4 + $0xc0] sm:$0xff]
          %v660 = vld [vmem:[#allocation4 + $0xc8] sm:$0xff]
          %v661 = vld [vmem:[#allocation4 + $0xd0] sm:$0xff]
          %v662 = vld [vmem:[#allocation4 + $0xd8] sm:$0xff]
          %v663 = vld [vmem:[#allocation4 + $0xe0] sm:$0xff]
          %v664 = vld [vmem:[#allocation4 + $0xe8] sm:$0xff]
          %v665 = vld [vmem:[#allocation4 + $0xf0] sm:$0xff]
          %v666 = vld [vmem:[#allocation4 + $0xf8] sm:$0xff]
          %v667 = vld [vmem:[#allocation4 + $0x100] sm:$0xff]
          %v668 = vld [vmem:[#allocation4 + $0x108] sm:$0xff]
          %v669 = vld [vmem:[#allocation4 + $0x110] sm:$0xff]
          %v670 = vld [vmem:[#allocation4 + $0x118] sm:$0xff]
          %s671 = smul.u32 %s34, 144
          %s672 = smul.addr %s671, 4
          %s673 = scalar_lea.vmem [#allocation12], %s672
          %v674 = vld [vmem:[%s673] sm:$0xf]
          %v675 = vld [vmem:[%s673 + $0x4] sm:$0xf]
          %v676 = vld [vmem:[%s673 + $0x8] sm:$0xf]
          %v677 = vld [vmem:[%s673 + $0xc] sm:$0xf]
          %v678 = vld [vmem:[%s673 + $0x10] sm:$0xf]
          %v679 = vld [vmem:[%s673 + $0x14] sm:$0xf]
          %v680 = vld [vmem:[%s673 + $0x18] sm:$0xf]
          %v681 = vld [vmem:[%s673 + $0x1c] sm:$0xf]
          %v682 = vld [vmem:[%s673 + $0x20] sm:$0xf]
          %v683 = vld [vmem:[%s673 + $0x24] sm:$0xf]
          %v684 = vld [vmem:[%s673 + $0x28] sm:$0xf]
          %v685 = vld [vmem:[%s673 + $0x2c] sm:$0xf]
          %v686 = vld [vmem:[%s673 + $0x30] sm:$0xf]
          %v687 = vld [vmem:[%s673 + $0x34] sm:$0xf]
          %v688 = vld [vmem:[%s673 + $0x38] sm:$0xf]
          %v689 = vld [vmem:[%s673 + $0x3c] sm:$0xf]
          %v690 = vld [vmem:[%s673 + $0x40] sm:$0xf]
          %v691 = vld [vmem:[%s673 + $0x44] sm:$0xf]
          %v692 = vld [vmem:[%s673 + $0x48] sm:$0xf]
          %v693 = vld [vmem:[%s673 + $0x4c] sm:$0xf]
          %v694 = vld [vmem:[%s673 + $0x50] sm:$0xf]
          %v695 = vld [vmem:[%s673 + $0x54] sm:$0xf]
          %v696 = vld [vmem:[%s673 + $0x58] sm:$0xf]
          %v697 = vld [vmem:[%s673 + $0x5c] sm:$0xf]
          %v698 = vld [vmem:[%s673 + $0x60] sm:$0xf]
          %v699 = vld [vmem:[%s673 + $0x64] sm:$0xf]
          %v700 = vld [vmem:[%s673 + $0x68] sm:$0xf]
          %v701 = vld [vmem:[%s673 + $0x6c] sm:$0xf]
          %v702 = vld [vmem:[%s673 + $0x70] sm:$0xf]
          %v703 = vld [vmem:[%s673 + $0x74] sm:$0xf]
          %v704 = vld [vmem:[%s673 + $0x78] sm:$0xf]
          %v705 = vld [vmem:[%s673 + $0x7c] sm:$0xf]
          %v706 = vld [vmem:[%s673 + $0x80] sm:$0xf]
          %v707 = vld [vmem:[%s673 + $0x84] sm:$0xf]
          %v708 = vld [vmem:[%s673 + $0x88] sm:$0xf]
          %v709 = vld [vmem:[%s673 + $0x8c] sm:$0xf]
          %v710 = vld [vmem:[%s673 + $0x90] sm:$0xf]
          %v711 = vld [vmem:[%s673 + $0x94] sm:$0xf]
          %v712 = vld [vmem:[%s673 + $0x98] sm:$0xf]
          %v713 = vld [vmem:[%s673 + $0x9c] sm:$0xf]
          %v714 = vld [vmem:[%s673 + $0xa0] sm:$0xf]
          %v715 = vld [vmem:[%s673 + $0xa4] sm:$0xf]
          %v716 = vld [vmem:[%s673 + $0xa8] sm:$0xf]
          %v717 = vld [vmem:[%s673 + $0xac] sm:$0xf]
          %v718 = vld [vmem:[%s673 + $0xb0] sm:$0xf]
          %v719 = vld [vmem:[%s673 + $0xb4] sm:$0xf]
          %v720 = vld [vmem:[%s673 + $0xb8] sm:$0xf]
          %v721 = vld [vmem:[%s673 + $0xbc] sm:$0xf]
          %v722 = vld [vmem:[%s673 + $0xc0] sm:$0xf]
          %v723 = vld [vmem:[%s673 + $0xc4] sm:$0xf]
          %v724 = vld [vmem:[%s673 + $0xc8] sm:$0xf]
          %v725 = vld [vmem:[%s673 + $0xcc] sm:$0xf]
          %v726 = vld [vmem:[%s673 + $0xd0] sm:$0xf]
          %v727 = vld [vmem:[%s673 + $0xd4] sm:$0xf]
          %v728 = vld [vmem:[%s673 + $0xd8] sm:$0xf]
          %v729 = vld [vmem:[%s673 + $0xdc] sm:$0xf]
          %v730 = vld [vmem:[%s673 + $0xe0] sm:$0xf]
          %v731 = vld [vmem:[%s673 + $0xe4] sm:$0xf]
          %v732 = vld [vmem:[%s673 + $0xe8] sm:$0xf]
          %v733 = vld [vmem:[%s673 + $0xec] sm:$0xf]
          %v734 = vld [vmem:[%s673 + $0xf0] sm:$0xf]
          %v735 = vld [vmem:[%s673 + $0xf4] sm:$0xf]
          %v736 = vld [vmem:[%s673 + $0xf8] sm:$0xf]
          %v737 = vld [vmem:[%s673 + $0xfc] sm:$0xf]
          %v738 = vld [vmem:[%s673 + $0x100] sm:$0xf]
          %v739 = vld [vmem:[%s673 + $0x104] sm:$0xf]
          %v740 = vld [vmem:[%s673 + $0x108] sm:$0xf]
          %v741 = vld [vmem:[%s673 + $0x10c] sm:$0xf]
          %v742 = vld [vmem:[%s673 + $0x110] sm:$0xf]
          %v743 = vld [vmem:[%s673 + $0x114] sm:$0xf]
          %v744 = vld [vmem:[%s673 + $0x118] sm:$0xf]
          %v745 = vld [vmem:[%s673 + $0x11c] sm:$0xf]
          %v746 = vld [vmem:[%s673 + $0x120] sm:$0xf]
          %v747 = vld [vmem:[%s673 + $0x124] sm:$0xf]
          %v748 = vld [vmem:[%s673 + $0x128] sm:$0xf]
          %v749 = vld [vmem:[%s673 + $0x12c] sm:$0xf]
          %v750 = vld [vmem:[%s673 + $0x130] sm:$0xf]
          %v751 = vld [vmem:[%s673 + $0x134] sm:$0xf]
          %v752 = vld [vmem:[%s673 + $0x138] sm:$0xf]
          %v753 = vld [vmem:[%s673 + $0x13c] sm:$0xf]
          %v754 = vld [vmem:[%s673 + $0x140] sm:$0xf]
          %v755 = vld [vmem:[%s673 + $0x144] sm:$0xf]
          %v756 = vld [vmem:[%s673 + $0x148] sm:$0xf]
          %v757 = vld [vmem:[%s673 + $0x14c] sm:$0xf]
          %v758 = vld [vmem:[%s673 + $0x150] sm:$0xf]
          %v759 = vld [vmem:[%s673 + $0x154] sm:$0xf]
          %v760 = vld [vmem:[%s673 + $0x158] sm:$0xf]
          %v761 = vld [vmem:[%s673 + $0x15c] sm:$0xf]
          %v762 = vld [vmem:[%s673 + $0x160] sm:$0xf]
          %v763 = vld [vmem:[%s673 + $0x164] sm:$0xf]
          %v764 = vld [vmem:[%s673 + $0x168] sm:$0xf]
          %v765 = vld [vmem:[%s673 + $0x16c] sm:$0xf]
          %v766 = vld [vmem:[%s673 + $0x170] sm:$0xf]
          %v767 = vld [vmem:[%s673 + $0x174] sm:$0xf]
          %v768 = vld [vmem:[%s673 + $0x178] sm:$0xf]
          %v769 = vld [vmem:[%s673 + $0x17c] sm:$0xf]
          %v770 = vld [vmem:[%s673 + $0x180] sm:$0xf]
          %v771 = vld [vmem:[%s673 + $0x184] sm:$0xf]
          %v772 = vld [vmem:[%s673 + $0x188] sm:$0xf]
          %v773 = vld [vmem:[%s673 + $0x18c] sm:$0xf]
          %v774 = vld [vmem:[%s673 + $0x190] sm:$0xf]
          %v775 = vld [vmem:[%s673 + $0x194] sm:$0xf]
          %v776 = vld [vmem:[%s673 + $0x198] sm:$0xf]
          %v777 = vld [vmem:[%s673 + $0x19c] sm:$0xf]
          %v778 = vld [vmem:[%s673 + $0x1a0] sm:$0xf]
          %v779 = vld [vmem:[%s673 + $0x1a4] sm:$0xf]
          %v780 = vld [vmem:[%s673 + $0x1a8] sm:$0xf]
          %v781 = vld [vmem:[%s673 + $0x1ac] sm:$0xf]
          %v782 = vld [vmem:[%s673 + $0x1b0] sm:$0xf]
          %v783 = vld [vmem:[%s673 + $0x1b4] sm:$0xf]
          %v784 = vld [vmem:[%s673 + $0x1b8] sm:$0xf]
          %v785 = vld [vmem:[%s673 + $0x1bc] sm:$0xf]
          %v786 = vld [vmem:[%s673 + $0x1c0] sm:$0xf]
          %v787 = vld [vmem:[%s673 + $0x1c4] sm:$0xf]
          %v788 = vld [vmem:[%s673 + $0x1c8] sm:$0xf]
          %v789 = vld [vmem:[%s673 + $0x1cc] sm:$0xf]
          %v790 = vld [vmem:[%s673 + $0x1d0] sm:$0xf]
          %v791 = vld [vmem:[%s673 + $0x1d4] sm:$0xf]
          %v792 = vld [vmem:[%s673 + $0x1d8] sm:$0xf]
          %v793 = vld [vmem:[%s673 + $0x1dc] sm:$0xf]
          %v794 = vld [vmem:[%s673 + $0x1e0] sm:$0xf]
          %v795 = vld [vmem:[%s673 + $0x1e4] sm:$0xf]
          %v796 = vld [vmem:[%s673 + $0x1e8] sm:$0xf]
          %v797 = vld [vmem:[%s673 + $0x1ec] sm:$0xf]
          %v798 = vld [vmem:[%s673 + $0x1f0] sm:$0xf]
          %v799 = vld [vmem:[%s673 + $0x1f4] sm:$0xf]
          %v800 = vld [vmem:[%s673 + $0x1f8] sm:$0xf]
          %v801 = vld [vmem:[%s673 + $0x1fc] sm:$0xf]
          %v802 = vld [vmem:[%s673 + $0x200] sm:$0xf]
          %v803 = vld [vmem:[%s673 + $0x204] sm:$0xf]
          %v804 = vld [vmem:[%s673 + $0x208] sm:$0xf]
          %v805 = vld [vmem:[%s673 + $0x20c] sm:$0xf]
          %v806 = vld [vmem:[%s673 + $0x210] sm:$0xf]
          %v807 = vld [vmem:[%s673 + $0x214] sm:$0xf]
          %v808 = vld [vmem:[%s673 + $0x218] sm:$0xf]
          %v809 = vld [vmem:[%s673 + $0x21c] sm:$0xf]
          %v810 = vld [vmem:[%s673 + $0x220] sm:$0xf]
          %v811 = vld [vmem:[%s673 + $0x224] sm:$0xf]
          %v812 = vld [vmem:[%s673 + $0x228] sm:$0xf]
          %v813 = vld [vmem:[%s673 + $0x22c] sm:$0xf]
          %v814 = vld [vmem:[%s673 + $0x230] sm:$0xf]
          %v815 = vld [vmem:[%s673 + $0x234] sm:$0xf]
          %v816 = vld [vmem:[%s673 + $0x238] sm:$0xf]
          %v817 = vld [vmem:[%s673 + $0x23c] sm:$0xf]
          %v962 = vunpack.c.l.b16 %v674
          %v963 = vunpack.c.l.b16 %v675
          %v964 = vunpack.c.l.b16 %v676
          %v965 = vunpack.c.l.b16 %v677
          %v966 = vunpack.c.l.b16 %v678
          %v967 = vunpack.c.l.b16 %v679
          %v968 = vunpack.c.l.b16 %v680
          %v969 = vunpack.c.l.b16 %v681
          %v970 = vunpack.c.l.b16 %v682
          %v971 = vunpack.c.l.b16 %v683
          %v972 = vunpack.c.l.b16 %v684
          %v973 = vunpack.c.l.b16 %v685
          %v974 = vunpack.c.l.b16 %v686
          %v975 = vunpack.c.l.b16 %v687
          %v976 = vunpack.c.l.b16 %v688
          %v977 = vunpack.c.l.b16 %v689
          %v978 = vunpack.c.l.b16 %v690
          %v979 = vunpack.c.l.b16 %v691
          %v980 = vunpack.c.l.b16 %v692
          %v981 = vunpack.c.l.b16 %v693
          %v982 = vunpack.c.l.b16 %v694
          %v983 = vunpack.c.l.b16 %v695
          %v984 = vunpack.c.l.b16 %v696
          %v985 = vunpack.c.l.b16 %v697
          %v986 = vunpack.c.l.b16 %v698
          %v987 = vunpack.c.l.b16 %v699
          %v988 = vunpack.c.l.b16 %v700
          %v989 = vunpack.c.l.b16 %v701
          %v990 = vunpack.c.l.b16 %v702
          %v991 = vunpack.c.l.b16 %v703
          %v992 = vunpack.c.l.b16 %v704
          %v993 = vunpack.c.l.b16 %v705
          %v994 = vunpack.c.l.b16 %v706
          %v995 = vunpack.c.l.b16 %v707
          %v996 = vunpack.c.l.b16 %v708
          %v997 = vunpack.c.l.b16 %v709
          %v998 = vunpack.c.l.b16 %v710
          %v999 = vunpack.c.l.b16 %v711
          %v1000 = vunpack.c.l.b16 %v712
          %v1001 = vunpack.c.l.b16 %v713
          %v1002 = vunpack.c.l.b16 %v714
          %v1003 = vunpack.c.l.b16 %v715
          %v1004 = vunpack.c.l.b16 %v716
          %v1005 = vunpack.c.l.b16 %v717
          %v1006 = vunpack.c.l.b16 %v718
          %v1007 = vunpack.c.l.b16 %v719
          %v1008 = vunpack.c.l.b16 %v720
          %v1009 = vunpack.c.l.b16 %v721
          %v1010 = vunpack.c.l.b16 %v722
          %v1011 = vunpack.c.l.b16 %v723
          %v1012 = vunpack.c.l.b16 %v724
          %v1013 = vunpack.c.l.b16 %v725
          %v1014 = vunpack.c.l.b16 %v726
          %v1015 = vunpack.c.l.b16 %v727
          %v1016 = vunpack.c.l.b16 %v728
          %v1017 = vunpack.c.l.b16 %v729
          %v1018 = vunpack.c.l.b16 %v730
          %v1019 = vunpack.c.l.b16 %v731
          %v1020 = vunpack.c.l.b16 %v732
          %v1021 = vunpack.c.l.b16 %v733
          %v1022 = vunpack.c.l.b16 %v734
          %v1023 = vunpack.c.l.b16 %v735
          %v1024 = vunpack.c.l.b16 %v736
          %v1025 = vunpack.c.l.b16 %v737
          %v1026 = vunpack.c.l.b16 %v738
          %v1027 = vunpack.c.l.b16 %v739
          %v1028 = vunpack.c.l.b16 %v740
          %v1029 = vunpack.c.l.b16 %v741
          %v1030 = vunpack.c.l.b16 %v742
          %v1031 = vunpack.c.l.b16 %v743
          %v1032 = vunpack.c.l.b16 %v744
          %v1033 = vunpack.c.l.b16 %v745
          %v1034 = vunpack.c.l.b16 %v746
          %v1035 = vunpack.c.l.b16 %v747
          %v1036 = vunpack.c.l.b16 %v748
          %v1037 = vunpack.c.l.b16 %v749
          %v1038 = vunpack.c.l.b16 %v750
          %v1039 = vunpack.c.l.b16 %v751
          %v1040 = vunpack.c.l.b16 %v752
          %v1041 = vunpack.c.l.b16 %v753
          %v1042 = vunpack.c.l.b16 %v754
          %v1043 = vunpack.c.l.b16 %v755
          %v1044 = vunpack.c.l.b16 %v756
          %v1045 = vunpack.c.l.b16 %v757
          %v1046 = vunpack.c.l.b16 %v758
          %v1047 = vunpack.c.l.b16 %v759
          %v1048 = vunpack.c.l.b16 %v760
          %v1049 = vunpack.c.l.b16 %v761
          %v1050 = vunpack.c.l.b16 %v762
          %v1051 = vunpack.c.l.b16 %v763
          %v1052 = vunpack.c.l.b16 %v764
          %v1053 = vunpack.c.l.b16 %v765
          %v1054 = vunpack.c.l.b16 %v766
          %v1055 = vunpack.c.l.b16 %v767
          %v1056 = vunpack.c.l.b16 %v768
          %v1057 = vunpack.c.l.b16 %v769
          %v1058 = vunpack.c.l.b16 %v770
          %v1059 = vunpack.c.l.b16 %v771
          %v1060 = vunpack.c.l.b16 %v772
          %v1061 = vunpack.c.l.b16 %v773
          %v1062 = vunpack.c.l.b16 %v774
          %v1063 = vunpack.c.l.b16 %v775
          %v1064 = vunpack.c.l.b16 %v776
          %v1065 = vunpack.c.l.b16 %v777
          %v1066 = vunpack.c.l.b16 %v778
          %v1067 = vunpack.c.l.b16 %v779
          %v1068 = vunpack.c.l.b16 %v780
          %v1069 = vunpack.c.l.b16 %v781
          %v1070 = vunpack.c.l.b16 %v782
          %v1071 = vunpack.c.l.b16 %v783
          %v1072 = vunpack.c.l.b16 %v784
          %v1073 = vunpack.c.l.b16 %v785
          %v1074 = vunpack.c.l.b16 %v786
          %v1075 = vunpack.c.l.b16 %v787
          %v1076 = vunpack.c.l.b16 %v788
          %v1077 = vunpack.c.l.b16 %v789
          %v1078 = vunpack.c.l.b16 %v790
          %v1079 = vunpack.c.l.b16 %v791
          %v1080 = vunpack.c.l.b16 %v792
          %v1081 = vunpack.c.l.b16 %v793
          %v1082 = vunpack.c.l.b16 %v794
          %v1083 = vunpack.c.l.b16 %v795
          %v1084 = vunpack.c.l.b16 %v796
          %v1085 = vunpack.c.l.b16 %v797
          %v1086 = vunpack.c.l.b16 %v798
          %v1087 = vunpack.c.l.b16 %v799
          %v1088 = vunpack.c.l.b16 %v800
          %v1089 = vunpack.c.l.b16 %v801
          %v1090 = vunpack.c.l.b16 %v802
          %v1091 = vunpack.c.l.b16 %v803
          %v1092 = vunpack.c.l.b16 %v804
          %v1093 = vunpack.c.l.b16 %v805
          %v1094 = vunpack.c.l.b16 %v806
          %v1095 = vunpack.c.l.b16 %v807
          %v1096 = vunpack.c.l.b16 %v808
          %v1097 = vunpack.c.l.b16 %v809
          %v1098 = vunpack.c.l.b16 %v810
          %v1099 = vunpack.c.l.b16 %v811
          %v1100 = vunpack.c.l.b16 %v812
          %v1101 = vunpack.c.l.b16 %v813
          %v1102 = vunpack.c.l.b16 %v814
          %v1103 = vunpack.c.l.b16 %v815
          %v1104 = vunpack.c.l.b16 %v816
          %v1105 = vunpack.c.l.b16 %v817
          %v1106 = vpack.c.b16 %v963, %v962
          %v1107 = vpack.c.b16 %v965, %v964
          %v1108 = vpack.c.b16 %v967, %v966
          %v1109 = vpack.c.b16 %v969, %v968
          %v1110 = vpack.c.b16 %v971, %v970
          %v1111 = vpack.c.b16 %v973, %v972
          %v1112 = vpack.c.b16 %v975, %v974
          %v1113 = vpack.c.b16 %v977, %v976
          %v1114 = vpack.c.b16 %v979, %v978
          %v1115 = vpack.c.b16 %v981, %v980
          %v1116 = vpack.c.b16 %v983, %v982
          %v1117 = vpack.c.b16 %v985, %v984
          %v1118 = vpack.c.b16 %v987, %v986
          %v1119 = vpack.c.b16 %v989, %v988
          %v1120 = vpack.c.b16 %v991, %v990
          %v1121 = vpack.c.b16 %v993, %v992
          %v1122 = vpack.c.b16 %v995, %v994
          %v1123 = vpack.c.b16 %v997, %v996
          %v1124 = vpack.c.b16 %v999, %v998
          %v1125 = vpack.c.b16 %v1001, %v1000
          %v1126 = vpack.c.b16 %v1003, %v1002
          %v1127 = vpack.c.b16 %v1005, %v1004
          %v1128 = vpack.c.b16 %v1007, %v1006
          %v1129 = vpack.c.b16 %v1009, %v1008
          %v1130 = vpack.c.b16 %v1011, %v1010
          %v1131 = vpack.c.b16 %v1013, %v1012
          %v1132 = vpack.c.b16 %v1015, %v1014
          %v1133 = vpack.c.b16 %v1017, %v1016
          %v1134 = vpack.c.b16 %v1019, %v1018
          %v1135 = vpack.c.b16 %v1021, %v1020
          %v1136 = vpack.c.b16 %v1023, %v1022
          %v1137 = vpack.c.b16 %v1025, %v1024
          %v1138 = vpack.c.b16 %v1027, %v1026
          %v1139 = vpack.c.b16 %v1029, %v1028
          %v1140 = vpack.c.b16 %v1031, %v1030
          %v1141 = vpack.c.b16 %v1033, %v1032
          %v1142 = vpack.c.b16 %v1035, %v1034
          %v1143 = vpack.c.b16 %v1037, %v1036
          %v1144 = vpack.c.b16 %v1039, %v1038
          %v1145 = vpack.c.b16 %v1041, %v1040
          %v1146 = vpack.c.b16 %v1043, %v1042
          %v1147 = vpack.c.b16 %v1045, %v1044
          %v1148 = vpack.c.b16 %v1047, %v1046
          %v1149 = vpack.c.b16 %v1049, %v1048
          %v1150 = vpack.c.b16 %v1051, %v1050
          %v1151 = vpack.c.b16 %v1053, %v1052
          %v1152 = vpack.c.b16 %v1055, %v1054
          %v1153 = vpack.c.b16 %v1057, %v1056
          %v1154 = vpack.c.b16 %v1059, %v1058
          %v1155 = vpack.c.b16 %v1061, %v1060
          %v1156 = vpack.c.b16 %v1063, %v1062
          %v1157 = vpack.c.b16 %v1065, %v1064
          %v1158 = vpack.c.b16 %v1067, %v1066
          %v1159 = vpack.c.b16 %v1069, %v1068
          %v1160 = vpack.c.b16 %v1071, %v1070
          %v1161 = vpack.c.b16 %v1073, %v1072
          %v1162 = vpack.c.b16 %v1075, %v1074
          %v1163 = vpack.c.b16 %v1077, %v1076
          %v1164 = vpack.c.b16 %v1079, %v1078
          %v1165 = vpack.c.b16 %v1081, %v1080
          %v1166 = vpack.c.b16 %v1083, %v1082
          %v1167 = vpack.c.b16 %v1085, %v1084
          %v1168 = vpack.c.b16 %v1087, %v1086
          %v1169 = vpack.c.b16 %v1089, %v1088
          %v1170 = vpack.c.b16 %v1091, %v1090
          %v1171 = vpack.c.b16 %v1093, %v1092
          %v1172 = vpack.c.b16 %v1095, %v1094
          %v1173 = vpack.c.b16 %v1097, %v1096
          %v1174 = vpack.c.b16 %v1099, %v1098
          %v1175 = vpack.c.b16 %v1101, %v1100
          %v1176 = vpack.c.b16 %v1103, %v1102
          %v1177 = vpack.c.b16 %v1105, %v1104
          %1250 = vmatprep.subr.bf16.mxu0 0
          %1251 = vmatpush1.bf16.msra.mxu0 %v1106
          %1252 = vmatprep.subr.bf16.mxu0 0
          %1253 = vmatpush1.bf16.msra.mxu0 %v1107
          %1254 = vmatprep.subr.bf16.mxu0 0
          %1255 = vmatpush1.bf16.msra.mxu0 %v1108
          %1256 = vmatprep.subr.bf16.mxu0 0
          %1257 = vmatpush1.bf16.msra.mxu0 %v1109
          %1258 = vmatprep.subr.bf16.mxu0 0
          %1259 = vmatpush1.bf16.msra.mxu0 %v1110
          %1260 = vmatprep.subr.bf16.mxu0 0
          %1261 = vmatpush1.bf16.msra.mxu0 %v1111
          %1262 = vmatprep.subr.bf16.mxu0 0
          %1263 = vmatpush1.bf16.msra.mxu0 %v1112
          %1264 = vmatprep.subr.bf16.mxu0 0
          %1265 = vmatpush1.bf16.msra.mxu0 %v1113
          %1266 = vmatprep.subr.bf16.mxu0 0
          %1267 = vmatpush1.bf16.msra.mxu0 %v1114
          %1268 = vmatprep.subr.bf16.mxu0 0
          %1269 = vmatpush1.bf16.msra.mxu0 %v1115
          %1270 = vmatprep.subr.bf16.mxu0 0
          %1271 = vmatpush1.bf16.msra.mxu0 %v1116
          %1272 = vmatprep.subr.bf16.mxu0 0
          %1273 = vmatpush1.bf16.msra.mxu0 %v1117
          %1274 = vmatprep.subr.bf16.mxu0 0
          %1275 = vmatpush1.bf16.msra.mxu0 %v1118
          %1276 = vmatprep.subr.bf16.mxu0 0
          %1277 = vmatpush1.bf16.msra.mxu0 %v1119
          %1278 = vmatprep.subr.bf16.mxu0 0
          %1279 = vmatpush1.bf16.msra.mxu0 %v1120
          %1280 = vmatprep.subr.bf16.mxu0 0
          %1281 = vmatpush1.bf16.msra.mxu0 %v1121
          %1282 = vmatprep.mubr.bf16.mxu0 %v636
          %1283 = vmatmul.mubr.bf16.gmra.mrb[0].mxu0 %v635
          %v1284 = vpop.f32.mrb[0].mxu0
          %v1285 = vadd.f32 0.0, %v1284
          %v1286 = vpop.f32.mrb[0].mxu0
          %v1287 = vpop.f32.mrb[0].mxu0
          %v1288 = vadd.f32 0.0, %v1287
          %v1289 = vpop.f32.mrb[0].mxu0
          %1290 = vmatprep.mubr.bf16.mxu0 %v645
          %1291 = vmatmul.mubr.bf16.gmra.mrb[0].mxu0 %v644
          %v1292 = vpop.f32.mrb[0].mxu0
          %v1293 = vadd.f32 0.0, %v1292
          %v1294 = vpop.f32.mrb[0].mxu0
          %v1295 = vpop.f32.mrb[0].mxu0
          %v1296 = vadd.f32 0.0, %v1295
          %v1297 = vpop.f32.mrb[0].mxu0
          %1298 = vmatprep.mubr.bf16.mxu0 %v654
          %1299 = vmatmul.mubr.bf16.gmra.mrb[0].mxu0 %v653
          %v1300 = vpop.f32.mrb[0].mxu0
          %v1301 = vadd.f32 0.0, %v1300
          %v1302 = vpop.f32.mrb[0].mxu0
          %v1303 = vpop.f32.mrb[0].mxu0
          %v1304 = vadd.f32 0.0, %v1303
          %v1305 = vpop.f32.mrb[0].mxu0
          %1306 = vmatprep.mubr.bf16.mxu0 %v663
          %1307 = vmatmul.mubr.bf16.gmra.mrb[0].mxu0 %v662
          %v1308 = vpop.f32.mrb[0].mxu0
          %v1309 = vadd.f32 0.0, %v1308
          %v1310 = vpop.f32.mrb[0].mxu0
          %v1311 = vpop.f32.mrb[0].mxu0
          %v1312 = vadd.f32 0.0, %v1311
          %v1313 = vpop.f32.mrb[0].mxu0
          %1314 = vdwg.mxu0
          %1315 = vmatprep.subr.bf16.mxu0 0
          %1316 = vmatpush1.bf16.msra.mxu0 %v1122
          %1317 = vmatprep.subr.bf16.mxu0 0
          %1318 = vmatpush1.bf16.msra.mxu0 %v1123
          %1319 = vmatprep.subr.bf16.mxu0 0
          %1320 = vmatpush1.bf16.msra.mxu0 %v1124
          %1321 = vmatprep.subr.bf16.mxu0 0
          %1322 = vmatpush1.bf16.msra.mxu0 %v1125
          %1323 = vmatprep.subr.bf16.mxu0 0
          %1324 = vmatpush1.bf16.msra.mxu0 %v1126
          %1325 = vmatprep.subr.bf16.mxu0 0
          %1326 = vmatpush1.bf16.msra.mxu0 %v1127
          %1327 = vmatprep.subr.bf16.mxu0 0
          %1328 = vmatpush1.bf16.msra.mxu0 %v1128
          %1329 = vmatprep.subr.bf16.mxu0 0
          %1330 = vmatpush1.bf16.msra.mxu0 %v1129
          %1331 = vmatprep.subr.bf16.mxu0 0
          %1332 = vmatpush1.bf16.msra.mxu0 %v1130
          %1333 = vmatprep.subr.bf16.mxu0 0
          %1334 = vmatpush1.bf16.msra.mxu0 %v1131
          %1335 = vmatprep.subr.bf16.mxu0 0
          %1336 = vmatpush1.bf16.msra.mxu0 %v1132
          %1337 = vmatprep.subr.bf16.mxu0 0
          %1338 = vmatpush1.bf16.msra.mxu0 %v1133
          %1339 = vmatprep.subr.bf16.mxu0 0
          %1340 = vmatpush1.bf16.msra.mxu0 %v1134
          %1341 = vmatprep.subr.bf16.mxu0 0
          %1342 = vmatpush1.bf16.msra.mxu0 %v1135
          %1343 = vmatprep.subr.bf16.mxu0 0
          %1344 = vmatpush1.bf16.msra.mxu0 %v1136
          %1345 = vmatprep.subr.bf16.mxu0 0
          %1346 = vmatpush1.bf16.msra.mxu0 %v1137
          %1347 = vmatprep.mubr.bf16.mxu0 %v638
          %1348 = vmatmul.mubr.bf16.gmra.mrb[0].mxu0 %v637
          %v1349 = vpop.f32.mrb[0].mxu0
          %v1350 = vadd.f32 %v1285, %v1349
          %v1351 = vpop.f32.mrb[0].mxu0
          %v1352 = vpop.f32.mrb[0].mxu0
          %v1353 = vadd.f32 %v1288, %v1352
          %v1354 = vpop.f32.mrb[0].mxu0
          %1355 = vmatprep.mubr.bf16.mxu0 %v647
          %1356 = vmatmul.mubr.bf16.gmra.mrb[0].mxu0 %v646
          %v1357 = vpop.f32.mrb[0].mxu0
          %v1358 = vadd.f32 %v1293, %v1357
          %v1359 = vpop.f32.mrb[0].mxu0
          %v1360 = vpop.f32.mrb[0].mxu0
          %v1361 = vadd.f32 %v1296, %v1360
          %v1362 = vpop.f32.mrb[0].mxu0
          %1363 = vmatprep.mubr.bf16.mxu0 %v656
          %1364 = vmatmul.mubr.bf16.gmra.mrb[0].mxu0 %v655
          %v1365 = vpop.f32.mrb[0].mxu0
          %v1366 = vadd.f32 %v1301, %v1365
          %v1367 = vpop.f32.mrb[0].mxu0
          %v1368 = vpop.f32.mrb[0].mxu0
          %v1369 = vadd.f32 %v1304, %v1368
          %v1370 = vpop.f32.mrb[0].mxu0
          %1371 = vmatprep.mubr.bf16.mxu0 %v665
          %1372 = vmatmul.mubr.bf16.gmra.mrb[0].mxu0 %v664
          %v1373 = vpop.f32.mrb[0].mxu0
          %v1374 = vadd.f32 %v1309, %v1373
          %v1375 = vpop.f32.mrb[0].mxu0
          %v1376 = vpop.f32.mrb[0].mxu0
          %v1377 = vadd.f32 %v1312, %v1376
          %v1378 = vpop.f32.mrb[0].mxu0
          %1379 = vdwg.mxu0
          %1380 = vmatprep.subr.bf16.mxu0 0
          %1381 = vmatpush1.bf16.msra.mxu0 %v1138
          %1382 = vmatprep.subr.bf16.mxu0 0
          %1383 = vmatpush1.bf16.msra.mxu0 %v1139
          %1384 = vmatprep.subr.bf16.mxu0 0
          %1385 = vmatpush1.bf16.msra.mxu0 %v1140
          %1386 = vmatprep.subr.bf16.mxu0 0
          %1387 = vmatpush1.bf16.msra.mxu0 %v1141
          %1388 = vmatprep.subr.bf16.mxu0 0
          %1389 = vmatpush1.bf16.msra.mxu0 %v1142
          %1390 = vmatprep.subr.bf16.mxu0 0
          %1391 = vmatpush1.bf16.msra.mxu0 %v1143
          %1392 = vmatprep.subr.bf16.mxu0 0
          %1393 = vmatpush1.bf16.msra.mxu0 %v1144
          %1394 = vmatprep.subr.bf16.mxu0 0
          %1395 = vmatpush1.bf16.msra.mxu0 %v1145
          %1396 = vmatprep.subr.bf16.mxu0 0
          %1397 = vmatpush1.bf16.msra.mxu0 %v1146
          %1398 = vmatprep.subr.bf16.mxu0 0
          %1399 = vmatpush1.bf16.msra.mxu0 %v1147
          %1400 = vmatprep.subr.bf16.mxu0 0
          %1401 = vmatpush1.bf16.msra.mxu0 %v1148
          %1402 = vmatprep.subr.bf16.mxu0 0
          %1403 = vmatpush1.bf16.msra.mxu0 %v1149
          %1404 = vmatprep.subr.bf16.mxu0 0
          %1405 = vmatpush1.bf16.msra.mxu0 %v1150
          %1406 = vmatprep.subr.bf16.mxu0 0
          %1407 = vmatpush1.bf16.msra.mxu0 %v1151
          %1408 = vmatprep.subr.bf16.mxu0 0
          %1409 = vmatpush1.bf16.msra.mxu0 %v1152
          %1410 = vmatprep.subr.bf16.mxu0 0
          %1411 = vmatpush1.bf16.msra.mxu0 %v1153
          %1412 = vmatprep.mubr.bf16.mxu0 %v640
          %1413 = vmatmul.mubr.bf16.gmra.mrb[0].mxu0 %v639
          %v1414 = vpop.f32.mrb[0].mxu0
          %v1415 = vadd.f32 %v1350, %v1414
          %v1416 = vpop.f32.mrb[0].mxu0
          %v1417 = vpop.f32.mrb[0].mxu0
          %v1418 = vadd.f32 %v1353, %v1417
          %v1419 = vpop.f32.mrb[0].mxu0
          %1420 = vmatprep.mubr.bf16.mxu0 %v649
          %1421 = vmatmul.mubr.bf16.gmra.mrb[0].mxu0 %v648
          %v1422 = vpop.f32.mrb[0].mxu0
          %v1423 = vadd.f32 %v1358, %v1422
          %v1424 = vpop.f32.mrb[0].mxu0
          %v1425 = vpop.f32.mrb[0].mxu0
          %v1426 = vadd.f32 %v1361, %v1425
          %v1427 = vpop.f32.mrb[0].mxu0
          %1428 = vmatprep.mubr.bf16.mxu0 %v658
          %1429 = vmatmul.mubr.bf16.gmra.mrb[0].mxu0 %v657
          %v1430 = vpop.f32.mrb[0].mxu0
          %v1431 = vadd.f32 %v1366, %v1430
          %v1432 = vpop.f32.mrb[0].mxu0
          %v1433 = vpop.f32.mrb[0].mxu0
          %v1434 = vadd.f32 %v1369, %v1433
          %v1435 = vpop.f32.mrb[0].mxu0
          %1436 = vmatprep.mubr.bf16.mxu0 %v667
          %1437 = vmatmul.mubr.bf16.gmra.mrb[0].mxu0 %v666
          %v1438 = vpop.f32.mrb[0].mxu0
          %v1439 = vadd.f32 %v1374, %v1438
          %v1440 = vpop.f32.mrb[0].mxu0
          %v1441 = vpop.f32.mrb[0].mxu0
          %v1442 = vadd.f32 %v1377, %v1441
          %v1443 = vpop.f32.mrb[0].mxu0
          %1444 = vdwg.mxu0
          %1445 = vmatprep.subr.bf16.mxu0 0
          %1446 = vmatpush1.bf16.msra.mxu0 %v1154
          %1447 = vmatprep.subr.bf16.mxu0 0
          %1448 = vmatpush1.bf16.msra.mxu0 %v1155
          %1449 = vmatprep.subr.bf16.mxu0 0
          %1450 = vmatpush1.bf16.msra.mxu0 %v1156
          %1451 = vmatprep.subr.bf16.mxu0 0
          %1452 = vmatpush1.bf16.msra.mxu0 %v1157
          %1453 = vmatprep.subr.bf16.mxu0 0
          %1454 = vmatpush1.bf16.msra.mxu0 %v1158
          %1455 = vmatprep.subr.bf16.mxu0 0
          %1456 = vmatpush1.bf16.msra.mxu0 %v1159
          %1457 = vmatprep.subr.bf16.mxu0 0
          %1458 = vmatpush1.bf16.msra.mxu0 %v1160
          %1459 = vmatprep.subr.bf16.mxu0 0
          %1460 = vmatpush1.bf16.msra.mxu0 %v1161
          %1461 = vmatprep.subr.bf16.mxu0 0
          %1462 = vmatpush1.bf16.msra.mxu0 %v1162
          %1463 = vmatprep.subr.bf16.mxu0 0
          %1464 = vmatpush1.bf16.msra.mxu0 %v1163
          %1465 = vmatprep.subr.bf16.mxu0 0
          %1466 = vmatpush1.bf16.msra.mxu0 %v1164
          %1467 = vmatprep.subr.bf16.mxu0 0
          %1468 = vmatpush1.bf16.msra.mxu0 %v1165
          %1469 = vmatprep.subr.bf16.mxu0 0
          %1470 = vmatpush1.bf16.msra.mxu0 %v1166
          %1471 = vmatprep.subr.bf16.mxu0 0
          %1472 = vmatpush1.bf16.msra.mxu0 %v1167
          %1473 = vmatprep.subr.bf16.mxu0 0
          %1474 = vmatpush1.bf16.msra.mxu0 %v1168
          %1475 = vmatprep.subr.bf16.mxu0 0
          %1476 = vmatpush1.bf16.msra.mxu0 %v1169
          %1477 = vmatprep.mubr.bf16.mxu0 %v642
          %1478 = vmatmul.mubr.bf16.gmra.mrb[0].mxu0 %v641
          %v1479 = vpop.f32.mrb[0].mxu0
          %v1480 = vadd.f32 %v1415, %v1479
          %v1481 = vpop.f32.mrb[0].mxu0
          %v1482 = vpop.f32.mrb[0].mxu0
          %v1483 = vadd.f32 %v1418, %v1482
          %v1484 = vpop.f32.mrb[0].mxu0
          %1485 = vmatprep.mubr.bf16.mxu0 %v651
          %1486 = vmatmul.mubr.bf16.gmra.mrb[0].mxu0 %v650
          %v1487 = vpop.f32.mrb[0].mxu0
          %v1488 = vadd.f32 %v1423, %v1487
          %v1489 = vpop.f32.mrb[0].mxu0
          %v1490 = vpop.f32.mrb[0].mxu0
          %v1491 = vadd.f32 %v1426, %v1490
          %v1492 = vpop.f32.mrb[0].mxu0
          %1493 = vmatprep.mubr.bf16.mxu0 %v660
          %1494 = vmatmul.mubr.bf16.gmra.mrb[0].mxu0 %v659
          %v1495 = vpop.f32.mrb[0].mxu0
          %v1496 = vadd.f32 %v1431, %v1495
          %v1497 = vpop.f32.mrb[0].mxu0
          %v1498 = vpop.f32.mrb[0].mxu0
          %v1499 = vadd.f32 %v1434, %v1498
          %v1500 = vpop.f32.mrb[0].mxu0
          %1501 = vmatprep.mubr.bf16.mxu0 %v669
          %1502 = vmatmul.mubr.bf16.gmra.mrb[0].mxu0 %v668
          %v1503 = vpop.f32.mrb[0].mxu0
          %v1504 = vadd.f32 %v1439, %v1503
          %v1505 = vpop.f32.mrb[0].mxu0
          %v1506 = vpop.f32.mrb[0].mxu0
          %v1507 = vadd.f32 %v1442, %v1506
          %v1508 = vpop.f32.mrb[0].mxu0
          %1509 = vdwg.mxu0
          %1510 = vmatprep.subr.bf16.mxu0 0
          %1511 = vmatpush1.bf16.msra.mxu0 %v1170
          %1512 = vmatprep.subr.bf16.mxu0 0
          %1513 = vmatpush1.bf16.msra.mxu0 %v1171
          %1514 = vmatprep.subr.bf16.mxu0 0
          %1515 = vmatpush1.bf16.msra.mxu0 %v1172
          %1516 = vmatprep.subr.bf16.mxu0 0
          %1517 = vmatpush1.bf16.msra.mxu0 %v1173
          %1518 = vmatprep.subr.bf16.mxu0 0
          %1519 = vmatpush1.bf16.msra.mxu0 %v1174
          %1520 = vmatprep.subr.bf16.mxu0 0
          %1521 = vmatpush1.bf16.msra.mxu0 %v1175
          %1522 = vmatprep.subr.bf16.mxu0 0
          %1523 = vmatpush1.bf16.msra.mxu0 %v1176
          %1524 = vmatprep.subr.bf16.mxu0 0
          %1525 = vmatpush1.bf16.msra.mxu0 %v1177
          %1526 = vmatprep.subr.bf16.mxu0 0
          %1527 = vmatpush1.bf16.msra.mxu0 0
          %1528 = vmatprep.subr.bf16.mxu0 0
          %1529 = vmatpush1.bf16.msra.mxu0 0
          %1530 = vmatprep.subr.bf16.mxu0 0
          %1531 = vmatpush1.bf16.msra.mxu0 0
          %1532 = vmatprep.subr.bf16.mxu0 0
          %1533 = vmatpush1.bf16.msra.mxu0 0
          %1534 = vmatprep.subr.bf16.mxu0 0
          %1535 = vmatpush1.bf16.msra.mxu0 0
          %1536 = vmatprep.subr.bf16.mxu0 0
          %1537 = vmatpush1.bf16.msra.mxu0 0
          %1538 = vmatprep.subr.bf16.mxu0 0
          %1539 = vmatpush1.bf16.msra.mxu0 0
          %1540 = vmatprep.subr.bf16.mxu0 0
          %1541 = vmatpush1.bf16.msra.mxu0 0
          %1542 = vmatprep.mubr.bf16.mxu0 0
          %1543 = vmatmul.mubr.bf16.gmra.mrb[0].mxu0 %v643
          %v1544 = vpop.f32.mrb[0].mxu0
          %v1545 = vadd.f32 %v1480, %v1544
          %v1546 = vpop.f32.mrb[0].mxu0
          %v1547 = vpop.f32.mrb[0].mxu0
          %v1548 = vadd.f32 %v1483, %v1547
          %v1549 = vpop.f32.mrb[0].mxu0
          %1550 = vmatprep.mubr.bf16.mxu0 0
          %1551 = vmatmul.mubr.bf16.gmra.mrb[0].mxu0 %v652
          %v1552 = vpop.f32.mrb[0].mxu0
          %v1553 = vadd.f32 %v1488, %v1552
          %v1554 = vpop.f32.mrb[0].mxu0
          %v1555 = vpop.f32.mrb[0].mxu0
          %v1556 = vadd.f32 %v1491, %v1555
          %v1557 = vpop.f32.mrb[0].mxu0
          %1558 = vmatprep.mubr.bf16.mxu0 0
          %1559 = vmatmul.mubr.bf16.gmra.mrb[0].mxu0 %v661
          %v1560 = vpop.f32.mrb[0].mxu0
          %v1561 = vadd.f32 %v1496, %v1560
          %v1562 = vpop.f32.mrb[0].mxu0
          %v1563 = vpop.f32.mrb[0].mxu0
          %v1564 = vadd.f32 %v1499, %v1563
          %v1565 = vpop.f32.mrb[0].mxu0
          %1566 = vmatprep.mubr.bf16.mxu0 0
          %1567 = vmatmul.mubr.bf16.gmra.mrb[0].mxu0 %v670
          %v1568 = vpop.f32.mrb[0].mxu0
          %v1569 = vadd.f32 %v1504, %v1568
          %v1570 = vpop.f32.mrb[0].mxu0
          %v1571 = vpop.f32.mrb[0].mxu0
          %v1572 = vadd.f32 %v1507, %v1571
          %v1573 = vpop.f32.mrb[0].mxu0
          %1574 = vdwg.mxu0
          %v1575 = vadd.f32 %v627, %v1545
          %v1576 = vadd.f32 %v628, %v1548
          %v1577 = vadd.f32 %v629, %v1553
          %v1578 = vadd.f32 %v630, %v1556
          %v1579 = vadd.f32 %v631, %v1561
          %v1580 = vadd.f32 %v632, %v1564
          %v1581 = vadd.f32 %v633, %v1569
          %v1582 = vadd.f32 %v634, %v1572
          %1583 = vst [vmem:[#allocation6] sm:$0xff] %v1575
          %1584 = vst [vmem:[#allocation6 + $0x8] sm:$0xff] %v1576
          %1585 = vst [vmem:[#allocation6 + $0x10] sm:$0xff] %v1577
          %1586 = vst [vmem:[#allocation6 + $0x18] sm:$0xff] %v1578
          %1587 = vst [vmem:[#allocation6 + $0x20] sm:$0xff] %v1579
          %1588 = vst [vmem:[#allocation6 + $0x28] sm:$0xff] %v1580
          %1589 = vst [vmem:[#allocation6 + $0x30] sm:$0xff] %v1581
          %1590 = vst [vmem:[#allocation6 + $0x38] sm:$0xff] %v1582
          %1591 = vst [vmem:[#allocation3] sm:$0xff] 0.0
          %1592 = vst [vmem:[#allocation3 + $0x8] sm:$0x3] 0.0
          %1593 = vst [vmem:[#allocation3 + $0x10] sm:$0xff] 0.0
          %1594 = vst [vmem:[#allocation3 + $0x18] sm:$0x3] 0.0
          %1595 = vst [vmem:[#allocation3 + $0x20] sm:$0xff] 0.0
          %1596 = vst [vmem:[#allocation3 + $0x28] sm:$0x3] 0.0
          %1597 = vst [vmem:[#allocation3 + $0x30] sm:$0xff] 0.0
          %1598 = vst [vmem:[#allocation3 + $0x38] sm:$0x3] 0.0
          %1599 = vst [vmem:[#allocation3 + $0x40] sm:$0xff] 0.0
          %1600 = vst [vmem:[#allocation3 + $0x48] sm:$0x3] 0.0
          %1601 = vst [vmem:[#allocation3 + $0x50] sm:$0xff] 0.0
          %1602 = vst [vmem:[#allocation3 + $0x58] sm:$0x3] 0.0
          %1603 = vst [vmem:[#allocation3 + $0x60] sm:$0xff] 0.0
          %1604 = vst [vmem:[#allocation3 + $0x68] sm:$0x3] 0.0
          %1605 = vst [vmem:[#allocation3 + $0x70] sm:$0xff] 0.0
          %1606 = vst [vmem:[#allocation3 + $0x78] sm:$0x3] 0.0
          %1607 = vst [vmem:[#allocation3 + $0x80] sm:$0xff] 0.0
          %1608 = vst [vmem:[#allocation3 + $0x88] sm:$0x3] 0.0
          %1609 = vst [vmem:[#allocation3 + $0x90] sm:$0xff] 0.0
          %1610 = vst [vmem:[#allocation3 + $0x98] sm:$0x3] 0.0
          %v1611 = vld [vmem:[%s362] sm:$0xf]
          %v1612 = vld [vmem:[%s362 + $0x4] sm:$0xf]
          %v1613 = vld [vmem:[%s362 + $0x8] sm:$0xf]
          %v1614 = vld [vmem:[%s362 + $0xc] sm:$0xf]
          %v1615 = vld [vmem:[%s362 + $0x10] sm:$0xf]
          %v1616 = vld [vmem:[%s362 + $0x14] sm:$0xf]
          %v1617 = vld [vmem:[%s362 + $0x18] sm:$0xf]
          %v1618 = vld [vmem:[%s362 + $0x1c] sm:$0xf]
          %v1619 = vunpack.c.l.bf16 %v1611
          %v1620 = vunpack.c.l.bf16 %v1612
          %v1621 = vunpack.c.l.bf16 %v1613
          %v1622 = vunpack.c.l.bf16 %v1614
          %v1623 = vunpack.c.l.bf16 %v1615
          %v1624 = vunpack.c.l.bf16 %v1616
          %v1625 = vunpack.c.l.bf16 %v1617
          %v1626 = vunpack.c.l.bf16 %v1618
          %s1627 = scalar_lea.vmem [#allocation3], 16
          %1628 = vst [vmem:[%s1627 + $0x1] sm:$0xff] %v1619
          %1629 = vst [vmem:[%s1627 + $0x11] sm:$0xff] %v1620
          %1630 = vst [vmem:[%s1627 + $0x21] sm:$0xff] %v1621
          %1631 = vst [vmem:[%s1627 + $0x31] sm:$0xff] %v1622
          %1632 = vst [vmem:[%s1627 + $0x41] sm:$0xff] %v1623
          %1633 = vst [vmem:[%s1627 + $0x51] sm:$0xff] %v1624
          %1634 = vst [vmem:[%s1627 + $0x61] sm:$0xff] %v1625
          %1635 = vst [vmem:[%s1627 + $0x71] sm:$0xff] %v1626
          %v1636 = vld [vmem:[#allocation3] sm:$0xff]
          %v1637 = vld [vmem:[#allocation3 + $0x10] sm:$0xff]
          %v1638 = vld [vmem:[#allocation3 + $0x20] sm:$0xff]
          %v1639 = vld [vmem:[#allocation3 + $0x30] sm:$0xff]
          %v1640 = vld [vmem:[#allocation3 + $0x40] sm:$0xff]
          %v1641 = vld [vmem:[#allocation3 + $0x50] sm:$0xff]
          %v1642 = vld [vmem:[#allocation3 + $0x60] sm:$0xff]
          %v1643 = vld [vmem:[#allocation3 + $0x70] sm:$0xff]
          %v1644 = vpack.c.bf16 %v1637, %v1636
          %v1645 = vpack.c.bf16 %v1639, %v1638
          %v1646 = vpack.c.bf16 %v1641, %v1640
          %v1647 = vpack.c.bf16 %v1643, %v1642
          %1648 = vst [vmem:[#allocation5] sm:$0xff] %v1644
          %1649 = vst [vmem:[#allocation5 + $0x48] sm:$0xff] %v1645
          %1650 = vst [vmem:[#allocation5 + $0x90] sm:$0xff] %v1646
          %1651 = vst [vmem:[#allocation5 + $0xd8] sm:$0xff] %v1647
          %v1652 = vld [vmem:[#allocation3 + $0x1] sm:$0xff]
          %v1653 = vld [vmem:[#allocation3 + $0x11] sm:$0xff]
          %v1654 = vld [vmem:[#allocation3 + $0x21] sm:$0xff]
          %v1655 = vld [vmem:[#allocation3 + $0x31] sm:$0xff]
          %v1656 = vld [vmem:[#allocation3 + $0x41] sm:$0xff]
          %v1657 = vld [vmem:[#allocation3 + $0x51] sm:$0xff]
          %v1658 = vld [vmem:[#allocation3 + $0x61] sm:$0xff]
          %v1659 = vld [vmem:[#allocation3 + $0x71] sm:$0xff]
          %v1660 = vpack.c.bf16 %v1653, %v1652
          %v1661 = vpack.c.bf16 %v1655, %v1654
          %v1662 = vpack.c.bf16 %v1657, %v1656
          %v1663 = vpack.c.bf16 %v1659, %v1658
          %1664 = vst [vmem:[#allocation5 + $0x8] sm:$0xff] %v1660
          %1665 = vst [vmem:[#allocation5 + $0x50] sm:$0xff] %v1661
          %1666 = vst [vmem:[#allocation5 + $0x98] sm:$0xff] %v1662
          %1667 = vst [vmem:[#allocation5 + $0xe0] sm:$0xff] %v1663
          %v1668 = vld [vmem:[#allocation3 + $0x2] sm:$0xff]
          %v1669 = vld [vmem:[#allocation3 + $0x12] sm:$0xff]
          %v1670 = vld [vmem:[#allocation3 + $0x22] sm:$0xff]
          %v1671 = vld [vmem:[#allocation3 + $0x32] sm:$0xff]
          %v1672 = vld [vmem:[#allocation3 + $0x42] sm:$0xff]
          %v1673 = vld [vmem:[#allocation3 + $0x52] sm:$0xff]
          %v1674 = vld [vmem:[#allocation3 + $0x62] sm:$0xff]
          %v1675 = vld [vmem:[#allocation3 + $0x72] sm:$0xff]
          %v1676 = vpack.c.bf16 %v1669, %v1668
          %v1677 = vpack.c.bf16 %v1671, %v1670
          %v1678 = vpack.c.bf16 %v1673, %v1672
          %v1679 = vpack.c.bf16 %v1675, %v1674
          %1680 = vst [vmem:[#allocation5 + $0x10] sm:$0xff] %v1676
          %1681 = vst [vmem:[#allocation5 + $0x58] sm:$0xff] %v1677
          %1682 = vst [vmem:[#allocation5 + $0xa0] sm:$0xff] %v1678
          %1683 = vst [vmem:[#allocation5 + $0xe8] sm:$0xff] %v1679
          %v1684 = vld [vmem:[%s1627] sm:$0xff]
          %v1685 = vld [vmem:[%s1627 + $0x10] sm:$0xff]
          %v1686 = vld [vmem:[%s1627 + $0x20] sm:$0xff]
          %v1687 = vld [vmem:[%s1627 + $0x30] sm:$0xff]
          %v1688 = vld [vmem:[%s1627 + $0x40] sm:$0xff]
          %v1689 = vld [vmem:[%s1627 + $0x50] sm:$0xff]
          %v1690 = vld [vmem:[%s1627 + $0x60] sm:$0xff]
          %v1691 = vld [vmem:[%s1627 + $0x70] sm:$0xff]
          %v1692 = vpack.c.bf16 %v1685, %v1684
          %v1693 = vpack.c.bf16 %v1687, %v1686
          %v1694 = vpack.c.bf16 %v1689, %v1688
          %v1695 = vpack.c.bf16 %v1691, %v1690
          %1696 = vst [vmem:[#allocation5 + $0x18] sm:$0xff] %v1692
          %1697 = vst [vmem:[#allocation5 + $0x60] sm:$0xff] %v1693
          %1698 = vst [vmem:[#allocation5 + $0xa8] sm:$0xff] %v1694
          %1699 = vst [vmem:[#allocation5 + $0xf0] sm:$0xff] %v1695
          %v1700 = vld [vmem:[%s1627 + $0x1] sm:$0xff]
          %v1701 = vld [vmem:[%s1627 + $0x11] sm:$0xff]
          %v1702 = vld [vmem:[%s1627 + $0x21] sm:$0xff]
          %v1703 = vld [vmem:[%s1627 + $0x31] sm:$0xff]
          %v1704 = vld [vmem:[%s1627 + $0x41] sm:$0xff]
          %v1705 = vld [vmem:[%s1627 + $0x51] sm:$0xff]
          %v1706 = vld [vmem:[%s1627 + $0x61] sm:$0xff]
          %v1707 = vld [vmem:[%s1627 + $0x71] sm:$0xff]
          %v1708 = vpack.c.bf16 %v1701, %v1700
          %v1709 = vpack.c.bf16 %v1703, %v1702
          %v1710 = vpack.c.bf16 %v1705, %v1704
          %v1711 = vpack.c.bf16 %v1707, %v1706
          %1712 = vst [vmem:[#allocation5 + $0x20] sm:$0xff] %v1708
          %1713 = vst [vmem:[#allocation5 + $0x68] sm:$0xff] %v1709
          %1714 = vst [vmem:[#allocation5 + $0xb0] sm:$0xff] %v1710
          %1715 = vst [vmem:[#allocation5 + $0xf8] sm:$0xff] %v1711
          %v1716 = vld [vmem:[%s1627 + $0x2] sm:$0xff]
          %v1717 = vld [vmem:[%s1627 + $0x12] sm:$0xff]
          %v1718 = vld [vmem:[%s1627 + $0x22] sm:$0xff]
          %v1719 = vld [vmem:[%s1627 + $0x32] sm:$0xff]
          %v1720 = vld [vmem:[%s1627 + $0x42] sm:$0xff]
          %v1721 = vld [vmem:[%s1627 + $0x52] sm:$0xff]
          %v1722 = vld [vmem:[%s1627 + $0x62] sm:$0xff]
          %v1723 = vld [vmem:[%s1627 + $0x72] sm:$0xff]
          %v1724 = vpack.c.bf16 %v1717, %v1716
          %v1725 = vpack.c.bf16 %v1719, %v1718
          %v1726 = vpack.c.bf16 %v1721, %v1720
          %v1727 = vpack.c.bf16 %v1723, %v1722
          %1728 = vst [vmem:[#allocation5 + $0x28] sm:$0xff] %v1724
          %1729 = vst [vmem:[#allocation5 + $0x70] sm:$0xff] %v1725
          %1730 = vst [vmem:[#allocation5 + $0xb8] sm:$0xff] %v1726
          %1731 = vst [vmem:[#allocation5 + $0x100] sm:$0xff] %v1727
          %s1732 = scalar_lea.vmem [#allocation3], 32
          %v1733 = vld [vmem:[%s1732] sm:$0xff]
          %v1734 = vld [vmem:[%s1732 + $0x10] sm:$0xff]
          %v1735 = vld [vmem:[%s1732 + $0x20] sm:$0xff]
          %v1736 = vld [vmem:[%s1732 + $0x30] sm:$0xff]
          %v1737 = vld [vmem:[%s1732 + $0x40] sm:$0xff]
          %v1738 = vld [vmem:[%s1732 + $0x50] sm:$0xff]
          %v1739 = vld [vmem:[%s1732 + $0x60] sm:$0xff]
          %v1740 = vld [vmem:[%s1732 + $0x70] sm:$0xff]
          %v1741 = vpack.c.bf16 %v1734, %v1733
          %v1742 = vpack.c.bf16 %v1736, %v1735
          %v1743 = vpack.c.bf16 %v1738, %v1737
          %v1744 = vpack.c.bf16 %v1740, %v1739
          %1745 = vst [vmem:[#allocation5 + $0x30] sm:$0xff] %v1741
          %1746 = vst [vmem:[#allocation5 + $0x78] sm:$0xff] %v1742
          %1747 = vst [vmem:[#allocation5 + $0xc0] sm:$0xff] %v1743
          %1748 = vst [vmem:[#allocation5 + $0x108] sm:$0xff] %v1744
          %v1749 = vld [vmem:[%s1732 + $0x1] sm:$0xff]
          %v1750 = vld [vmem:[%s1732 + $0x11] sm:$0xff]
          %v1751 = vld [vmem:[%s1732 + $0x21] sm:$0xff]
          %v1752 = vld [vmem:[%s1732 + $0x31] sm:$0xff]
          %v1753 = vld [vmem:[%s1732 + $0x41] sm:$0xff]
          %v1754 = vld [vmem:[%s1732 + $0x51] sm:$0xff]
          %v1755 = vld [vmem:[%s1732 + $0x61] sm:$0xff]
          %v1756 = vld [vmem:[%s1732 + $0x71] sm:$0xff]
          %v1757 = vpack.c.bf16 %v1750, %v1749
          %v1758 = vpack.c.bf16 %v1752, %v1751
          %v1759 = vpack.c.bf16 %v1754, %v1753
          %v1760 = vpack.c.bf16 %v1756, %v1755
          %1761 = vst [vmem:[#allocation5 + $0x38] sm:$0xff] %v1757
          %1762 = vst [vmem:[#allocation5 + $0x80] sm:$0xff] %v1758
          %1763 = vst [vmem:[#allocation5 + $0xc8] sm:$0xff] %v1759
          %1764 = vst [vmem:[#allocation5 + $0x110] sm:$0xff] %v1760
          %v1765 = vld [vmem:[%s1732 + $0x2] sm:$0xff]
          %v1766 = vld [vmem:[%s1732 + $0x12] sm:$0xff]
          %v1767 = vld [vmem:[%s1732 + $0x22] sm:$0xff]
          %v1768 = vld [vmem:[%s1732 + $0x32] sm:$0xff]
          %v1769 = vld [vmem:[%s1732 + $0x42] sm:$0xff]
          %v1770 = vld [vmem:[%s1732 + $0x52] sm:$0xff]
          %v1771 = vld [vmem:[%s1732 + $0x62] sm:$0xff]
          %v1772 = vld [vmem:[%s1732 + $0x72] sm:$0xff]
          %v1773 = vpack.c.bf16 %v1766, %v1765
          %v1774 = vpack.c.bf16 %v1768, %v1767
          %v1775 = vpack.c.bf16 %v1770, %v1769
          %v1776 = vpack.c.bf16 %v1772, %v1771
          %1777 = vst [vmem:[#allocation5 + $0x40] sm:$0xff] %v1773
          %1778 = vst [vmem:[#allocation5 + $0x88] sm:$0xff] %v1774
          %1779 = vst [vmem:[#allocation5 + $0xd0] sm:$0xff] %v1775
          %1780 = vst [vmem:[#allocation5 + $0x118] sm:$0xff] %v1776
          %v1781 = vld [vmem:[#allocation6] sm:$0xff]
          %v1782 = vld [vmem:[#allocation6 + $0x8] sm:$0xff]
          %v1783 = vld [vmem:[#allocation6 + $0x10] sm:$0xff]
          %v1784 = vld [vmem:[#allocation6 + $0x18] sm:$0xff]
          %v1785 = vld [vmem:[#allocation6 + $0x20] sm:$0xff]
          %v1786 = vld [vmem:[#allocation6 + $0x28] sm:$0xff]
          %v1787 = vld [vmem:[#allocation6 + $0x30] sm:$0xff]
          %v1788 = vld [vmem:[#allocation6 + $0x38] sm:$0xff]
          %v1789 = vld [vmem:[#allocation5] sm:$0xff]
          %v1790 = vld [vmem:[#allocation5 + $0x8] sm:$0xff]
          %v1791 = vld [vmem:[#allocation5 + $0x10] sm:$0xff]
          %v1792 = vld [vmem:[#allocation5 + $0x18] sm:$0xff]
          %v1793 = vld [vmem:[#allocation5 + $0x20] sm:$0xff]
          %v1794 = vld [vmem:[#allocation5 + $0x28] sm:$0xff]
          %v1795 = vld [vmem:[#allocation5 + $0x30] sm:$0xff]
          %v1796 = vld [vmem:[#allocation5 + $0x38] sm:$0xff]
          %v1797 = vld [vmem:[#allocation5 + $0x40] sm:$0xff]
          %v1798 = vld [vmem:[#allocation5 + $0x48] sm:$0xff]
          %v1799 = vld [vmem:[#allocation5 + $0x50] sm:$0xff]
          %v1800 = vld [vmem:[#allocation5 + $0x58] sm:$0xff]
          %v1801 = vld [vmem:[#allocation5 + $0x60] sm:$0xff]
          %v1802 = vld [vmem:[#allocation5 + $0x68] sm:$0xff]
          %v1803 = vld [vmem:[#allocation5 + $0x70] sm:$0xff]
          %v1804 = vld [vmem:[#allocation5 + $0x78] sm:$0xff]
          %v1805 = vld [vmem:[#allocation5 + $0x80] sm:$0xff]
          %v1806 = vld [vmem:[#allocation5 + $0x88] sm:$0xff]
          %v1807 = vld [vmem:[#allocation5 + $0x90] sm:$0xff]
          %v1808 = vld [vmem:[#allocation5 + $0x98] sm:$0xff]
          %v1809 = vld [vmem:[#allocation5 + $0xa0] sm:$0xff]
          %v1810 = vld [vmem:[#allocation5 + $0xa8] sm:$0xff]
          %v1811 = vld [vmem:[#allocation5 + $0xb0] sm:$0xff]
          %v1812 = vld [vmem:[#allocation5 + $0xb8] sm:$0xff]
          %v1813 = vld [vmem:[#allocation5 + $0xc0] sm:$0xff]
          %v1814 = vld [vmem:[#allocation5 + $0xc8] sm:$0xff]
          %v1815 = vld [vmem:[#allocation5 + $0xd0] sm:$0xff]
          %v1816 = vld [vmem:[#allocation5 + $0xd8] sm:$0xff]
          %v1817 = vld [vmem:[#allocation5 + $0xe0] sm:$0xff]
          %v1818 = vld [vmem:[#allocation5 + $0xe8] sm:$0xff]
          %v1819 = vld [vmem:[#allocation5 + $0xf0] sm:$0xff]
          %v1820 = vld [vmem:[#allocation5 + $0xf8] sm:$0xff]
          %v1821 = vld [vmem:[#allocation5 + $0x100] sm:$0xff]
          %v1822 = vld [vmem:[#allocation5 + $0x108] sm:$0xff]
          %v1823 = vld [vmem:[#allocation5 + $0x110] sm:$0xff]
          %v1824 = vld [vmem:[#allocation5 + $0x118] sm:$0xff]
          %s1825 = smul.addr %s671, 4
          %s1826 = scalar_lea.vmem [#allocation13], %s1825
          %v1827 = vld [vmem:[%s1826] sm:$0xf]
          %v1828 = vld [vmem:[%s1826 + $0x4] sm:$0xf]
          %v1829 = vld [vmem:[%s1826 + $0x8] sm:$0xf]
          %v1830 = vld [vmem:[%s1826 + $0xc] sm:$0xf]
          %v1831 = vld [vmem:[%s1826 + $0x10] sm:$0xf]
          %v1832 = vld [vmem:[%s1826 + $0x14] sm:$0xf]
          %v1833 = vld [vmem:[%s1826 + $0x18] sm:$0xf]
          %v1834 = vld [vmem:[%s1826 + $0x1c] sm:$0xf]
          %v1835 = vld [vmem:[%s1826 + $0x20] sm:$0xf]
          %v1836 = vld [vmem:[%s1826 + $0x24] sm:$0xf]
          %v1837 = vld [vmem:[%s1826 + $0x28] sm:$0xf]
          %v1838 = vld [vmem:[%s1826 + $0x2c] sm:$0xf]
          %v1839 = vld [vmem:[%s1826 + $0x30] sm:$0xf]
          %v1840 = vld [vmem:[%s1826 + $0x34] sm:$0xf]
          %v1841 = vld [vmem:[%s1826 + $0x38] sm:$0xf]
          %v1842 = vld [vmem:[%s1826 + $0x3c] sm:$0xf]
          %v1843 = vld [vmem:[%s1826 + $0x40] sm:$0xf]
          %v1844 = vld [vmem:[%s1826 + $0x44] sm:$0xf]
          %v1845 = vld [vmem:[%s1826 + $0x48] sm:$0xf]
          %v1846 = vld [vmem:[%s1826 + $0x4c] sm:$0xf]
          %v1847 = vld [vmem:[%s1826 + $0x50] sm:$0xf]
          %v1848 = vld [vmem:[%s1826 + $0x54] sm:$0xf]
          %v1849 = vld [vmem:[%s1826 + $0x58] sm:$0xf]
          %v1850 = vld [vmem:[%s1826 + $0x5c] sm:$0xf]
          %v1851 = vld [vmem:[%s1826 + $0x60] sm:$0xf]
          %v1852 = vld [vmem:[%s1826 + $0x64] sm:$0xf]
          %v1853 = vld [vmem:[%s1826 + $0x68] sm:$0xf]
          %v1854 = vld [vmem:[%s1826 + $0x6c] sm:$0xf]
          %v1855 = vld [vmem:[%s1826 + $0x70] sm:$0xf]
          %v1856 = vld [vmem:[%s1826 + $0x74] sm:$0xf]
          %v1857 = vld [vmem:[%s1826 + $0x78] sm:$0xf]
          %v1858 = vld [vmem:[%s1826 + $0x7c] sm:$0xf]
          %v1859 = vld [vmem:[%s1826 + $0x80] sm:$0xf]
          %v1860 = vld [vmem:[%s1826 + $0x84] sm:$0xf]
          %v1861 = vld [vmem:[%s1826 + $0x88] sm:$0xf]
          %v1862 = vld [vmem:[%s1826 + $0x8c] sm:$0xf]
          %v1863 = vld [vmem:[%s1826 + $0x90] sm:$0xf]
          %v1864 = vld [vmem:[%s1826 + $0x94] sm:$0xf]
          %v1865 = vld [vmem:[%s1826 + $0x98] sm:$0xf]
          %v1866 = vld [vmem:[%s1826 + $0x9c] sm:$0xf]
          %v1867 = vld [vmem:[%s1826 + $0xa0] sm:$0xf]
          %v1868 = vld [vmem:[%s1826 + $0xa4] sm:$0xf]
          %v1869 = vld [vmem:[%s1826 + $0xa8] sm:$0xf]
          %v1870 = vld [vmem:[%s1826 + $0xac] sm:$0xf]
          %v1871 = vld [vmem:[%s1826 + $0xb0] sm:$0xf]
          %v1872 = vld [vmem:[%s1826 + $0xb4] sm:$0xf]
          %v1873 = vld [vmem:[%s1826 + $0xb8] sm:$0xf]
          %v1874 = vld [vmem:[%s1826 + $0xbc] sm:$0xf]
          %v1875 = vld [vmem:[%s1826 + $0xc0] sm:$0xf]
          %v1876 = vld [vmem:[%s1826 + $0xc4] sm:$0xf]
          %v1877 = vld [vmem:[%s1826 + $0xc8] sm:$0xf]
          %v1878 = vld [vmem:[%s1826 + $0xcc] sm:$0xf]
          %v1879 = vld [vmem:[%s1826 + $0xd0] sm:$0xf]
          %v1880 = vld [vmem:[%s1826 + $0xd4] sm:$0xf]
          %v1881 = vld [vmem:[%s1826 + $0xd8] sm:$0xf]
          %v1882 = vld [vmem:[%s1826 + $0xdc] sm:$0xf]
          %v1883 = vld [vmem:[%s1826 + $0xe0] sm:$0xf]
          %v1884 = vld [vmem:[%s1826 + $0xe4] sm:$0xf]
          %v1885 = vld [vmem:[%s1826 + $0xe8] sm:$0xf]
          %v1886 = vld [vmem:[%s1826 + $0xec] sm:$0xf]
          %v1887 = vld [vmem:[%s1826 + $0xf0] sm:$0xf]
          %v1888 = vld [vmem:[%s1826 + $0xf4] sm:$0xf]
          %v1889 = vld [vmem:[%s1826 + $0xf8] sm:$0xf]
          %v1890 = vld [vmem:[%s1826 + $0xfc] sm:$0xf]
          %v1891 = vld [vmem:[%s1826 + $0x100] sm:$0xf]
          %v1892 = vld [vmem:[%s1826 + $0x104] sm:$0xf]
          %v1893 = vld [vmem:[%s1826 + $0x108] sm:$0xf]
          %v1894 = vld [vmem:[%s1826 + $0x10c] sm:$0xf]
          %v1895 = vld [vmem:[%s1826 + $0x110] sm:$0xf]
          %v1896 = vld [vmem:[%s1826 + $0x114] sm:$0xf]
          %v1897 = vld [vmem:[%s1826 + $0x118] sm:$0xf]
          %v1898 = vld [vmem:[%s1826 + $0x11c] sm:$0xf]
          %v1899 = vld [vmem:[%s1826 + $0x120] sm:$0xf]
          %v1900 = vld [vmem:[%s1826 + $0x124] sm:$0xf]
          %v1901 = vld [vmem:[%s1826 + $0x128] sm:$0xf]
          %v1902 = vld [vmem:[%s1826 + $0x12c] sm:$0xf]
          %v1903 = vld [vmem:[%s1826 + $0x130] sm:$0xf]
          %v1904 = vld [vmem:[%s1826 + $0x134] sm:$0xf]
          %v1905 = vld [vmem:[%s1826 + $0x138] sm:$0xf]
          %v1906 = vld [vmem:[%s1826 + $0x13c] sm:$0xf]
          %v1907 = vld [vmem:[%s1826 + $0x140] sm:$0xf]
          %v1908 = vld [vmem:[%s1826 + $0x144] sm:$0xf]
          %v1909 = vld [vmem:[%s1826 + $0x148] sm:$0xf]
          %v1910 = vld [vmem:[%s1826 + $0x14c] sm:$0xf]
          %v1911 = vld [vmem:[%s1826 + $0x150] sm:$0xf]
          %v1912 = vld [vmem:[%s1826 + $0x154] sm:$0xf]
          %v1913 = vld [vmem:[%s1826 + $0x158] sm:$0xf]
          %v1914 = vld [vmem:[%s1826 + $0x15c] sm:$0xf]
          %v1915 = vld [vmem:[%s1826 + $0x160] sm:$0xf]
          %v1916 = vld [vmem:[%s1826 + $0x164] sm:$0xf]
          %v1917 = vld [vmem:[%s1826 + $0x168] sm:$0xf]
          %v1918 = vld [vmem:[%s1826 + $0x16c] sm:$0xf]
          %v1919 = vld [vmem:[%s1826 + $0x170] sm:$0xf]
          %v1920 = vld [vmem:[%s1826 + $0x174] sm:$0xf]
          %v1921 = vld [vmem:[%s1826 + $0x178] sm:$0xf]
          %v1922 = vld [vmem:[%s1826 + $0x17c] sm:$0xf]
          %v1923 = vld [vmem:[%s1826 + $0x180] sm:$0xf]
          %v1924 = vld [vmem:[%s1826 + $0x184] sm:$0xf]
          %v1925 = vld [vmem:[%s1826 + $0x188] sm:$0xf]
          %v1926 = vld [vmem:[%s1826 + $0x18c] sm:$0xf]
          %v1927 = vld [vmem:[%s1826 + $0x190] sm:$0xf]
          %v1928 = vld [vmem:[%s1826 + $0x194] sm:$0xf]
          %v1929 = vld [vmem:[%s1826 + $0x198] sm:$0xf]
          %v1930 = vld [vmem:[%s1826 + $0x19c] sm:$0xf]
          %v1931 = vld [vmem:[%s1826 + $0x1a0] sm:$0xf]
          %v1932 = vld [vmem:[%s1826 + $0x1a4] sm:$0xf]
          %v1933 = vld [vmem:[%s1826 + $0x1a8] sm:$0xf]
          %v1934 = vld [vmem:[%s1826 + $0x1ac] sm:$0xf]
          %v1935 = vld [vmem:[%s1826 + $0x1b0] sm:$0xf]
          %v1936 = vld [vmem:[%s1826 + $0x1b4] sm:$0xf]
          %v1937 = vld [vmem:[%s1826 + $0x1b8] sm:$0xf]
          %v1938 = vld [vmem:[%s1826 + $0x1bc] sm:$0xf]
          %v1939 = vld [vmem:[%s1826 + $0x1c0] sm:$0xf]
          %v1940 = vld [vmem:[%s1826 + $0x1c4] sm:$0xf]
          %v1941 = vld [vmem:[%s1826 + $0x1c8] sm:$0xf]
          %v1942 = vld [vmem:[%s1826 + $0x1cc] sm:$0xf]
          %v1943 = vld [vmem:[%s1826 + $0x1d0] sm:$0xf]
          %v1944 = vld [vmem:[%s1826 + $0x1d4] sm:$0xf]
          %v1945 = vld [vmem:[%s1826 + $0x1d8] sm:$0xf]
          %v1946 = vld [vmem:[%s1826 + $0x1dc] sm:$0xf]
          %v1947 = vld [vmem:[%s1826 + $0x1e0] sm:$0xf]
          %v1948 = vld [vmem:[%s1826 + $0x1e4] sm:$0xf]
          %v1949 = vld [vmem:[%s1826 + $0x1e8] sm:$0xf]
          %v1950 = vld [vmem:[%s1826 + $0x1ec] sm:$0xf]
          %v1951 = vld [vmem:[%s1826 + $0x1f0] sm:$0xf]
          %v1952 = vld [vmem:[%s1826 + $0x1f4] sm:$0xf]
          %v1953 = vld [vmem:[%s1826 + $0x1f8] sm:$0xf]
          %v1954 = vld [vmem:[%s1826 + $0x1fc] sm:$0xf]
          %v1955 = vld [vmem:[%s1826 + $0x200] sm:$0xf]
          %v1956 = vld [vmem:[%s1826 + $0x204] sm:$0xf]
          %v1957 = vld [vmem:[%s1826 + $0x208] sm:$0xf]
          %v1958 = vld [vmem:[%s1826 + $0x20c] sm:$0xf]
          %v1959 = vld [vmem:[%s1826 + $0x210] sm:$0xf]
          %v1960 = vld [vmem:[%s1826 + $0x214] sm:$0xf]
          %v1961 = vld [vmem:[%s1826 + $0x218] sm:$0xf]
          %v1962 = vld [vmem:[%s1826 + $0x21c] sm:$0xf]
          %v1963 = vld [vmem:[%s1826 + $0x220] sm:$0xf]
          %v1964 = vld [vmem:[%s1826 + $0x224] sm:$0xf]
          %v1965 = vld [vmem:[%s1826 + $0x228] sm:$0xf]
          %v1966 = vld [vmem:[%s1826 + $0x22c] sm:$0xf]
          %v1967 = vld [vmem:[%s1826 + $0x230] sm:$0xf]
          %v1968 = vld [vmem:[%s1826 + $0x234] sm:$0xf]
          %v1969 = vld [vmem:[%s1826 + $0x238] sm:$0xf]
          %v1970 = vld [vmem:[%s1826 + $0x23c] sm:$0xf]
          %v2115 = vunpack.c.l.b16 %v1827
          %v2116 = vunpack.c.l.b16 %v1828
          %v2117 = vunpack.c.l.b16 %v1829
          %v2118 = vunpack.c.l.b16 %v1830
          %v2119 = vunpack.c.l.b16 %v1831
          %v2120 = vunpack.c.l.b16 %v1832
          %v2121 = vunpack.c.l.b16 %v1833
          %v2122 = vunpack.c.l.b16 %v1834
          %v2123 = vunpack.c.l.b16 %v1835
          %v2124 = vunpack.c.l.b16 %v1836
          %v2125 = vunpack.c.l.b16 %v1837
          %v2126 = vunpack.c.l.b16 %v1838
          %v2127 = vunpack.c.l.b16 %v1839
          %v2128 = vunpack.c.l.b16 %v1840
          %v2129 = vunpack.c.l.b16 %v1841
          %v2130 = vunpack.c.l.b16 %v1842
          %v2131 = vunpack.c.l.b16 %v1843
          %v2132 = vunpack.c.l.b16 %v1844
          %v2133 = vunpack.c.l.b16 %v1845
          %v2134 = vunpack.c.l.b16 %v1846
          %v2135 = vunpack.c.l.b16 %v1847
          %v2136 = vunpack.c.l.b16 %v1848
          %v2137 = vunpack.c.l.b16 %v1849
          %v2138 = vunpack.c.l.b16 %v1850
          %v2139 = vunpack.c.l.b16 %v1851
          %v2140 = vunpack.c.l.b16 %v1852
          %v2141 = vunpack.c.l.b16 %v1853
          %v2142 = vunpack.c.l.b16 %v1854
          %v2143 = vunpack.c.l.b16 %v1855
          %v2144 = vunpack.c.l.b16 %v1856
          %v2145 = vunpack.c.l.b16 %v1857
          %v2146 = vunpack.c.l.b16 %v1858
          %v2147 = vunpack.c.l.b16 %v1859
          %v2148 = vunpack.c.l.b16 %v1860
          %v2149 = vunpack.c.l.b16 %v1861
          %v2150 = vunpack.c.l.b16 %v1862
          %v2151 = vunpack.c.l.b16 %v1863
          %v2152 = vunpack.c.l.b16 %v1864
          %v2153 = vunpack.c.l.b16 %v1865
          %v2154 = vunpack.c.l.b16 %v1866
          %v2155 = vunpack.c.l.b16 %v1867
          %v2156 = vunpack.c.l.b16 %v1868
          %v2157 = vunpack.c.l.b16 %v1869
          %v2158 = vunpack.c.l.b16 %v1870
          %v2159 = vunpack.c.l.b16 %v1871
          %v2160 = vunpack.c.l.b16 %v1872
          %v2161 = vunpack.c.l.b16 %v1873
          %v2162 = vunpack.c.l.b16 %v1874
          %v2163 = vunpack.c.l.b16 %v1875
          %v2164 = vunpack.c.l.b16 %v1876
          %v2165 = vunpack.c.l.b16 %v1877
          %v2166 = vunpack.c.l.b16 %v1878
          %v2167 = vunpack.c.l.b16 %v1879
          %v2168 = vunpack.c.l.b16 %v1880
          %v2169 = vunpack.c.l.b16 %v1881
          %v2170 = vunpack.c.l.b16 %v1882
          %v2171 = vunpack.c.l.b16 %v1883
          %v2172 = vunpack.c.l.b16 %v1884
          %v2173 = vunpack.c.l.b16 %v1885
          %v2174 = vunpack.c.l.b16 %v1886
          %v2175 = vunpack.c.l.b16 %v1887
          %v2176 = vunpack.c.l.b16 %v1888
          %v2177 = vunpack.c.l.b16 %v1889
          %v2178 = vunpack.c.l.b16 %v1890
          %v2179 = vunpack.c.l.b16 %v1891
          %v2180 = vunpack.c.l.b16 %v1892
          %v2181 = vunpack.c.l.b16 %v1893
          %v2182 = vunpack.c.l.b16 %v1894
          %v2183 = vunpack.c.l.b16 %v1895
          %v2184 = vunpack.c.l.b16 %v1896
          %v2185 = vunpack.c.l.b16 %v1897
          %v2186 = vunpack.c.l.b16 %v1898
          %v2187 = vunpack.c.l.b16 %v1899
          %v2188 = vunpack.c.l.b16 %v1900
          %v2189 = vunpack.c.l.b16 %v1901
          %v2190 = vunpack.c.l.b16 %v1902
          %v2191 = vunpack.c.l.b16 %v1903
          %v2192 = vunpack.c.l.b16 %v1904
          %v2193 = vunpack.c.l.b16 %v1905
          %v2194 = vunpack.c.l.b16 %v1906
          %v2195 = vunpack.c.l.b16 %v1907
          %v2196 = vunpack.c.l.b16 %v1908
          %v2197 = vunpack.c.l.b16 %v1909
          %v2198 = vunpack.c.l.b16 %v1910
          %v2199 = vunpack.c.l.b16 %v1911
          %v2200 = vunpack.c.l.b16 %v1912
          %v2201 = vunpack.c.l.b16 %v1913
          %v2202 = vunpack.c.l.b16 %v1914
          %v2203 = vunpack.c.l.b16 %v1915
          %v2204 = vunpack.c.l.b16 %v1916
          %v2205 = vunpack.c.l.b16 %v1917
          %v2206 = vunpack.c.l.b16 %v1918
          %v2207 = vunpack.c.l.b16 %v1919
          %v2208 = vunpack.c.l.b16 %v1920
          %v2209 = vunpack.c.l.b16 %v1921
          %v2210 = vunpack.c.l.b16 %v1922
          %v2211 = vunpack.c.l.b16 %v1923
          %v2212 = vunpack.c.l.b16 %v1924
          %v2213 = vunpack.c.l.b16 %v1925
          %v2214 = vunpack.c.l.b16 %v1926
          %v2215 = vunpack.c.l.b16 %v1927
          %v2216 = vunpack.c.l.b16 %v1928
          %v2217 = vunpack.c.l.b16 %v1929
          %v2218 = vunpack.c.l.b16 %v1930
          %v2219 = vunpack.c.l.b16 %v1931
          %v2220 = vunpack.c.l.b16 %v1932
          %v2221 = vunpack.c.l.b16 %v1933
          %v2222 = vunpack.c.l.b16 %v1934
          %v2223 = vunpack.c.l.b16 %v1935
          %v2224 = vunpack.c.l.b16 %v1936
          %v2225 = vunpack.c.l.b16 %v1937
          %v2226 = vunpack.c.l.b16 %v1938
          %v2227 = vunpack.c.l.b16 %v1939
          %v2228 = vunpack.c.l.b16 %v1940
          %v2229 = vunpack.c.l.b16 %v1941
          %v2230 = vunpack.c.l.b16 %v1942
          %v2231 = vunpack.c.l.b16 %v1943
          %v2232 = vunpack.c.l.b16 %v1944
          %v2233 = vunpack.c.l.b16 %v1945
          %v2234 = vunpack.c.l.b16 %v1946
          %v2235 = vunpack.c.l.b16 %v1947
          %v2236 = vunpack.c.l.b16 %v1948
          %v2237 = vunpack.c.l.b16 %v1949
          %v2238 = vunpack.c.l.b16 %v1950
          %v2239 = vunpack.c.l.b16 %v1951
          %v2240 = vunpack.c.l.b16 %v1952
          %v2241 = vunpack.c.l.b16 %v1953
          %v2242 = vunpack.c.l.b16 %v1954
          %v2243 = vunpack.c.l.b16 %v1955
          %v2244 = vunpack.c.l.b16 %v1956
          %v2245 = vunpack.c.l.b16 %v1957
          %v2246 = vunpack.c.l.b16 %v1958
          %v2247 = vunpack.c.l.b16 %v1959
          %v2248 = vunpack.c.l.b16 %v1960
          %v2249 = vunpack.c.l.b16 %v1961
          %v2250 = vunpack.c.l.b16 %v1962
          %v2251 = vunpack.c.l.b16 %v1963
          %v2252 = vunpack.c.l.b16 %v1964
          %v2253 = vunpack.c.l.b16 %v1965
          %v2254 = vunpack.c.l.b16 %v1966
          %v2255 = vunpack.c.l.b16 %v1967
          %v2256 = vunpack.c.l.b16 %v1968
          %v2257 = vunpack.c.l.b16 %v1969
          %v2258 = vunpack.c.l.b16 %v1970
          %v2259 = vpack.c.b16 %v2116, %v2115
          %v2260 = vpack.c.b16 %v2118, %v2117
          %v2261 = vpack.c.b16 %v2120, %v2119
          %v2262 = vpack.c.b16 %v2122, %v2121
          %v2263 = vpack.c.b16 %v2124, %v2123
          %v2264 = vpack.c.b16 %v2126, %v2125
          %v2265 = vpack.c.b16 %v2128, %v2127
          %v2266 = vpack.c.b16 %v2130, %v2129
          %v2267 = vpack.c.b16 %v2132, %v2131
          %v2268 = vpack.c.b16 %v2134, %v2133
          %v2269 = vpack.c.b16 %v2136, %v2135
          %v2270 = vpack.c.b16 %v2138, %v2137
          %v2271 = vpack.c.b16 %v2140, %v2139
          %v2272 = vpack.c.b16 %v2142, %v2141
          %v2273 = vpack.c.b16 %v2144, %v2143
          %v2274 = vpack.c.b16 %v2146, %v2145
          %v2275 = vpack.c.b16 %v2148, %v2147
          %v2276 = vpack.c.b16 %v2150, %v2149
          %v2277 = vpack.c.b16 %v2152, %v2151
          %v2278 = vpack.c.b16 %v2154, %v2153
          %v2279 = vpack.c.b16 %v2156, %v2155
          %v2280 = vpack.c.b16 %v2158, %v2157
          %v2281 = vpack.c.b16 %v2160, %v2159
          %v2282 = vpack.c.b16 %v2162, %v2161
          %v2283 = vpack.c.b16 %v2164, %v2163
          %v2284 = vpack.c.b16 %v2166, %v2165
          %v2285 = vpack.c.b16 %v2168, %v2167
          %v2286 = vpack.c.b16 %v2170, %v2169
          %v2287 = vpack.c.b16 %v2172, %v2171
          %v2288 = vpack.c.b16 %v2174, %v2173
          %v2289 = vpack.c.b16 %v2176, %v2175
          %v2290 = vpack.c.b16 %v2178, %v2177
          %v2291 = vpack.c.b16 %v2180, %v2179
          %v2292 = vpack.c.b16 %v2182, %v2181
          %v2293 = vpack.c.b16 %v2184, %v2183
          %v2294 = vpack.c.b16 %v2186, %v2185
          %v2295 = vpack.c.b16 %v2188, %v2187
          %v2296 = vpack.c.b16 %v2190, %v2189
          %v2297 = vpack.c.b16 %v2192, %v2191
          %v2298 = vpack.c.b16 %v2194, %v2193
          %v2299 = vpack.c.b16 %v2196, %v2195
          %v2300 = vpack.c.b16 %v2198, %v2197
          %v2301 = vpack.c.b16 %v2200, %v2199
          %v2302 = vpack.c.b16 %v2202, %v2201
          %v2303 = vpack.c.b16 %v2204, %v2203
          %v2304 = vpack.c.b16 %v2206, %v2205
          %v2305 = vpack.c.b16 %v2208, %v2207
          %v2306 = vpack.c.b16 %v2210, %v2209
          %v2307 = vpack.c.b16 %v2212, %v2211
          %v2308 = vpack.c.b16 %v2214, %v2213
          %v2309 = vpack.c.b16 %v2216, %v2215
          %v2310 = vpack.c.b16 %v2218, %v2217
          %v2311 = vpack.c.b16 %v2220, %v2219
          %v2312 = vpack.c.b16 %v2222, %v2221
          %v2313 = vpack.c.b16 %v2224, %v2223
          %v2314 = vpack.c.b16 %v2226, %v2225
          %v2315 = vpack.c.b16 %v2228, %v2227
          %v2316 = vpack.c.b16 %v2230, %v2229
          %v2317 = vpack.c.b16 %v2232, %v2231
          %v2318 = vpack.c.b16 %v2234, %v2233
          %v2319 = vpack.c.b16 %v2236, %v2235
          %v2320 = vpack.c.b16 %v2238, %v2237
          %v2321 = vpack.c.b16 %v2240, %v2239
          %v2322 = vpack.c.b16 %v2242, %v2241
          %v2323 = vpack.c.b16 %v2244, %v2243
          %v2324 = vpack.c.b16 %v2246, %v2245
          %v2325 = vpack.c.b16 %v2248, %v2247
          %v2326 = vpack.c.b16 %v2250, %v2249
          %v2327 = vpack.c.b16 %v2252, %v2251
          %v2328 = vpack.c.b16 %v2254, %v2253
          %v2329 = vpack.c.b16 %v2256, %v2255
          %v2330 = vpack.c.b16 %v2258, %v2257
          %2403 = vmatprep.subr.bf16.mxu0 0
          %2404 = vmatpush1.bf16.msra.mxu0 %v2259
          %2405 = vmatprep.subr.bf16.mxu0 0
          %2406 = vmatpush1.bf16.msra.mxu0 %v2260
          %2407 = vmatprep.subr.bf16.mxu0 0
          %2408 = vmatpush1.bf16.msra.mxu0 %v2261
          %2409 = vmatprep.subr.bf16.mxu0 0
          %2410 = vmatpush1.bf16.msra.mxu0 %v2262
          %2411 = vmatprep.subr.bf16.mxu0 0
          %2412 = vmatpush1.bf16.msra.mxu0 %v2263
          %2413 = vmatprep.subr.bf16.mxu0 0
          %2414 = vmatpush1.bf16.msra.mxu0 %v2264
          %2415 = vmatprep.subr.bf16.mxu0 0
          %2416 = vmatpush1.bf16.msra.mxu0 %v2265
          %2417 = vmatprep.subr.bf16.mxu0 0
          %2418 = vmatpush1.bf16.msra.mxu0 %v2266
          %2419 = vmatprep.subr.bf16.mxu0 0
          %2420 = vmatpush1.bf16.msra.mxu0 %v2267
          %2421 = vmatprep.subr.bf16.mxu0 0
          %2422 = vmatpush1.bf16.msra.mxu0 %v2268
          %2423 = vmatprep.subr.bf16.mxu0 0
          %2424 = vmatpush1.bf16.msra.mxu0 %v2269
          %2425 = vmatprep.subr.bf16.mxu0 0
          %2426 = vmatpush1.bf16.msra.mxu0 %v2270
          %2427 = vmatprep.subr.bf16.mxu0 0
          %2428 = vmatpush1.bf16.msra.mxu0 %v2271
          %2429 = vmatprep.subr.bf16.mxu0 0
          %2430 = vmatpush1.bf16.msra.mxu0 %v2272
          %2431 = vmatprep.subr.bf16.mxu0 0
          %2432 = vmatpush1.bf16.msra.mxu0 %v2273
          %2433 = vmatprep.subr.bf16.mxu0 0
          %2434 = vmatpush1.bf16.msra.mxu0 %v2274
          %2435 = vmatprep.mubr.bf16.mxu0 %v1790
          %2436 = vmatmul.mubr.bf16.gmra.mrb[0].mxu0 %v1789
          %v2437 = vpop.f32.mrb[0].mxu0
          %v2438 = vadd.f32 0.0, %v2437
          %v2439 = vpop.f32.mrb[0].mxu0
          %v2440 = vpop.f32.mrb[0].mxu0
          %v2441 = vadd.f32 0.0, %v2440
          %v2442 = vpop.f32.mrb[0].mxu0
          %2443 = vmatprep.mubr.bf16.mxu0 %v1799
          %2444 = vmatmul.mubr.bf16.gmra.mrb[0].mxu0 %v1798
          %v2445 = vpop.f32.mrb[0].mxu0
          %v2446 = vadd.f32 0.0, %v2445
          %v2447 = vpop.f32.mrb[0].mxu0
          %v2448 = vpop.f32.mrb[0].mxu0
          %v2449 = vadd.f32 0.0, %v2448
          %v2450 = vpop.f32.mrb[0].mxu0
          %2451 = vmatprep.mubr.bf16.mxu0 %v1808
          %2452 = vmatmul.mubr.bf16.gmra.mrb[0].mxu0 %v1807
          %v2453 = vpop.f32.mrb[0].mxu0
          %v2454 = vadd.f32 0.0, %v2453
          %v2455 = vpop.f32.mrb[0].mxu0
          %v2456 = vpop.f32.mrb[0].mxu0
          %v2457 = vadd.f32 0.0, %v2456
          %v2458 = vpop.f32.mrb[0].mxu0
          %2459 = vmatprep.mubr.bf16.mxu0 %v1817
          %2460 = vmatmul.mubr.bf16.gmra.mrb[0].mxu0 %v1816
          %v2461 = vpop.f32.mrb[0].mxu0
          %v2462 = vadd.f32 0.0, %v2461
          %v2463 = vpop.f32.mrb[0].mxu0
          %v2464 = vpop.f32.mrb[0].mxu0
          %v2465 = vadd.f32 0.0, %v2464
          %v2466 = vpop.f32.mrb[0].mxu0
          %2467 = vdwg.mxu0
          %2468 = vmatprep.subr.bf16.mxu0 0
          %2469 = vmatpush1.bf16.msra.mxu0 %v2275
          %2470 = vmatprep.subr.bf16.mxu0 0
          %2471 = vmatpush1.bf16.msra.mxu0 %v2276
          %2472 = vmatprep.subr.bf16.mxu0 0
          %2473 = vmatpush1.bf16.msra.mxu0 %v2277
          %2474 = vmatprep.subr.bf16.mxu0 0
          %2475 = vmatpush1.bf16.msra.mxu0 %v2278
          %2476 = vmatprep.subr.bf16.mxu0 0
          %2477 = vmatpush1.bf16.msra.mxu0 %v2279
          %2478 = vmatprep.subr.bf16.mxu0 0
          %2479 = vmatpush1.bf16.msra.mxu0 %v2280
          %2480 = vmatprep.subr.bf16.mxu0 0
          %2481 = vmatpush1.bf16.msra.mxu0 %v2281
          %2482 = vmatprep.subr.bf16.mxu0 0
          %2483 = vmatpush1.bf16.msra.mxu0 %v2282
          %2484 = vmatprep.subr.bf16.mxu0 0
          %2485 = vmatpush1.bf16.msra.mxu0 %v2283
          %2486 = vmatprep.subr.bf16.mxu0 0
          %2487 = vmatpush1.bf16.msra.mxu0 %v2284
          %2488 = vmatprep.subr.bf16.mxu0 0
          %2489 = vmatpush1.bf16.msra.mxu0 %v2285
          %2490 = vmatprep.subr.bf16.mxu0 0
          %2491 = vmatpush1.bf16.msra.mxu0 %v2286
          %2492 = vmatprep.subr.bf16.mxu0 0
          %2493 = vmatpush1.bf16.msra.mxu0 %v2287
          %2494 = vmatprep.subr.bf16.mxu0 0
          %2495 = vmatpush1.bf16.msra.mxu0 %v2288
          %2496 = vmatprep.subr.bf16.mxu0 0
          %2497 = vmatpush1.bf16.msra.mxu0 %v2289
          %2498 = vmatprep.subr.bf16.mxu0 0
          %2499 = vmatpush1.bf16.msra.mxu0 %v2290
          %2500 = vmatprep.mubr.bf16.mxu0 %v1792
          %2501 = vmatmul.mubr.bf16.gmra.mrb[0].mxu0 %v1791
          %v2502 = vpop.f32.mrb[0].mxu0
          %v2503 = vadd.f32 %v2438, %v2502
          %v2504 = vpop.f32.mrb[0].mxu0
          %v2505 = vpop.f32.mrb[0].mxu0
          %v2506 = vadd.f32 %v2441, %v2505
          %v2507 = vpop.f32.mrb[0].mxu0
          %2508 = vmatprep.mubr.bf16.mxu0 %v1801
          %2509 = vmatmul.mubr.bf16.gmra.mrb[0].mxu0 %v1800
          %v2510 = vpop.f32.mrb[0].mxu0
          %v2511 = vadd.f32 %v2446, %v2510
          %v2512 = vpop.f32.mrb[0].mxu0
          %v2513 = vpop.f32.mrb[0].mxu0
          %v2514 = vadd.f32 %v2449, %v2513
          %v2515 = vpop.f32.mrb[0].mxu0
          %2516 = vmatprep.mubr.bf16.mxu0 %v1810
          %2517 = vmatmul.mubr.bf16.gmra.mrb[0].mxu0 %v1809
          %v2518 = vpop.f32.mrb[0].mxu0
          %v2519 = vadd.f32 %v2454, %v2518
          %v2520 = vpop.f32.mrb[0].mxu0
          %v2521 = vpop.f32.mrb[0].mxu0
          %v2522 = vadd.f32 %v2457, %v2521
          %v2523 = vpop.f32.mrb[0].mxu0
          %2524 = vmatprep.mubr.bf16.mxu0 %v1819
          %2525 = vmatmul.mubr.bf16.gmra.mrb[0].mxu0 %v1818
          %v2526 = vpop.f32.mrb[0].mxu0
          %v2527 = vadd.f32 %v2462, %v2526
          %v2528 = vpop.f32.mrb[0].mxu0
          %v2529 = vpop.f32.mrb[0].mxu0
          %v2530 = vadd.f32 %v2465, %v2529
          %v2531 = vpop.f32.mrb[0].mxu0
          %2532 = vdwg.mxu0
          %2533 = vmatprep.subr.bf16.mxu0 0
          %2534 = vmatpush1.bf16.msra.mxu0 %v2291
          %2535 = vmatprep.subr.bf16.mxu0 0
          %2536 = vmatpush1.bf16.msra.mxu0 %v2292
          %2537 = vmatprep.subr.bf16.mxu0 0
          %2538 = vmatpush1.bf16.msra.mxu0 %v2293
          %2539 = vmatprep.subr.bf16.mxu0 0
          %2540 = vmatpush1.bf16.msra.mxu0 %v2294
          %2541 = vmatprep.subr.bf16.mxu0 0
          %2542 = vmatpush1.bf16.msra.mxu0 %v2295
          %2543 = vmatprep.subr.bf16.mxu0 0
          %2544 = vmatpush1.bf16.msra.mxu0 %v2296
          %2545 = vmatprep.subr.bf16.mxu0 0
          %2546 = vmatpush1.bf16.msra.mxu0 %v2297
          %2547 = vmatprep.subr.bf16.mxu0 0
          %2548 = vmatpush1.bf16.msra.mxu0 %v2298
          %2549 = vmatprep.subr.bf16.mxu0 0
          %2550 = vmatpush1.bf16.msra.mxu0 %v2299
          %2551 = vmatprep.subr.bf16.mxu0 0
          %2552 = vmatpush1.bf16.msra.mxu0 %v2300
          %2553 = vmatprep.subr.bf16.mxu0 0
          %2554 = vmatpush1.bf16.msra.mxu0 %v2301
          %2555 = vmatprep.subr.bf16.mxu0 0
          %2556 = vmatpush1.bf16.msra.mxu0 %v2302
          %2557 = vmatprep.subr.bf16.mxu0 0
          %2558 = vmatpush1.bf16.msra.mxu0 %v2303
          %2559 = vmatprep.subr.bf16.mxu0 0
          %2560 = vmatpush1.bf16.msra.mxu0 %v2304
          %2561 = vmatprep.subr.bf16.mxu0 0
          %2562 = vmatpush1.bf16.msra.mxu0 %v2305
          %2563 = vmatprep.subr.bf16.mxu0 0
          %2564 = vmatpush1.bf16.msra.mxu0 %v2306
          %2565 = vmatprep.mubr.bf16.mxu0 %v1794
          %2566 = vmatmul.mubr.bf16.gmra.mrb[0].mxu0 %v1793
          %v2567 = vpop.f32.mrb[0].mxu0
          %v2568 = vadd.f32 %v2503, %v2567
          %v2569 = vpop.f32.mrb[0].mxu0
          %v2570 = vpop.f32.mrb[0].mxu0
          %v2571 = vadd.f32 %v2506, %v2570
          %v2572 = vpop.f32.mrb[0].mxu0
          %2573 = vmatprep.mubr.bf16.mxu0 %v1803
          %2574 = vmatmul.mubr.bf16.gmra.mrb[0].mxu0 %v1802
          %v2575 = vpop.f32.mrb[0].mxu0
          %v2576 = vadd.f32 %v2511, %v2575
          %v2577 = vpop.f32.mrb[0].mxu0
          %v2578 = vpop.f32.mrb[0].mxu0
          %v2579 = vadd.f32 %v2514, %v2578
          %v2580 = vpop.f32.mrb[0].mxu0
          %2581 = vmatprep.mubr.bf16.mxu0 %v1812
          %2582 = vmatmul.mubr.bf16.gmra.mrb[0].mxu0 %v1811
          %v2583 = vpop.f32.mrb[0].mxu0
          %v2584 = vadd.f32 %v2519, %v2583
          %v2585 = vpop.f32.mrb[0].mxu0
          %v2586 = vpop.f32.mrb[0].mxu0
          %v2587 = vadd.f32 %v2522, %v2586
          %v2588 = vpop.f32.mrb[0].mxu0
          %2589 = vmatprep.mubr.bf16.mxu0 %v1821
          %2590 = vmatmul.mubr.bf16.gmra.mrb[0].mxu0 %v1820
          %v2591 = vpop.f32.mrb[0].mxu0
          %v2592 = vadd.f32 %v2527, %v2591
          %v2593 = vpop.f32.mrb[0].mxu0
          %v2594 = vpop.f32.mrb[0].mxu0
          %v2595 = vadd.f32 %v2530, %v2594
          %v2596 = vpop.f32.mrb[0].mxu0
          %2597 = vdwg.mxu0
          %2598 = vmatprep.subr.bf16.mxu0 0
          %2599 = vmatpush1.bf16.msra.mxu0 %v2307
          %2600 = vmatprep.subr.bf16.mxu0 0
          %2601 = vmatpush1.bf16.msra.mxu0 %v2308
          %2602 = vmatprep.subr.bf16.mxu0 0
          %2603 = vmatpush1.bf16.msra.mxu0 %v2309
          %2604 = vmatprep.subr.bf16.mxu0 0
          %2605 = vmatpush1.bf16.msra.mxu0 %v2310
          %2606 = vmatprep.subr.bf16.mxu0 0
          %2607 = vmatpush1.bf16.msra.mxu0 %v2311
          %2608 = vmatprep.subr.bf16.mxu0 0
          %2609 = vmatpush1.bf16.msra.mxu0 %v2312
          %2610 = vmatprep.subr.bf16.mxu0 0
          %2611 = vmatpush1.bf16.msra.mxu0 %v2313
          %2612 = vmatprep.subr.bf16.mxu0 0
          %2613 = vmatpush1.bf16.msra.mxu0 %v2314
          %2614 = vmatprep.subr.bf16.mxu0 0
          %2615 = vmatpush1.bf16.msra.mxu0 %v2315
          %2616 = vmatprep.subr.bf16.mxu0 0
          %2617 = vmatpush1.bf16.msra.mxu0 %v2316
          %2618 = vmatprep.subr.bf16.mxu0 0
          %2619 = vmatpush1.bf16.msra.mxu0 %v2317
          %2620 = vmatprep.subr.bf16.mxu0 0
          %2621 = vmatpush1.bf16.msra.mxu0 %v2318
          %2622 = vmatprep.subr.bf16.mxu0 0
          %2623 = vmatpush1.bf16.msra.mxu0 %v2319
          %2624 = vmatprep.subr.bf16.mxu0 0
          %2625 = vmatpush1.bf16.msra.mxu0 %v2320
          %2626 = vmatprep.subr.bf16.mxu0 0
          %2627 = vmatpush1.bf16.msra.mxu0 %v2321
          %2628 = vmatprep.subr.bf16.mxu0 0
          %2629 = vmatpush1.bf16.msra.mxu0 %v2322
          %2630 = vmatprep.mubr.bf16.mxu0 %v1796
          %2631 = vmatmul.mubr.bf16.gmra.mrb[0].mxu0 %v1795
          %v2632 = vpop.f32.mrb[0].mxu0
          %v2633 = vadd.f32 %v2568, %v2632
          %v2634 = vpop.f32.mrb[0].mxu0
          %v2635 = vpop.f32.mrb[0].mxu0
          %v2636 = vadd.f32 %v2571, %v2635
          %v2637 = vpop.f32.mrb[0].mxu0
          %2638 = vmatprep.mubr.bf16.mxu0 %v1805
          %2639 = vmatmul.mubr.bf16.gmra.mrb[0].mxu0 %v1804
          %v2640 = vpop.f32.mrb[0].mxu0
          %v2641 = vadd.f32 %v2576, %v2640
          %v2642 = vpop.f32.mrb[0].mxu0
          %v2643 = vpop.f32.mrb[0].mxu0
          %v2644 = vadd.f32 %v2579, %v2643
          %v2645 = vpop.f32.mrb[0].mxu0
          %2646 = vmatprep.mubr.bf16.mxu0 %v1814
          %2647 = vmatmul.mubr.bf16.gmra.mrb[0].mxu0 %v1813
          %v2648 = vpop.f32.mrb[0].mxu0
          %v2649 = vadd.f32 %v2584, %v2648
          %v2650 = vpop.f32.mrb[0].mxu0
          %v2651 = vpop.f32.mrb[0].mxu0
          %v2652 = vadd.f32 %v2587, %v2651
          %v2653 = vpop.f32.mrb[0].mxu0
          %2654 = vmatprep.mubr.bf16.mxu0 %v1823
          %2655 = vmatmul.mubr.bf16.gmra.mrb[0].mxu0 %v1822
          %v2656 = vpop.f32.mrb[0].mxu0
          %v2657 = vadd.f32 %v2592, %v2656
          %v2658 = vpop.f32.mrb[0].mxu0
          %v2659 = vpop.f32.mrb[0].mxu0
          %v2660 = vadd.f32 %v2595, %v2659
          %v2661 = vpop.f32.mrb[0].mxu0
          %2662 = vdwg.mxu0
          %2663 = vmatprep.subr.bf16.mxu0 0
          %2664 = vmatpush1.bf16.msra.mxu0 %v2323
          %2665 = vmatprep.subr.bf16.mxu0 0
          %2666 = vmatpush1.bf16.msra.mxu0 %v2324
          %2667 = vmatprep.subr.bf16.mxu0 0
          %2668 = vmatpush1.bf16.msra.mxu0 %v2325
          %2669 = vmatprep.subr.bf16.mxu0 0
          %2670 = vmatpush1.bf16.msra.mxu0 %v2326
          %2671 = vmatprep.subr.bf16.mxu0 0
          %2672 = vmatpush1.bf16.msra.mxu0 %v2327
          %2673 = vmatprep.subr.bf16.mxu0 0
          %2674 = vmatpush1.bf16.msra.mxu0 %v2328
          %2675 = vmatprep.subr.bf16.mxu0 0
          %2676 = vmatpush1.bf16.msra.mxu0 %v2329
          %2677 = vmatprep.subr.bf16.mxu0 0
          %2678 = vmatpush1.bf16.msra.mxu0 %v2330
          %2679 = vmatprep.subr.bf16.mxu0 0
          %2680 = vmatpush1.bf16.msra.mxu0 0
          %2681 = vmatprep.subr.bf16.mxu0 0
          %2682 = vmatpush1.bf16.msra.mxu0 0
          %2683 = vmatprep.subr.bf16.mxu0 0
          %2684 = vmatpush1.bf16.msra.mxu0 0
          %2685 = vmatprep.subr.bf16.mxu0 0
          %2686 = vmatpush1.bf16.msra.mxu0 0
          %2687 = vmatprep.subr.bf16.mxu0 0
          %2688 = vmatpush1.bf16.msra.mxu0 0
          %2689 = vmatprep.subr.bf16.mxu0 0
          %2690 = vmatpush1.bf16.msra.mxu0 0
          %2691 = vmatprep.subr.bf16.mxu0 0
          %2692 = vmatpush1.bf16.msra.mxu0 0
          %2693 = vmatprep.subr.bf16.mxu0 0
          %2694 = vmatpush1.bf16.msra.mxu0 0
          %2695 = vmatprep.mubr.bf16.mxu0 0
          %2696 = vmatmul.mubr.bf16.gmra.mrb[0].mxu0 %v1797
          %v2697 = vpop.f32.mrb[0].mxu0
          %v2698 = vadd.f32 %v2633, %v2697
          %v2699 = vpop.f32.mrb[0].mxu0
          %v2700 = vpop.f32.mrb[0].mxu0
          %v2701 = vadd.f32 %v2636, %v2700
          %v2702 = vpop.f32.mrb[0].mxu0
          %2703 = vmatprep.mubr.bf16.mxu0 0
          %2704 = vmatmul.mubr.bf16.gmra.mrb[0].mxu0 %v1806
          %v2705 = vpop.f32.mrb[0].mxu0
          %v2706 = vadd.f32 %v2641, %v2705
          %v2707 = vpop.f32.mrb[0].mxu0
          %v2708 = vpop.f32.mrb[0].mxu0
          %v2709 = vadd.f32 %v2644, %v2708
          %v2710 = vpop.f32.mrb[0].mxu0
          %2711 = vmatprep.mubr.bf16.mxu0 0
          %2712 = vmatmul.mubr.bf16.gmra.mrb[0].mxu0 %v1815
          %v2713 = vpop.f32.mrb[0].mxu0
          %v2714 = vadd.f32 %v2649, %v2713
          %v2715 = vpop.f32.mrb[0].mxu0
          %v2716 = vpop.f32.mrb[0].mxu0
          %v2717 = vadd.f32 %v2652, %v2716
          %v2718 = vpop.f32.mrb[0].mxu0
          %2719 = vmatprep.mubr.bf16.mxu0 0
          %2720 = vmatmul.mubr.bf16.gmra.mrb[0].mxu0 %v1824
          %v2721 = vpop.f32.mrb[0].mxu0
          %v2722 = vadd.f32 %v2657, %v2721
          %v2723 = vpop.f32.mrb[0].mxu0
          %v2724 = vpop.f32.mrb[0].mxu0
          %v2725 = vadd.f32 %v2660, %v2724
          %v2726 = vpop.f32.mrb[0].mxu0
          %2727 = vdwg.mxu0
          %v2728 = vadd.f32 %v1781, %v2698
          %v2729 = vadd.f32 %v1782, %v2701
          %v2730 = vadd.f32 %v1783, %v2706
          %v2731 = vadd.f32 %v1784, %v2709
          %v2732 = vadd.f32 %v1785, %v2714
          %v2733 = vadd.f32 %v1786, %v2717
          %v2734 = vadd.f32 %v1787, %v2722
          %v2735 = vadd.f32 %v1788, %v2725
          %2736 = vst [vmem:[#allocation6] sm:$0xff] %v2728
          %2737 = vst [vmem:[#allocation6 + $0x8] sm:$0xff] %v2729
          %2738 = vst [vmem:[#allocation6 + $0x10] sm:$0xff] %v2730
          %2739 = vst [vmem:[#allocation6 + $0x18] sm:$0xff] %v2731
          %2740 = vst [vmem:[#allocation6 + $0x20] sm:$0xff] %v2732
          %2741 = vst [vmem:[#allocation6 + $0x28] sm:$0xff] %v2733
          %2742 = vst [vmem:[#allocation6 + $0x30] sm:$0xff] %v2734
          %2743 = vst [vmem:[#allocation6 + $0x38] sm:$0xff] %v2735
        $region68: #{tpu_custom_call.1} parent=43 // pred_fallthru
          _
        %p2744 = scmp.eq.s32.totalorder %s34, 2
        // Predicated region
        $region69: #{tpu_custom_call.1} parent=43 // pred_check
          %p2745 = pneg %p2744
        $region70: #{tpu_custom_call.1} parent=43 // pred_check_branch
          %2747 = sbr.rel (%p2745) target = $region72
        $region71: #{tpu_custom_call.1} parent=43 // pred_region
          %v2748 = vld [vmem:[#allocation6] sm:$0xff]
          %v2749 = vld [vmem:[#allocation6 + $0x8] sm:$0xff]
          %v2750 = vld [vmem:[#allocation6 + $0x10] sm:$0xff]
          %v2751 = vld [vmem:[#allocation6 + $0x18] sm:$0xff]
          %v2752 = vld [vmem:[#allocation6 + $0x20] sm:$0xff]
          %v2753 = vld [vmem:[#allocation6 + $0x28] sm:$0xff]
          %v2754 = vld [vmem:[#allocation6 + $0x30] sm:$0xff]
          %v2755 = vld [vmem:[#allocation6 + $0x38] sm:$0xff]
          %v2756 = vld [vmem:[%s4] sm:$0x1]
          %v2758 = vlaneseq
          %v2759 = vshrl.u32 %v2758, 7
          %v2760 = vsub.s32 0, %v2759
          %v2761 = vrot.slane %v2756, %v2760
          %v2763 = vmul.f32 %v2748, %v2761
          %v2764 = vmul.f32 %v2749, %v2761
          %v2765 = vmul.f32 %v2750, %v2761
          %v2766 = vmul.f32 %v2751, %v2761
          %v2767 = vmul.f32 %v2752, %v2761
          %v2768 = vmul.f32 %v2753, %v2761
          %v2769 = vmul.f32 %v2754, %v2761
          %v2770 = vmul.f32 %v2755, %v2761
          %v2771 = vld [vmem:[%s5] sm:$0x1]
          %v2773 = vlaneseq
          %v2774 = vshrl.u32 %v2773, 7
          %v2775 = vsub.s32 0, %v2774
          %v2776 = vrot.slane %v2771, %v2775
          %v2778 = vadd.f32 %v2763, %v2776
          %v2779 = vadd.f32 %v2764, %v2776
          %v2780 = vadd.f32 %v2765, %v2776
          %v2781 = vadd.f32 %v2766, %v2776
          %v2782 = vadd.f32 %v2767, %v2776
          %v2783 = vadd.f32 %v2768, %v2776
          %v2784 = vadd.f32 %v2769, %v2776
          %v2785 = vadd.f32 %v2770, %v2776
          %v2786 = vmax.f32 %v2778, 0.0
          %v2787 = vmax.f32 %v2779, 0.0
          %v2788 = vmax.f32 %v2780, 0.0
          %v2789 = vmax.f32 %v2781, 0.0
          %v2790 = vmax.f32 %v2782, 0.0
          %v2791 = vmax.f32 %v2783, 0.0
          %v2792 = vmax.f32 %v2784, 0.0
          %v2793 = vmax.f32 %v2785, 0.0
          %v2794 = vpack.c.bf16 %v2787, %v2786
          %v2795 = vpack.c.bf16 %v2789, %v2788
          %v2796 = vpack.c.bf16 %v2791, %v2790
          %v2797 = vpack.c.bf16 %v2793, %v2792
          %v2802 = vunpack.c.l.b16 %v2794
          %v2803 = vunpack.c.h.b16 %v2794
          %v2804 = vunpack.c.l.b16 %v2795
          %v2805 = vunpack.c.h.b16 %v2795
          %v2806 = vunpack.c.l.b16 %v2796
          %v2807 = vunpack.c.h.b16 %v2796
          %v2808 = vunpack.c.l.b16 %v2797
          %v2809 = vunpack.c.h.b16 %v2797
          %v2810 = vpack.c.b16 %v2802, %v2802
          %v2811 = vpack.c.b16 %v2803, %v2803
          %v2812 = vpack.c.b16 %v2804, %v2804
          %v2813 = vpack.c.b16 %v2805, %v2805
          %v2814 = vpack.c.b16 %v2806, %v2806
          %v2815 = vpack.c.b16 %v2807, %v2807
          %v2816 = vpack.c.b16 %v2808, %v2808
          %v2817 = vpack.c.b16 %v2809, %v2809
          %2826 = vst [vmem:[%s403] sm:$0xf] %v2810
          %2827 = vst [vmem:[%s403 + $0x4] sm:$0xf] %v2811
          %2828 = vst [vmem:[%s403 + $0x8] sm:$0xf] %v2812
          %2829 = vst [vmem:[%s403 + $0xc] sm:$0xf] %v2813
          %2830 = vst [vmem:[%s403 + $0x10] sm:$0xf] %v2814
          %2831 = vst [vmem:[%s403 + $0x14] sm:$0xf] %v2815
          %2832 = vst [vmem:[%s403 + $0x18] sm:$0xf] %v2816
          %2833 = vst [vmem:[%s403 + $0x1c] sm:$0xf] %v2817
        $region72: #{tpu_custom_call.1} parent=43 // pred_fallthru
          _
        %s2834 = sand.u32 %s220, 1
        %s2835 = scalar_lea.sflag [#allocation9], %s2834
        %s2836 = sand.u32 %s220, 1
        %s2837 = smul.addr %s2836, 32
        %s2838 = scalar_lea.vmem [#allocation15], %s2837
        // Predicated region
        $region73: #{tpu_custom_call.1} parent=43 // pred_check
          %p2839 = pneg %p230
        $region74: #{tpu_custom_call.1} parent=43 // pred_check_branch
          %2841 = sbr.rel (%p2839) target = $region76
        $region75: #{tpu_custom_call.1} parent=43 // pred_region
          %s2843 = ssub.s32 512, 512
          %2844 = vsyncadd %s2835, %s2843
          %s2845 = smul.addr %s33, 8
          %s2846 = smul.addr %s32, 24
          %s2847 = sadd.s32 %s2845, %s2846
          %s2848 = smul.addr %s2847, 64
          %s2849 = scalar_lea.hbm %s6, %s2848
          %s2850 = sshll.u32 %s2838, 4
          %s2851 = int_to_ptr.vmem [resolvable:$true] %s2850
          %2856 = dma.vmem_to_hbm [thread:$0]  %s2851, 512, %s2849, %s2835, 64, 64, 4
        $region76: #{tpu_custom_call.1} parent=43 // pred_fallthru
          _
      $region44: #{tpu_custom_call.1} parent=5 // pred_fallthru
        _
      %p2857 = scmp.le.s32.totalorder 2, %s22
      // Predicated region
      $region77: #{tpu_custom_call.1} parent=5 // pred_check
        %p2858 = pneg %p2857
      $region78: #{tpu_custom_call.1} parent=5 // pred_check_branch
        %2860 = sbr.rel (%p2858) target = $region80
      $region79: #{tpu_custom_call.1} parent=5 // pred_region
        %s2861 = ssub.s32 %s22, 2
        // Predicated region
        $region81: #{tpu_custom_call.1} parent=79 // pred_check
          %p2862 = pneg %p236
        $region82: #{tpu_custom_call.1} parent=79 // pred_check_branch
          %2864 = sbr.rel (%p2862) target = $region84
        $region83: #{tpu_custom_call.1} parent=79 // pred_region
          %s2865 = sand.u32 %s221, 1
          %s2866 = scalar_lea.sflag [#allocation9], %s2865
          %s2867 = sand.u32 %s221, 1
          %s2868 = smul.addr %s2867, 32
          %s2869 = scalar_lea.vmem [#allocation15], %s2868
          %2870 = dma.done %s2866, 512
        $region84: #{tpu_custom_call.1} parent=79 // pred_fallthru
          _
      $region80: #{tpu_custom_call.1} parent=5 // pred_fallthru
        _
    $region6: #{tpu_custom_call.1} parent=1 // loop_footer
      %s26 = sadd.s32 1, %s22
    $region7: #{tpu_custom_call.1} parent=1 // loop_footer_branch
      %21 = sbr.rel target = $region3
    $region8: #{tpu_custom_call.1} parent=1 // loop_exit
      _
    %2871 = vsyncpa [#allocation8], 1
    %s2872 = scalar_lea.sflag [#allocation8], 1
    %2873 = vsyncpa %s2872, 1
    %2874 = vsyncpa [#allocation11], 1
    %s2875 = scalar_lea.sflag [#allocation11], 1
    %2876 = vsyncpa %s2875, 1
    %2877 = vsyncpa [#allocation14], 1
    %2878 = vsyncpa [#allocation9], 1
    %s2879 = scalar_lea.sflag [#allocation9], 1
    %2880 = vsyncpa %s2879, 1

</llo_original>
